<compile_context>
chip_gen: v6e
topology: v6e:2x2x1
jax: 0.10.0
libtpu: 0.0.40
codegen_flags: <defaults>
</compile_context>

<pallas_src>
import functools

import jax
import jax.numpy as jnp
from jax.experimental import pallas as pl
from jax.experimental.pallas import tpu as pltpu

NEG_SLOPE = 0.01  # PyTorch nn.LeakyReLU default


def _round_up(n, m):
    return ((n + m - 1) // m) * m


def _leaky_relu(v):
    return jnp.where(v > 0, v, NEG_SLOPE * v)


def actor_kernel(x_ref,
                 w1_ref, b1_ref,
                 w2_ref, b2_ref,
                 w3_ref, b3_ref,
                 w4_ref, b4_ref,
                 w5_ref, b5_ref,
                 o_ref,
                 *, action_space):
    def linear(h_f32, w_ref, b_ref):
        # bf16 inputs to the MXU, f32 accumulate, f32 bias add.
        return jnp.dot(h_f32.astype(jnp.bfloat16), w_ref[...],
                       preferred_element_type=jnp.float32) + b_ref[...]

    # l1: Linear(state, 1000) ; Sequential: LeakyReLU -> Linear(1000,1000)
    # -> LeakyReLU -> Linear(1000,100) -> LeakyReLU -> Linear(100,100)
    # -> LeakyReLU -> Linear(100,A) -> LeakyReLU -> Softmax(dim=1)
    h = _leaky_relu(linear(x_ref[...], w1_ref, b1_ref))    # (B, 1024)
    h = _leaky_relu(linear(h, w2_ref, b2_ref))             # (B, 1024)
    h = _leaky_relu(linear(h, w3_ref, b3_ref))             # (B, 128)
    h = _leaky_relu(linear(h, w4_ref, b4_ref))             # (B, 128)
    logits = _leaky_relu(linear(h, w5_ref, b5_ref))        # (B, 128)

    # Mask padded action lanes, then numerically stable softmax over axis 1.
    col = jax.lax.broadcasted_iota(jnp.int32, logits.shape, 1)
    logits = jnp.where(col < action_space, logits, -1e30)
    m = jnp.max(logits, axis=1, keepdims=True)
    e = jnp.exp(logits - m)
    inv = pl.reciprocal(jnp.sum(e, axis=1, keepdims=True), approx=True)
    o_ref[...] = e * inv


def actor_forward(x, kernel_params, action_space):
    """x: (B, state_space) f32. kernel_params: padded bf16 weights / f32 biases."""
    (w1, b1), (w2, b2), (w3, b3), (w4, b4), (w5, b5) = kernel_params
    B, S = x.shape
    in_pad = w1.shape[0]
    out_pad = w5.shape[1]
    b_pad = _round_up(max(B, 8), 8)

    x_pad = jnp.zeros((b_pad, in_pad), jnp.float32).at[:B, :S].set(x)

    vmem = pl.BlockSpec(memory_space=pltpu.MemorySpace.VMEM)
    out = pl.pallas_call(
        functools.partial(actor_kernel, action_space=action_space),
        out_shape=jax.ShapeDtypeStruct((b_pad, out_pad), jnp.float32),
        in_specs=[vmem] * 11,
        out_specs=vmem,
    )(x_pad, w1, b1, w2, b2, w3, b3, w4, b4, w5, b5)
    return out[:B, :action_space]


def init_linear(key, fan_in, fan_out):
    """PyTorch-Linear-style init: U(-1/sqrt(fan_in), 1/sqrt(fan_in)).
    Weight stored pre-transposed as (fan_in, fan_out); bias as (1, fan_out)."""
    kw, kb = jax.random.split(key)
    bound = 1.0 / jnp.sqrt(jnp.float32(fan_in))
    w = jax.random.uniform(kw, (fan_in, fan_out), jnp.float32, -bound, bound)
    b = jax.random.uniform(kb, (1, fan_out), jnp.float32, -bound, bound)
    return w, b


def pad_params_for_kernel(params_f32):
    """Zero-pad every layer to multiples of 128 and cast weights to bf16 (once)."""
    padded = []
    for w, b in params_f32:
        ip = _round_up(w.shape[0], 128)
        op = _round_up(w.shape[1], 128)
        wp = jnp.zeros((ip, op), jnp.bfloat16).at[:w.shape[0], :w.shape[1]].set(
            w.astype(jnp.bfloat16))
        bp = jnp.zeros((1, op), jnp.float32).at[:, :b.shape[1]].set(b)
        padded.append((wp, bp))
    return tuple(padded)


def reference_forward(x, params_f32):
    """Pure-JAX reference emulating the kernel numerics (bf16 MXU inputs, f32 acc)."""
    def lin(h, w, b):
        return jnp.dot(h.astype(jnp.bfloat16), w.astype(jnp.bfloat16),
                       preferred_element_type=jnp.float32) + b

    (w1, b1), (w2, b2), (w3, b3), (w4, b4), (w5, b5) = params_f32
    h = _leaky_relu(lin(x, w1, b1))
    h = _leaky_relu(lin(h, w2, b2))
    h = _leaky_relu(lin(h, w3, b3))
    h = _leaky_relu(lin(h, w4, b4))
    logits = _leaky_relu(lin(h, w5, b5))
    return jax.nn.softmax(logits, axis=1)


if __name__ == "__main__":
    state_space = 4    # CartPole observation dim
    action_space = 2   # CartPole action dim
    batch = 8

    key = jax.random.PRNGKey(0)
    kx, k1, k2, k3, k4, k5 = jax.random.split(key, 6)

    params_f32 = (
        init_linear(k1, state_space, 1000),
        init_linear(k2, 1000, 1000),
        init_linear(k3, 1000, 100),
        init_linear(k4, 100, 100),
        init_linear(k5, 100, action_space),
    )
    kernel_params = pad_params_for_kernel(params_f32)

    x = jax.random.normal(kx, (batch, state_space), jnp.float32)

    out = actor_forward(x, kernel_params, action_space)
    out = jax.block_until_ready(out)

    ref = reference_forward(x, params_f32)

    assert out.shape == (batch, action_space)
    assert bool(jnp.all(jnp.isfinite(out)))
    # Rows are probability distributions.
    assert jnp.allclose(jnp.sum(out, axis=1), 1.0, atol=1e-2)
    # Matches the bf16-emulating reference (bf16 weights => relaxed tolerance).
    assert jnp.allclose(out, ref, atol=5e-3, rtol=1e-2)

    print("KERNEL_OK")
</pallas_src>

<mosaic_0001>
module attributes {stable_mosaic.version = 11 : i64} {
  func.func @actor_kernel(%arg0: memref<8x128xf32, #tpu.memory_space<vmem>>, %arg1: memref<128x1024xbf16, #tpu.memory_space<vmem>>, %arg2: memref<1x1024xf32, #tpu.memory_space<vmem>>, %arg3: memref<1024x1024xbf16, #tpu.memory_space<vmem>>, %arg4: memref<1x1024xf32, #tpu.memory_space<vmem>>, %arg5: memref<1024x128xbf16, #tpu.memory_space<vmem>>, %arg6: memref<1x128xf32, #tpu.memory_space<vmem>>, %arg7: memref<128x128xbf16, #tpu.memory_space<vmem>>, %arg8: memref<1x128xf32, #tpu.memory_space<vmem>>, %arg9: memref<128x128xbf16, #tpu.memory_space<vmem>>, %arg10: memref<1x128xf32, #tpu.memory_space<vmem>>, %arg11: memref<8x128xf32, #tpu.memory_space<vmem>>) attributes {dimension_semantics = [], scalar_prefetch = 0 : i64, scratch_operands = 0 : i64, tpu.core_type = #tpu.core_type<tc>} {
    %c0 = arith.constant 0 : index
    %c0_0 = arith.constant 0 : index
    %0 = vector.load %arg0[%c0, %c0_0] : memref<8x128xf32, #tpu.memory_space<vmem>>, vector<8x128xf32>
    %1 = arith.truncf %0 : vector<8x128xf32> to vector<8x128xbf16>
    %c0_1 = arith.constant 0 : index
    %c0_2 = arith.constant 0 : index
    %2 = vector.load %arg1[%c0_1, %c0_2] : memref<128x1024xbf16, #tpu.memory_space<vmem>>, vector<128x1024xbf16>
    %cst = arith.constant dense<0.000000e+00> : vector<8x1024xf32>
    %3 = tpu.matmul %1, %2, %cst {dimension_numbers = #tpu.dot_dimension_numbers<[1], [0], [0], [1], [0, 0, 1, 1], [], []>} : vector<8x128xbf16>, vector<128x1024xbf16>, vector<8x1024xf32> -> vector<8x1024xf32>
    %c0_3 = arith.constant 0 : index
    %c0_4 = arith.constant 0 : index
    %4 = vector.load %arg2[%c0_3, %c0_4] : memref<1x1024xf32, #tpu.memory_space<vmem>>, vector<1x1024xf32>
    %5 = vector.broadcast %4 : vector<1x1024xf32> to vector<8x1024xf32>
    %6 = arith.addf %3, %5 : vector<8x1024xf32>
    %cst_5 = arith.constant 0.000000e+00 : f32
    %7 = vector.broadcast %cst_5 : f32 to vector<8x1024xf32>
    %8 = arith.cmpf ogt, %6, %7 : vector<8x1024xf32>
    %cst_6 = arith.constant 0.00999999977 : f32
    %9 = vector.broadcast %cst_6 : f32 to vector<8x1024xf32>
    %10 = arith.mulf %9, %6 : vector<8x1024xf32>
    %11 = arith.select %8, %6, %10 : vector<8x1024xi1>, vector<8x1024xf32>
    %12 = arith.truncf %11 : vector<8x1024xf32> to vector<8x1024xbf16>
    %c0_7 = arith.constant 0 : index
    %c0_8 = arith.constant 0 : index
    %13 = vector.load %arg3[%c0_7, %c0_8] : memref<1024x1024xbf16, #tpu.memory_space<vmem>>, vector<1024x1024xbf16>
    %cst_9 = arith.constant dense<0.000000e+00> : vector<8x1024xf32>
    %14 = tpu.matmul %12, %13, %cst_9 {dimension_numbers = #tpu.dot_dimension_numbers<[1], [0], [0], [1], [0, 0, 1, 1], [], []>} : vector<8x1024xbf16>, vector<1024x1024xbf16>, vector<8x1024xf32> -> vector<8x1024xf32>
    %c0_10 = arith.constant 0 : index
    %c0_11 = arith.constant 0 : index
    %15 = vector.load %arg4[%c0_10, %c0_11] : memref<1x1024xf32, #tpu.memory_space<vmem>>, vector<1x1024xf32>
    %16 = vector.broadcast %15 : vector<1x1024xf32> to vector<8x1024xf32>
    %17 = arith.addf %14, %16 : vector<8x1024xf32>
    %cst_12 = arith.constant 0.000000e+00 : f32
    %18 = vector.broadcast %cst_12 : f32 to vector<8x1024xf32>
    %19 = arith.cmpf ogt, %17, %18 : vector<8x1024xf32>
    %cst_13 = arith.constant 0.00999999977 : f32
    %20 = vector.broadcast %cst_13 : f32 to vector<8x1024xf32>
    %21 = arith.mulf %20, %17 : vector<8x1024xf32>
    %22 = arith.select %19, %17, %21 : vector<8x1024xi1>, vector<8x1024xf32>
    %23 = arith.truncf %22 : vector<8x1024xf32> to vector<8x1024xbf16>
    %c0_14 = arith.constant 0 : index
    %c0_15 = arith.constant 0 : index
    %24 = vector.load %arg5[%c0_14, %c0_15] : memref<1024x128xbf16, #tpu.memory_space<vmem>>, vector<1024x128xbf16>
    %cst_16 = arith.constant dense<0.000000e+00> : vector<8x128xf32>
    %25 = tpu.matmul %23, %24, %cst_16 {dimension_numbers = #tpu.dot_dimension_numbers<[1], [0], [0], [1], [0, 0, 1, 1], [], []>} : vector<8x1024xbf16>, vector<1024x128xbf16>, vector<8x128xf32> -> vector<8x128xf32>
    %c0_17 = arith.constant 0 : index
    %c0_18 = arith.constant 0 : index
    %26 = vector.load %arg6[%c0_17, %c0_18] : memref<1x128xf32, #tpu.memory_space<vmem>>, vector<1x128xf32>
    %27 = vector.broadcast %26 : vector<1x128xf32> to vector<8x128xf32>
    %28 = arith.addf %25, %27 : vector<8x128xf32>
    %cst_19 = arith.constant 0.000000e+00 : f32
    %29 = vector.broadcast %cst_19 : f32 to vector<8x128xf32>
    %30 = arith.cmpf ogt, %28, %29 : vector<8x128xf32>
    %cst_20 = arith.constant 0.00999999977 : f32
    %31 = vector.broadcast %cst_20 : f32 to vector<8x128xf32>
    %32 = arith.mulf %31, %28 : vector<8x128xf32>
    %33 = arith.select %30, %28, %32 : vector<8x128xi1>, vector<8x128xf32>
    %34 = arith.truncf %33 : vector<8x128xf32> to vector<8x128xbf16>
    %c0_21 = arith.constant 0 : index
    %c0_22 = arith.constant 0 : index
    %35 = vector.load %arg7[%c0_21, %c0_22] : memref<128x128xbf16, #tpu.memory_space<vmem>>, vector<128x128xbf16>
    %cst_23 = arith.constant dense<0.000000e+00> : vector<8x128xf32>
    %36 = tpu.matmul %34, %35, %cst_23 {dimension_numbers = #tpu.dot_dimension_numbers<[1], [0], [0], [1], [0, 0, 1, 1], [], []>} : vector<8x128xbf16>, vector<128x128xbf16>, vector<8x128xf32> -> vector<8x128xf32>
    %c0_24 = arith.constant 0 : index
    %c0_25 = arith.constant 0 : index
    %37 = vector.load %arg8[%c0_24, %c0_25] : memref<1x128xf32, #tpu.memory_space<vmem>>, vector<1x128xf32>
    %38 = vector.broadcast %37 : vector<1x128xf32> to vector<8x128xf32>
    %39 = arith.addf %36, %38 : vector<8x128xf32>
    %cst_26 = arith.constant 0.000000e+00 : f32
    %40 = vector.broadcast %cst_26 : f32 to vector<8x128xf32>
    %41 = arith.cmpf ogt, %39, %40 : vector<8x128xf32>
    %cst_27 = arith.constant 0.00999999977 : f32
    %42 = vector.broadcast %cst_27 : f32 to vector<8x128xf32>
    %43 = arith.mulf %42, %39 : vector<8x128xf32>
    %44 = arith.select %41, %39, %43 : vector<8x128xi1>, vector<8x128xf32>
    %45 = arith.truncf %44 : vector<8x128xf32> to vector<8x128xbf16>
    %c0_28 = arith.constant 0 : index
    %c0_29 = arith.constant 0 : index
    %46 = vector.load %arg9[%c0_28, %c0_29] : memref<128x128xbf16, #tpu.memory_space<vmem>>, vector<128x128xbf16>
    %cst_30 = arith.constant dense<0.000000e+00> : vector<8x128xf32>
    %47 = tpu.matmul %45, %46, %cst_30 {dimension_numbers = #tpu.dot_dimension_numbers<[1], [0], [0], [1], [0, 0, 1, 1], [], []>} : vector<8x128xbf16>, vector<128x128xbf16>, vector<8x128xf32> -> vector<8x128xf32>
    %c0_31 = arith.constant 0 : index
    %c0_32 = arith.constant 0 : index
    %48 = vector.load %arg10[%c0_31, %c0_32] : memref<1x128xf32, #tpu.memory_space<vmem>>, vector<1x128xf32>
    %49 = vector.broadcast %48 : vector<1x128xf32> to vector<8x128xf32>
    %50 = arith.addf %47, %49 : vector<8x128xf32>
    %cst_33 = arith.constant 0.000000e+00 : f32
    %51 = vector.broadcast %cst_33 : f32 to vector<8x128xf32>
    %52 = arith.cmpf ogt, %50, %51 : vector<8x128xf32>
    %cst_34 = arith.constant 0.00999999977 : f32
    %53 = vector.broadcast %cst_34 : f32 to vector<8x128xf32>
    %54 = arith.mulf %53, %50 : vector<8x128xf32>
    %55 = arith.select %52, %50, %54 : vector<8x128xi1>, vector<8x128xf32>
    %56 = tpu.iota {dimensions = array<i32: 1>} : vector<8x128xi32>
    %c2_i32 = arith.constant 2 : i32
    %57 = vector.broadcast %c2_i32 : i32 to vector<8x128xi32>
    %58 = arith.cmpi slt, %56, %57 : vector<8x128xi32>
    %cst_35 = arith.constant -1.000000e+30 : f32
    %59 = vector.broadcast %cst_35 : f32 to vector<8x128xf32>
    %60 = arith.select %58, %55, %59 : vector<8x128xi1>, vector<8x128xf32>
    %cst_36 = arith.constant dense<0xFF800000> : vector<8xf32>
    %61 = vector.multi_reduction <maximumf>, %60, %cst_36 [1] : vector<8x128xf32> to vector<8xf32>
    %62 = vector.shape_cast %61 : vector<8xf32> to vector<8x1xf32>
    %63 = vector.broadcast %62 : vector<8x1xf32> to vector<8x128xf32>
    %64 = arith.subf %60, %63 : vector<8x128xf32>
    %65 = math.exp %64 : vector<8x128xf32>
    %cst_37 = arith.constant dense<0.000000e+00> : vector<8xf32>
    %66 = vector.multi_reduction <add>, %65, %cst_37 [1] : vector<8x128xf32> to vector<8xf32>
    %67 = vector.shape_cast %66 : vector<8xf32> to vector<8x1xf32>
    %68 = tpu.reciprocal %67 {approx = true} : vector<8x1xf32> -> vector<8x1xf32>
    %69 = vector.broadcast %68 : vector<8x1xf32> to vector<8x128xf32>
    %70 = arith.mulf %65, %69 : vector<8x128xf32>
    %c0_38 = arith.constant 0 : index
    %c0_39 = arith.constant 0 : index
    %71 = vector.load %arg11[%c0_38, %c0_39] : memref<8x128xf32, #tpu.memory_space<vmem>>, vector<8x128xf32>
    tpu.vector_store %arg11[%c0_38, %c0_39], %70 {strides = array<i32>} : memref<8x128xf32, #tpu.memory_space<vmem>>, vector<8x128xf32>,
    return
  }
}

</mosaic_0001>

<llo_original>
// kernel: tpu_custom_call.1
$region0: #{tpu_custom_call.1}
  #allocation0 [shape = 'u32[]', space=smem, size = 0x4, offset = 0x4, fixed_abs, tag = 'smem constant byte address 0x4 - core index']
  #allocation1 [shape = 'u32[144,128]{1,0:T(1,128)}', space=vmem, size = 0x12000, scoped, tag = 'internal scratch']
  %s0 = inlined_call_operand.hbm [shape: f32[8,128], index: 0, kind: input, shape index: {}]
  %s1 = inlined_call_operand.hbm [shape: bf16[128,1024], index: 1, kind: input, shape index: {}]
  %s2 = inlined_call_operand.hbm [shape: f32[1,1024], index: 2, kind: input, shape index: {}]
  %s3 = inlined_call_operand.hbm [shape: bf16[1024,1024], index: 3, kind: input, shape index: {}]
  %s4 = inlined_call_operand.hbm [shape: f32[1,1024], index: 4, kind: input, shape index: {}]
  %s5 = inlined_call_operand.hbm [shape: bf16[1024,128], index: 5, kind: input, shape index: {}]
  %s6 = inlined_call_operand.hbm [shape: f32[1,128], index: 6, kind: input, shape index: {}]
  %s7 = inlined_call_operand.hbm [shape: bf16[128,128], index: 7, kind: input, shape index: {}]
  %s8 = inlined_call_operand.hbm [shape: f32[1,128], index: 8, kind: input, shape index: {}]
  %s9 = inlined_call_operand.hbm [shape: bf16[128,128], index: 9, kind: input, shape index: {}]
  %s10 = inlined_call_operand.hbm [shape: f32[1,128], index: 10, kind: input, shape index: {}]
  %s11 = inlined_call_operand.hbm [shape: f32[8,128], index: 11, kind: output, shape index: {}]
  %s12 = sld [smem:[#allocation0]]
  $region98: #{tpu_custom_call.1} parent=0
    _
  %s14 = ssub.s32 1, %s12
  %s15 = scalar_select 0, %s14, %s12
  $region1: #{tpu_custom_call.1} parent=0
    #allocation2 [shape = 'u8[4096]{0}', space=vmem, size = 0x1000, scoped, tag = 'input window, operand 0, single buffered']
    #allocation3 [shape = 's32[1]{0}', space=sflag, size = 0x4, scoped, tag = 'scoped memory for tpu_custom_call.1']
    #allocation4 [shape = 's32[1]{0}', space=sflag, size = 0x4, scoped, tag = 'scoped memory for tpu_custom_call.1']
    #allocation5 [shape = 'u8[262144]{0}', space=vmem, size = 0x40000, scoped, tag = 'input window, operand 1, single buffered']
    #allocation6 [shape = 's32[1]{0}', space=sflag, size = 0x4, scoped, tag = 'scoped memory for tpu_custom_call.1']
    #allocation7 [shape = 'u8[4096]{0}', space=vmem, size = 0x1000, scoped, tag = 'input window, operand 2, single buffered']
    #allocation8 [shape = 'u8[2097152]{0}', space=vmem, size = 0x200000, scoped, tag = 'input window, operand 3, single buffered']
    #allocation9 [shape = 's32[1]{0}', space=sflag, size = 0x4, scoped, tag = 'scoped memory for tpu_custom_call.1']
    #allocation10 [shape = 'u8[4096]{0}', space=vmem, size = 0x1000, scoped, tag = 'input window, operand 4, single buffered']
    #allocation11 [shape = 'u8[262144]{0}', space=vmem, size = 0x40000, scoped, tag = 'input window, operand 5, single buffered']
    #allocation12 [shape = 's32[1]{0}', space=sflag, size = 0x4, scoped, tag = 'scoped memory for tpu_custom_call.1']
    #allocation13 [shape = 'u8[512]{0}', space=vmem, size = 0x400, scoped, tag = 'input window, operand 6, single buffered']
    #allocation14 [shape = 'u8[32768]{0}', space=vmem, size = 0x8000, scoped, tag = 'input window, operand 7, single buffered']
    #allocation15 [shape = 's32[1]{0}', space=sflag, size = 0x4, scoped, tag = 'scoped memory for tpu_custom_call.1']
    #allocation16 [shape = 'u8[512]{0}', space=vmem, size = 0x400, scoped, tag = 'input window, operand 8, single buffered']
    #allocation17 [shape = 'u8[32768]{0}', space=vmem, size = 0x8000, scoped, tag = 'input window, operand 9, single buffered']
    #allocation18 [shape = 's32[1]{0}', space=sflag, size = 0x4, scoped, tag = 'scoped memory for tpu_custom_call.1']
    #allocation19 [shape = 'u8[512]{0}', space=vmem, size = 0x400, scoped, tag = 'input window, operand 10, single buffered']
    #allocation20 [shape = 'u8[4096]{0}', space=vmem, size = 0x1000, scoped, tag = 'output window, operand 0, single buffered']
    %16 = vsyncpa [#allocation3], 0
    %17 = vsyncpa [#allocation6], 0
    %18 = vsyncpa [#allocation9], 0
    %19 = vsyncpa [#allocation12], 0
    %20 = vsyncpa [#allocation15], 0
    %21 = vsyncpa [#allocation18], 0
    %22 = vsyncpa [#allocation4], 0
    // Predicated region
    $region2: #{tpu_custom_call.1} parent=1 // pred_check
      _
    $region3: #{tpu_custom_call.1} parent=1 // pred_check_branch
      %24 = sbr.rel (0) target = $region5
    $region4: #{tpu_custom_call.1} parent=1 // pred_region
      %s26 = ssub.s32 128, 128
      %27 = vsyncadd [#allocation3], %s26
      %s29 = sshll.u32 [#allocation2], 4
      %s30 = int_to_ptr.vmem [resolvable:$true] %s29
      %32 = dma.hbm_to_vmem [thread:$0]  %s0, 128, %s30, [#allocation3]
    $region5: #{tpu_custom_call.1} parent=1 // pred_fallthru
      _
    // Predicated region
    $region6: #{tpu_custom_call.1} parent=1 // pred_check
      _
    $region7: #{tpu_custom_call.1} parent=1 // pred_check_branch
      %34 = sbr.rel (0) target = $region9
    $region8: #{tpu_custom_call.1} parent=1 // pred_region
      %s36 = ssub.s32 8192, 8192
      %37 = vsyncadd [#allocation6], %s36
      %s38 = sshll.u32 [#allocation5], 4
      %s39 = int_to_ptr.vmem [resolvable:$true] %s38
      %44 = dma.hbm_to_vmem [thread:$0]  %s1, 8192, %s39, [#allocation6], 512, 512, 32
    $region9: #{tpu_custom_call.1} parent=1 // pred_fallthru
      _
    // Predicated region
    $region10: #{tpu_custom_call.1} parent=1 // pred_check
      _
    $region11: #{tpu_custom_call.1} parent=1 // pred_check_branch
      %46 = sbr.rel (0) target = $region13
    $region12: #{tpu_custom_call.1} parent=1 // pred_region
      %s48 = ssub.s32 128, 128
      %49 = vsyncadd [#allocation6], %s48
      %s51 = sshll.u32 [#allocation7], 4
      %s52 = int_to_ptr.vmem [resolvable:$true] %s51
      %54 = dma.hbm_to_vmem [thread:$0]  %s2, 128, %s52, [#allocation6]
    $region13: #{tpu_custom_call.1} parent=1 // pred_fallthru
      _
    // Predicated region
    $region14: #{tpu_custom_call.1} parent=1 // pred_check
      _
    $region15: #{tpu_custom_call.1} parent=1 // pred_check_branch
      %56 = sbr.rel (0) target = $region17
    $region16: #{tpu_custom_call.1} parent=1 // pred_region
      %s58 = ssub.s32 65536, 65536
      %59 = vsyncadd [#allocation9], %s58
      %s60 = sshll.u32 [#allocation8], 4
      %s61 = int_to_ptr.vmem [resolvable:$true] %s60
      %66 = dma.hbm_to_vmem [thread:$0]  %s3, 65536, %s61, [#allocation9], 512, 512, 32
    $region17: #{tpu_custom_call.1} parent=1 // pred_fallthru
      _
    // Predicated region
    $region18: #{tpu_custom_call.1} parent=1 // pred_check
      _
    $region19: #{tpu_custom_call.1} parent=1 // pred_check_branch
      %68 = sbr.rel (0) target = $region21
    $region20: #{tpu_custom_call.1} parent=1 // pred_region
      %s70 = ssub.s32 128, 128
      %71 = vsyncadd [#allocation9], %s70
      %s73 = sshll.u32 [#allocation10], 4
      %s74 = int_to_ptr.vmem [resolvable:$true] %s73
      %76 = dma.hbm_to_vmem [thread:$0]  %s4, 128, %s74, [#allocation9]
    $region21: #{tpu_custom_call.1} parent=1 // pred_fallthru
      _
    // Predicated region
    $region22: #{tpu_custom_call.1} parent=1 // pred_check
      _
    $region23: #{tpu_custom_call.1} parent=1 // pred_check_branch
      %78 = sbr.rel (0) target = $region25
    $region24: #{tpu_custom_call.1} parent=1 // pred_region
      %s80 = ssub.s32 8192, 8192
      %81 = vsyncadd [#allocation12], %s80
      %s82 = sshll.u32 [#allocation11], 4
      %s83 = int_to_ptr.vmem [resolvable:$true] %s82
      %88 = dma.hbm_to_vmem [thread:$0]  %s5, 8192, %s83, [#allocation12], 64, 64, 4
    $region25: #{tpu_custom_call.1} parent=1 // pred_fallthru
      _
    // Predicated region
    $region26: #{tpu_custom_call.1} parent=1 // pred_check
      _
    $region27: #{tpu_custom_call.1} parent=1 // pred_check_branch
      %90 = sbr.rel (0) target = $region29
    $region28: #{tpu_custom_call.1} parent=1 // pred_region
      %s92 = ssub.s32 16, 16
      %93 = vsyncadd [#allocation12], %s92
      %s95 = sshll.u32 [#allocation13], 4
      %s96 = int_to_ptr.vmem [resolvable:$true] %s95
      %98 = dma.hbm_to_vmem [thread:$0]  %s6, 16, %s96, [#allocation12]
    $region29: #{tpu_custom_call.1} parent=1 // pred_fallthru
      _
    // Predicated region
    $region30: #{tpu_custom_call.1} parent=1 // pred_check
      _
    $region31: #{tpu_custom_call.1} parent=1 // pred_check_branch
      %100 = sbr.rel (0) target = $region33
    $region32: #{tpu_custom_call.1} parent=1 // pred_region
      %s102 = ssub.s32 1024, 1024
      %103 = vsyncadd [#allocation15], %s102
      %s104 = sshll.u32 [#allocation14], 4
      %s105 = int_to_ptr.vmem [resolvable:$true] %s104
      %110 = dma.hbm_to_vmem [thread:$0]  %s7, 1024, %s105, [#allocation15], 64, 64, 4
    $region33: #{tpu_custom_call.1} parent=1 // pred_fallthru
      _
    // Predicated region
    $region34: #{tpu_custom_call.1} parent=1 // pred_check
      _
    $region35: #{tpu_custom_call.1} parent=1 // pred_check_branch
      %112 = sbr.rel (0) target = $region37
    $region36: #{tpu_custom_call.1} parent=1 // pred_region
      %s114 = ssub.s32 16, 16
      %115 = vsyncadd [#allocation15], %s114
      %s117 = sshll.u32 [#allocation16], 4
      %s118 = int_to_ptr.vmem [resolvable:$true] %s117
      %120 = dma.hbm_to_vmem [thread:$0]  %s8, 16, %s118, [#allocation15]
    $region37: #{tpu_custom_call.1} parent=1 // pred_fallthru
      _
    // Predicated region
    $region38: #{tpu_custom_call.1} parent=1 // pred_check
      _
    $region39: #{tpu_custom_call.1} parent=1 // pred_check_branch
      %122 = sbr.rel (0) target = $region41
    $region40: #{tpu_custom_call.1} parent=1 // pred_region
      %s124 = ssub.s32 1024, 1024
      %125 = vsyncadd [#allocation18], %s124
      %s126 = sshll.u32 [#allocation17], 4
      %s127 = int_to_ptr.vmem [resolvable:$true] %s126
      %132 = dma.hbm_to_vmem [thread:$0]  %s9, 1024, %s127, [#allocation18], 64, 64, 4
    $region41: #{tpu_custom_call.1} parent=1 // pred_fallthru
      _
    // Predicated region
    $region42: #{tpu_custom_call.1} parent=1 // pred_check
      _
    $region43: #{tpu_custom_call.1} parent=1 // pred_check_branch
      %134 = sbr.rel (0) target = $region45
    $region44: #{tpu_custom_call.1} parent=1 // pred_region
      %s136 = ssub.s32 16, 16
      %137 = vsyncadd [#allocation18], %s136
      %s139 = sshll.u32 [#allocation19], 4
      %s140 = int_to_ptr.vmem [resolvable:$true] %s139
      %142 = dma.hbm_to_vmem [thread:$0]  %s10, 16, %s140, [#allocation18]
    $region45: #{tpu_custom_call.1} parent=1 // pred_fallthru
      _
    // Predicated region
    $region46: #{tpu_custom_call.1} parent=1 // pred_check
      _
    $region47: #{tpu_custom_call.1} parent=1 // pred_check_branch
      %144 = sbr.rel (0) target = $region49
    $region48: #{tpu_custom_call.1} parent=1 // pred_region
      %145 = dma.done [#allocation3], 128
    $region49: #{tpu_custom_call.1} parent=1 // pred_fallthru
      _
    // Predicated region
    $region50: #{tpu_custom_call.1} parent=1 // pred_check
      _
    $region51: #{tpu_custom_call.1} parent=1 // pred_check_branch
      %147 = sbr.rel (0) target = $region53
    $region52: #{tpu_custom_call.1} parent=1 // pred_region
      %148 = dma.done [#allocation6], 8192
    $region53: #{tpu_custom_call.1} parent=1 // pred_fallthru
      _
    // Predicated region
    $region54: #{tpu_custom_call.1} parent=1 // pred_check
      _
    $region55: #{tpu_custom_call.1} parent=1 // pred_check_branch
      %150 = sbr.rel (0) target = $region57
    $region56: #{tpu_custom_call.1} parent=1 // pred_region
      %151 = dma.done [#allocation6], 128
    $region57: #{tpu_custom_call.1} parent=1 // pred_fallthru
      _
    // Predicated region
    $region58: #{tpu_custom_call.1} parent=1 // pred_check
      _
    $region59: #{tpu_custom_call.1} parent=1 // pred_check_branch
      %153 = sbr.rel (0) target = $region61
    $region60: #{tpu_custom_call.1} parent=1 // pred_region
      %154 = dma.done [#allocation9], 65536
    $region61: #{tpu_custom_call.1} parent=1 // pred_fallthru
      _
    // Predicated region
    $region62: #{tpu_custom_call.1} parent=1 // pred_check
      _
    $region63: #{tpu_custom_call.1} parent=1 // pred_check_branch
      %156 = sbr.rel (0) target = $region65
    $region64: #{tpu_custom_call.1} parent=1 // pred_region
      %157 = dma.done [#allocation9], 128
    $region65: #{tpu_custom_call.1} parent=1 // pred_fallthru
      _
    // Predicated region
    $region66: #{tpu_custom_call.1} parent=1 // pred_check
      _
    $region67: #{tpu_custom_call.1} parent=1 // pred_check_branch
      %159 = sbr.rel (0) target = $region69
    $region68: #{tpu_custom_call.1} parent=1 // pred_region
      %160 = dma.done [#allocation12], 8192
    $region69: #{tpu_custom_call.1} parent=1 // pred_fallthru
      _
    // Predicated region
    $region70: #{tpu_custom_call.1} parent=1 // pred_check
      _
    $region71: #{tpu_custom_call.1} parent=1 // pred_check_branch
      %162 = sbr.rel (0) target = $region73
    $region72: #{tpu_custom_call.1} parent=1 // pred_region
      %163 = dma.done [#allocation12], 16
    $region73: #{tpu_custom_call.1} parent=1 // pred_fallthru
      _
    // Predicated region
    $region74: #{tpu_custom_call.1} parent=1 // pred_check
      _
    $region75: #{tpu_custom_call.1} parent=1 // pred_check_branch
      %165 = sbr.rel (0) target = $region77
    $region76: #{tpu_custom_call.1} parent=1 // pred_region
      %166 = dma.done [#allocation15], 1024
    $region77: #{tpu_custom_call.1} parent=1 // pred_fallthru
      _
    // Predicated region
    $region78: #{tpu_custom_call.1} parent=1 // pred_check
      _
    $region79: #{tpu_custom_call.1} parent=1 // pred_check_branch
      %168 = sbr.rel (0) target = $region81
    $region80: #{tpu_custom_call.1} parent=1 // pred_region
      %169 = dma.done [#allocation15], 16
    $region81: #{tpu_custom_call.1} parent=1 // pred_fallthru
      _
    // Predicated region
    $region82: #{tpu_custom_call.1} parent=1 // pred_check
      _
    $region83: #{tpu_custom_call.1} parent=1 // pred_check_branch
      %171 = sbr.rel (0) target = $region85
    $region84: #{tpu_custom_call.1} parent=1 // pred_region
      %172 = dma.done [#allocation18], 1024
    $region85: #{tpu_custom_call.1} parent=1 // pred_fallthru
      _
    // Predicated region
    $region86: #{tpu_custom_call.1} parent=1 // pred_check
      _
    $region87: #{tpu_custom_call.1} parent=1 // pred_check_branch
      %174 = sbr.rel (0) target = $region89
    $region88: #{tpu_custom_call.1} parent=1 // pred_region
      %175 = dma.done [#allocation18], 16
    $region89: #{tpu_custom_call.1} parent=1 // pred_fallthru
      _
    %v177 = vld [vmem:[#allocation2] sm:$0xff]
    %v178 = vpack.c.bf16 %v177, %v177
    %v179 = vld [vmem:[#allocation5] sm:$0xff]
    %v180 = vld [vmem:[#allocation5 + $0x8] sm:$0xff]
    %v181 = vld [vmem:[#allocation5 + $0x10] sm:$0xff]
    %v182 = vld [vmem:[#allocation5 + $0x18] sm:$0xff]
    %v183 = vld [vmem:[#allocation5 + $0x20] sm:$0xff]
    %v184 = vld [vmem:[#allocation5 + $0x28] sm:$0xff]
    %v185 = vld [vmem:[#allocation5 + $0x30] sm:$0xff]
    %v186 = vld [vmem:[#allocation5 + $0x38] sm:$0xff]
    %v187 = vld [vmem:[#allocation5 + $0x40] sm:$0xff]
    %v188 = vld [vmem:[#allocation5 + $0x48] sm:$0xff]
    %v189 = vld [vmem:[#allocation5 + $0x50] sm:$0xff]
    %v190 = vld [vmem:[#allocation5 + $0x58] sm:$0xff]
    %v191 = vld [vmem:[#allocation5 + $0x60] sm:$0xff]
    %v192 = vld [vmem:[#allocation5 + $0x68] sm:$0xff]
    %v193 = vld [vmem:[#allocation5 + $0x70] sm:$0xff]
    %v194 = vld [vmem:[#allocation5 + $0x78] sm:$0xff]
    %v195 = vld [vmem:[#allocation5 + $0x80] sm:$0xff]
    %v196 = vld [vmem:[#allocation5 + $0x88] sm:$0xff]
    %v197 = vld [vmem:[#allocation5 + $0x90] sm:$0xff]
    %v198 = vld [vmem:[#allocation5 + $0x98] sm:$0xff]
    %v199 = vld [vmem:[#allocation5 + $0xa0] sm:$0xff]
    %v200 = vld [vmem:[#allocation5 + $0xa8] sm:$0xff]
    %v201 = vld [vmem:[#allocation5 + $0xb0] sm:$0xff]
    %v202 = vld [vmem:[#allocation5 + $0xb8] sm:$0xff]
    %v203 = vld [vmem:[#allocation5 + $0xc0] sm:$0xff]
    %v204 = vld [vmem:[#allocation5 + $0xc8] sm:$0xff]
    %v205 = vld [vmem:[#allocation5 + $0xd0] sm:$0xff]
    %v206 = vld [vmem:[#allocation5 + $0xd8] sm:$0xff]
    %v207 = vld [vmem:[#allocation5 + $0xe0] sm:$0xff]
    %v208 = vld [vmem:[#allocation5 + $0xe8] sm:$0xff]
    %v209 = vld [vmem:[#allocation5 + $0xf0] sm:$0xff]
    %v210 = vld [vmem:[#allocation5 + $0xf8] sm:$0xff]
    %v211 = vld [vmem:[#allocation5 + $0x100] sm:$0xff]
    %v212 = vld [vmem:[#allocation5 + $0x108] sm:$0xff]
    %v213 = vld [vmem:[#allocation5 + $0x110] sm:$0xff]
    %v214 = vld [vmem:[#allocation5 + $0x118] sm:$0xff]
    %v215 = vld [vmem:[#allocation5 + $0x120] sm:$0xff]
    %v216 = vld [vmem:[#allocation5 + $0x128] sm:$0xff]
    %v217 = vld [vmem:[#allocation5 + $0x130] sm:$0xff]
    %v218 = vld [vmem:[#allocation5 + $0x138] sm:$0xff]
    %v219 = vld [vmem:[#allocation5 + $0x140] sm:$0xff]
    %v220 = vld [vmem:[#allocation5 + $0x148] sm:$0xff]
    %v221 = vld [vmem:[#allocation5 + $0x150] sm:$0xff]
    %v222 = vld [vmem:[#allocation5 + $0x158] sm:$0xff]
    %v223 = vld [vmem:[#allocation5 + $0x160] sm:$0xff]
    %v224 = vld [vmem:[#allocation5 + $0x168] sm:$0xff]
    %v225 = vld [vmem:[#allocation5 + $0x170] sm:$0xff]
    %v226 = vld [vmem:[#allocation5 + $0x178] sm:$0xff]
    %v227 = vld [vmem:[#allocation5 + $0x180] sm:$0xff]
    %v228 = vld [vmem:[#allocation5 + $0x188] sm:$0xff]
    %v229 = vld [vmem:[#allocation5 + $0x190] sm:$0xff]
    %v230 = vld [vmem:[#allocation5 + $0x198] sm:$0xff]
    %v231 = vld [vmem:[#allocation5 + $0x1a0] sm:$0xff]
    %v232 = vld [vmem:[#allocation5 + $0x1a8] sm:$0xff]
    %v233 = vld [vmem:[#allocation5 + $0x1b0] sm:$0xff]
    %v234 = vld [vmem:[#allocation5 + $0x1b8] sm:$0xff]
    %v235 = vld [vmem:[#allocation5 + $0x1c0] sm:$0xff]
    %v236 = vld [vmem:[#allocation5 + $0x1c8] sm:$0xff]
    %v237 = vld [vmem:[#allocation5 + $0x1d0] sm:$0xff]
    %v238 = vld [vmem:[#allocation5 + $0x1d8] sm:$0xff]
    %v239 = vld [vmem:[#allocation5 + $0x1e0] sm:$0xff]
    %v240 = vld [vmem:[#allocation5 + $0x1e8] sm:$0xff]
    %v241 = vld [vmem:[#allocation5 + $0x1f0] sm:$0xff]
    %v242 = vld [vmem:[#allocation5 + $0x1f8] sm:$0xff]
    %v243 = vld [vmem:[#allocation7] sm:$0xff]
    %v245 = vlaneseq
    %v246 = vshrl.u32 %v245, 7
    %v247 = vsub.s32 0, %v246
    %v248 = vrot.slane %v243, %v247
    %v249 = vlaneseq
    %v250 = vshrl.u32 %v249, 7
    %v251 = vsub.s32 1, %v250
    %v252 = vrot.slane %v243, %v251
    %v253 = vlaneseq
    %v254 = vshrl.u32 %v253, 7
    %v255 = vsub.s32 2, %v254
    %v256 = vrot.slane %v243, %v255
    %v257 = vlaneseq
    %v258 = vshrl.u32 %v257, 7
    %v259 = vsub.s32 3, %v258
    %v260 = vrot.slane %v243, %v259
    %v261 = vlaneseq
    %v262 = vshrl.u32 %v261, 7
    %v263 = vsub.s32 4, %v262
    %v264 = vrot.slane %v243, %v263
    %v265 = vlaneseq
    %v266 = vshrl.u32 %v265, 7
    %v267 = vsub.s32 5, %v266
    %v268 = vrot.slane %v243, %v267
    %v269 = vlaneseq
    %v270 = vshrl.u32 %v269, 7
    %v271 = vsub.s32 6, %v270
    %v272 = vrot.slane %v243, %v271
    %v273 = vlaneseq
    %v274 = vshrl.u32 %v273, 7
    %v275 = vsub.s32 7, %v274
    %v276 = vrot.slane %v243, %v275
    %v349 = vunpack.c.l.b16 %v179
    %v350 = vunpack.c.h.b16 %v179
    %v351 = vunpack.c.l.b16 %v180
    %v352 = vunpack.c.h.b16 %v180
    %v353 = vunpack.c.l.b16 %v181
    %v354 = vunpack.c.h.b16 %v181
    %v355 = vunpack.c.l.b16 %v182
    %v356 = vunpack.c.h.b16 %v182
    %v357 = vunpack.c.l.b16 %v183
    %v358 = vunpack.c.h.b16 %v183
    %v359 = vunpack.c.l.b16 %v184
    %v360 = vunpack.c.h.b16 %v184
    %v361 = vunpack.c.l.b16 %v185
    %v362 = vunpack.c.h.b16 %v185
    %v363 = vunpack.c.l.b16 %v186
    %v364 = vunpack.c.h.b16 %v186
    %v365 = vunpack.c.l.b16 %v187
    %v366 = vunpack.c.h.b16 %v187
    %v367 = vunpack.c.l.b16 %v188
    %v368 = vunpack.c.h.b16 %v188
    %v369 = vunpack.c.l.b16 %v189
    %v370 = vunpack.c.h.b16 %v189
    %v371 = vunpack.c.l.b16 %v190
    %v372 = vunpack.c.h.b16 %v190
    %v373 = vunpack.c.l.b16 %v191
    %v374 = vunpack.c.h.b16 %v191
    %v375 = vunpack.c.l.b16 %v192
    %v376 = vunpack.c.h.b16 %v192
    %v377 = vunpack.c.l.b16 %v193
    %v378 = vunpack.c.h.b16 %v193
    %v379 = vunpack.c.l.b16 %v194
    %v380 = vunpack.c.h.b16 %v194
    %v381 = vunpack.c.l.b16 %v195
    %v382 = vunpack.c.h.b16 %v195
    %v383 = vunpack.c.l.b16 %v196
    %v384 = vunpack.c.h.b16 %v196
    %v385 = vunpack.c.l.b16 %v197
    %v386 = vunpack.c.h.b16 %v197
    %v387 = vunpack.c.l.b16 %v198
    %v388 = vunpack.c.h.b16 %v198
    %v389 = vunpack.c.l.b16 %v199
    %v390 = vunpack.c.h.b16 %v199
    %v391 = vunpack.c.l.b16 %v200
    %v392 = vunpack.c.h.b16 %v200
    %v393 = vunpack.c.l.b16 %v201
    %v394 = vunpack.c.h.b16 %v201
    %v395 = vunpack.c.l.b16 %v202
    %v396 = vunpack.c.h.b16 %v202
    %v397 = vunpack.c.l.b16 %v203
    %v398 = vunpack.c.h.b16 %v203
    %v399 = vunpack.c.l.b16 %v204
    %v400 = vunpack.c.h.b16 %v204
    %v401 = vunpack.c.l.b16 %v205
    %v402 = vunpack.c.h.b16 %v205
    %v403 = vunpack.c.l.b16 %v206
    %v404 = vunpack.c.h.b16 %v206
    %v405 = vunpack.c.l.b16 %v207
    %v406 = vunpack.c.h.b16 %v207
    %v407 = vunpack.c.l.b16 %v208
    %v408 = vunpack.c.h.b16 %v208
    %v409 = vunpack.c.l.b16 %v209
    %v410 = vunpack.c.h.b16 %v209
    %v411 = vunpack.c.l.b16 %v210
    %v412 = vunpack.c.h.b16 %v210
    %v413 = vunpack.c.l.b16 %v211
    %v414 = vunpack.c.h.b16 %v211
    %v415 = vunpack.c.l.b16 %v212
    %v416 = vunpack.c.h.b16 %v212
    %v417 = vunpack.c.l.b16 %v213
    %v418 = vunpack.c.h.b16 %v213
    %v419 = vunpack.c.l.b16 %v214
    %v420 = vunpack.c.h.b16 %v214
    %v421 = vunpack.c.l.b16 %v215
    %v422 = vunpack.c.h.b16 %v215
    %v423 = vunpack.c.l.b16 %v216
    %v424 = vunpack.c.h.b16 %v216
    %v425 = vunpack.c.l.b16 %v217
    %v426 = vunpack.c.h.b16 %v217
    %v427 = vunpack.c.l.b16 %v218
    %v428 = vunpack.c.h.b16 %v218
    %v429 = vunpack.c.l.b16 %v219
    %v430 = vunpack.c.h.b16 %v219
    %v431 = vunpack.c.l.b16 %v220
    %v432 = vunpack.c.h.b16 %v220
    %v433 = vunpack.c.l.b16 %v221
    %v434 = vunpack.c.h.b16 %v221
    %v435 = vunpack.c.l.b16 %v222
    %v436 = vunpack.c.h.b16 %v222
    %v437 = vunpack.c.l.b16 %v223
    %v438 = vunpack.c.h.b16 %v223
    %v439 = vunpack.c.l.b16 %v224
    %v440 = vunpack.c.h.b16 %v224
    %v441 = vunpack.c.l.b16 %v225
    %v442 = vunpack.c.h.b16 %v225
    %v443 = vunpack.c.l.b16 %v226
    %v444 = vunpack.c.h.b16 %v226
    %v445 = vunpack.c.l.b16 %v227
    %v446 = vunpack.c.h.b16 %v227
    %v447 = vunpack.c.l.b16 %v228
    %v448 = vunpack.c.h.b16 %v228
    %v449 = vunpack.c.l.b16 %v229
    %v450 = vunpack.c.h.b16 %v229
    %v451 = vunpack.c.l.b16 %v230
    %v452 = vunpack.c.h.b16 %v230
    %v453 = vunpack.c.l.b16 %v231
    %v454 = vunpack.c.h.b16 %v231
    %v455 = vunpack.c.l.b16 %v232
    %v456 = vunpack.c.h.b16 %v232
    %v457 = vunpack.c.l.b16 %v233
    %v458 = vunpack.c.h.b16 %v233
    %v459 = vunpack.c.l.b16 %v234
    %v460 = vunpack.c.h.b16 %v234
    %v461 = vunpack.c.l.b16 %v235
    %v462 = vunpack.c.h.b16 %v235
    %v463 = vunpack.c.l.b16 %v236
    %v464 = vunpack.c.h.b16 %v236
    %v465 = vunpack.c.l.b16 %v237
    %v466 = vunpack.c.h.b16 %v237
    %v467 = vunpack.c.l.b16 %v238
    %v468 = vunpack.c.h.b16 %v238
    %v469 = vunpack.c.l.b16 %v239
    %v470 = vunpack.c.h.b16 %v239
    %v471 = vunpack.c.l.b16 %v240
    %v472 = vunpack.c.h.b16 %v240
    %v473 = vunpack.c.l.b16 %v241
    %v474 = vunpack.c.h.b16 %v241
    %v475 = vunpack.c.l.b16 %v242
    %v476 = vunpack.c.h.b16 %v242
    %v477 = vpack.c.b16 %v357, %v349
    %v478 = vpack.c.b16 %v358, %v350
    %v479 = vpack.c.b16 %v359, %v351
    %v480 = vpack.c.b16 %v360, %v352
    %v481 = vpack.c.b16 %v361, %v353
    %v482 = vpack.c.b16 %v362, %v354
    %v483 = vpack.c.b16 %v363, %v355
    %v484 = vpack.c.b16 %v364, %v356
    %v485 = vpack.c.b16 %v373, %v365
    %v486 = vpack.c.b16 %v374, %v366
    %v487 = vpack.c.b16 %v375, %v367
    %v488 = vpack.c.b16 %v376, %v368
    %v489 = vpack.c.b16 %v377, %v369
    %v490 = vpack.c.b16 %v378, %v370
    %v491 = vpack.c.b16 %v379, %v371
    %v492 = vpack.c.b16 %v380, %v372
    %v493 = vpack.c.b16 %v389, %v381
    %v494 = vpack.c.b16 %v390, %v382
    %v495 = vpack.c.b16 %v391, %v383
    %v496 = vpack.c.b16 %v392, %v384
    %v497 = vpack.c.b16 %v393, %v385
    %v498 = vpack.c.b16 %v394, %v386
    %v499 = vpack.c.b16 %v395, %v387
    %v500 = vpack.c.b16 %v396, %v388
    %v501 = vpack.c.b16 %v405, %v397
    %v502 = vpack.c.b16 %v406, %v398
    %v503 = vpack.c.b16 %v407, %v399
    %v504 = vpack.c.b16 %v408, %v400
    %v505 = vpack.c.b16 %v409, %v401
    %v506 = vpack.c.b16 %v410, %v402
    %v507 = vpack.c.b16 %v411, %v403
    %v508 = vpack.c.b16 %v412, %v404
    %v509 = vpack.c.b16 %v421, %v413
    %v510 = vpack.c.b16 %v422, %v414
    %v511 = vpack.c.b16 %v423, %v415
    %v512 = vpack.c.b16 %v424, %v416
    %v513 = vpack.c.b16 %v425, %v417
    %v514 = vpack.c.b16 %v426, %v418
    %v515 = vpack.c.b16 %v427, %v419
    %v516 = vpack.c.b16 %v428, %v420
    %v517 = vpack.c.b16 %v437, %v429
    %v518 = vpack.c.b16 %v438, %v430
    %v519 = vpack.c.b16 %v439, %v431
    %v520 = vpack.c.b16 %v440, %v432
    %v521 = vpack.c.b16 %v441, %v433
    %v522 = vpack.c.b16 %v442, %v434
    %v523 = vpack.c.b16 %v443, %v435
    %v524 = vpack.c.b16 %v444, %v436
    %v525 = vpack.c.b16 %v453, %v445
    %v526 = vpack.c.b16 %v454, %v446
    %v527 = vpack.c.b16 %v455, %v447
    %v528 = vpack.c.b16 %v456, %v448
    %v529 = vpack.c.b16 %v457, %v449
    %v530 = vpack.c.b16 %v458, %v450
    %v531 = vpack.c.b16 %v459, %v451
    %v532 = vpack.c.b16 %v460, %v452
    %v533 = vpack.c.b16 %v469, %v461
    %v534 = vpack.c.b16 %v470, %v462
    %v535 = vpack.c.b16 %v471, %v463
    %v536 = vpack.c.b16 %v472, %v464
    %v537 = vpack.c.b16 %v473, %v465
    %v538 = vpack.c.b16 %v474, %v466
    %v539 = vpack.c.b16 %v475, %v467
    %v540 = vpack.c.b16 %v476, %v468
    %605 = vmatprep.subr.bf16.mxu0 %v534
    %606 = vmatpush1.bf16.msra.mxu0 %v533
    %607 = vmatprep.subr.bf16.mxu0 %v526
    %608 = vmatpush1.bf16.msra.mxu0 %v525
    %609 = vmatprep.subr.bf16.mxu0 %v518
    %610 = vmatpush1.bf16.msra.mxu0 %v517
    %611 = vmatprep.subr.bf16.mxu0 %v510
    %612 = vmatpush1.bf16.msra.mxu0 %v509
    %613 = vmatprep.subr.bf16.mxu0 %v502
    %614 = vmatpush1.bf16.msra.mxu0 %v501
    %615 = vmatprep.subr.bf16.mxu0 %v494
    %616 = vmatpush1.bf16.msra.mxu0 %v493
    %617 = vmatprep.subr.bf16.mxu0 %v486
    %618 = vmatpush1.bf16.msra.mxu0 %v485
    %619 = vmatprep.subr.bf16.mxu0 %v478
    %620 = vmatpush1.bf16.msra.mxu0 %v477
    %621 = vmatprep.subr.bf16.mxu0 0
    %622 = vmatpush2.bf16.msra.mxu0 0
    %623 = vmatprep.subr.bf16.mxu0 0
    %624 = vmatpush2.bf16.msra.mxu0 0
    %625 = vmatprep.subr.bf16.mxu0 0
    %626 = vmatpush2.bf16.msra.mxu0 0
    %627 = vmatprep.subr.bf16.mxu0 0
    %628 = vmatpush2.bf16.msra.mxu0 0
    %629 = vmatprep.subr.bf16.mxu0 0
    %630 = vmatpush2.bf16.msra.mxu0 0
    %631 = vmatprep.subr.bf16.mxu0 0
    %632 = vmatpush2.bf16.msra.mxu0 0
    %633 = vmatprep.subr.bf16.mxu0 0
    %634 = vmatpush2.bf16.msra.mxu0 0
    %635 = vmatprep.subr.bf16.mxu0 0
    %636 = vmatpush2.bf16.msra.mxu0 0
    %637 = vmatprep.mubr.bf16.mxu0 0
    %638 = vmatmul.mubr.bf16.gmra.mxu0 %v178
    %v639 = vpop.f32.mrf.mxu0
    %v640 = vadd.f32 %v248, %v639
    %v641 = vpop.f32.mrf.mxu0
    %v642 = vadd.f32 %v252, %v641
    %v643 = vpop.f32.mrf.mxu0
    %v644 = vpop.f32.mrf.mxu0
    %645 = vdwg.mxu0
    %646 = vmatprep.subr.bf16.mxu0 %v536
    %647 = vmatpush1.bf16.msra.mxu0 %v535
    %648 = vmatprep.subr.bf16.mxu0 %v528
    %649 = vmatpush1.bf16.msra.mxu0 %v527
    %650 = vmatprep.subr.bf16.mxu0 %v520
    %651 = vmatpush1.bf16.msra.mxu0 %v519
    %652 = vmatprep.subr.bf16.mxu0 %v512
    %653 = vmatpush1.bf16.msra.mxu0 %v511
    %654 = vmatprep.subr.bf16.mxu0 %v504
    %655 = vmatpush1.bf16.msra.mxu0 %v503
    %656 = vmatprep.subr.bf16.mxu0 %v496
    %657 = vmatpush1.bf16.msra.mxu0 %v495
    %658 = vmatprep.subr.bf16.mxu0 %v488
    %659 = vmatpush1.bf16.msra.mxu0 %v487
    %660 = vmatprep.subr.bf16.mxu0 %v480
    %661 = vmatpush1.bf16.msra.mxu0 %v479
    %662 = vmatprep.subr.bf16.mxu0 0
    %663 = vmatpush2.bf16.msra.mxu0 0
    %664 = vmatprep.subr.bf16.mxu0 0
    %665 = vmatpush2.bf16.msra.mxu0 0
    %666 = vmatprep.subr.bf16.mxu0 0
    %667 = vmatpush2.bf16.msra.mxu0 0
    %668 = vmatprep.subr.bf16.mxu0 0
    %669 = vmatpush2.bf16.msra.mxu0 0
    %670 = vmatprep.subr.bf16.mxu0 0
    %671 = vmatpush2.bf16.msra.mxu0 0
    %672 = vmatprep.subr.bf16.mxu0 0
    %673 = vmatpush2.bf16.msra.mxu0 0
    %674 = vmatprep.subr.bf16.mxu0 0
    %675 = vmatpush2.bf16.msra.mxu0 0
    %676 = vmatprep.subr.bf16.mxu0 0
    %677 = vmatpush2.bf16.msra.mxu0 0
    %678 = vmatprep.mubr.bf16.mxu0 0
    %679 = vmatmul.mubr.bf16.gmra.mxu0 %v178
    %v680 = vpop.f32.mrf.mxu0
    %v681 = vadd.f32 %v256, %v680
    %v682 = vpop.f32.mrf.mxu0
    %v683 = vadd.f32 %v260, %v682
    %v684 = vpop.f32.mrf.mxu0
    %v685 = vpop.f32.mrf.mxu0
    %686 = vdwg.mxu0
    %687 = vmatprep.subr.bf16.mxu0 %v538
    %688 = vmatpush1.bf16.msra.mxu0 %v537
    %689 = vmatprep.subr.bf16.mxu0 %v530
    %690 = vmatpush1.bf16.msra.mxu0 %v529
    %691 = vmatprep.subr.bf16.mxu0 %v522
    %692 = vmatpush1.bf16.msra.mxu0 %v521
    %693 = vmatprep.subr.bf16.mxu0 %v514
    %694 = vmatpush1.bf16.msra.mxu0 %v513
    %695 = vmatprep.subr.bf16.mxu0 %v506
    %696 = vmatpush1.bf16.msra.mxu0 %v505
    %697 = vmatprep.subr.bf16.mxu0 %v498
    %698 = vmatpush1.bf16.msra.mxu0 %v497
    %699 = vmatprep.subr.bf16.mxu0 %v490
    %700 = vmatpush1.bf16.msra.mxu0 %v489
    %701 = vmatprep.subr.bf16.mxu0 %v482
    %702 = vmatpush1.bf16.msra.mxu0 %v481
    %703 = vmatprep.subr.bf16.mxu0 0
    %704 = vmatpush2.bf16.msra.mxu0 0
    %705 = vmatprep.subr.bf16.mxu0 0
    %706 = vmatpush2.bf16.msra.mxu0 0
    %707 = vmatprep.subr.bf16.mxu0 0
    %708 = vmatpush2.bf16.msra.mxu0 0
    %709 = vmatprep.subr.bf16.mxu0 0
    %710 = vmatpush2.bf16.msra.mxu0 0
    %711 = vmatprep.subr.bf16.mxu0 0
    %712 = vmatpush2.bf16.msra.mxu0 0
    %713 = vmatprep.subr.bf16.mxu0 0
    %714 = vmatpush2.bf16.msra.mxu0 0
    %715 = vmatprep.subr.bf16.mxu0 0
    %716 = vmatpush2.bf16.msra.mxu0 0
    %717 = vmatprep.subr.bf16.mxu0 0
    %718 = vmatpush2.bf16.msra.mxu0 0
    %719 = vmatprep.mubr.bf16.mxu0 0
    %720 = vmatmul.mubr.bf16.gmra.mxu0 %v178
    %v721 = vpop.f32.mrf.mxu0
    %v722 = vadd.f32 %v264, %v721
    %v723 = vpop.f32.mrf.mxu0
    %v724 = vadd.f32 %v268, %v723
    %v725 = vpop.f32.mrf.mxu0
    %v726 = vpop.f32.mrf.mxu0
    %727 = vdwg.mxu0
    %728 = vmatprep.subr.bf16.mxu0 %v540
    %729 = vmatpush1.bf16.msra.mxu0 %v539
    %730 = vmatprep.subr.bf16.mxu0 %v532
    %731 = vmatpush1.bf16.msra.mxu0 %v531
    %732 = vmatprep.subr.bf16.mxu0 %v524
    %733 = vmatpush1.bf16.msra.mxu0 %v523
    %734 = vmatprep.subr.bf16.mxu0 %v516
    %735 = vmatpush1.bf16.msra.mxu0 %v515
    %736 = vmatprep.subr.bf16.mxu0 %v508
    %737 = vmatpush1.bf16.msra.mxu0 %v507
    %738 = vmatprep.subr.bf16.mxu0 %v500
    %739 = vmatpush1.bf16.msra.mxu0 %v499
    %740 = vmatprep.subr.bf16.mxu0 %v492
    %741 = vmatpush1.bf16.msra.mxu0 %v491
    %742 = vmatprep.subr.bf16.mxu0 %v484
    %743 = vmatpush1.bf16.msra.mxu0 %v483
    %744 = vmatprep.subr.bf16.mxu0 0
    %745 = vmatpush2.bf16.msra.mxu0 0
    %746 = vmatprep.subr.bf16.mxu0 0
    %747 = vmatpush2.bf16.msra.mxu0 0
    %748 = vmatprep.subr.bf16.mxu0 0
    %749 = vmatpush2.bf16.msra.mxu0 0
    %750 = vmatprep.subr.bf16.mxu0 0
    %751 = vmatpush2.bf16.msra.mxu0 0
    %752 = vmatprep.subr.bf16.mxu0 0
    %753 = vmatpush2.bf16.msra.mxu0 0
    %754 = vmatprep.subr.bf16.mxu0 0
    %755 = vmatpush2.bf16.msra.mxu0 0
    %756 = vmatprep.subr.bf16.mxu0 0
    %757 = vmatpush2.bf16.msra.mxu0 0
    %758 = vmatprep.subr.bf16.mxu0 0
    %759 = vmatpush2.bf16.msra.mxu0 0
    %760 = vmatprep.mubr.bf16.mxu0 0
    %761 = vmatmul.mubr.bf16.gmra.mxu0 %v178
    %v762 = vpop.f32.mrf.mxu0
    %v763 = vadd.f32 %v272, %v762
    %v764 = vpop.f32.mrf.mxu0
    %v765 = vadd.f32 %v276, %v764
    %v766 = vpop.f32.mrf.mxu0
    %v767 = vpop.f32.mrf.mxu0
    %768 = vdwg.mxu0
    %vm769 = vcmp.gt.f32.partialorder %v640, 0.0
    %vm770 = vcmp.gt.f32.partialorder %v642, 0.0
    %vm771 = vcmp.gt.f32.partialorder %v681, 0.0
    %vm772 = vcmp.gt.f32.partialorder %v683, 0.0
    %vm773 = vcmp.gt.f32.partialorder %v722, 0.0
    %vm774 = vcmp.gt.f32.partialorder %v724, 0.0
    %vm775 = vcmp.gt.f32.partialorder %v763, 0.0
    %vm776 = vcmp.gt.f32.partialorder %v765, 0.0
    %v777 = vmul.f32 %v640, 0.01
    %v778 = vmul.f32 %v642, 0.01
    %v779 = vmul.f32 %v681, 0.01
    %v780 = vmul.f32 %v683, 0.01
    %v781 = vmul.f32 %v722, 0.01
    %v782 = vmul.f32 %v724, 0.01
    %v783 = vmul.f32 %v763, 0.01
    %v784 = vmul.f32 %v765, 0.01
    %v785 = vsel %vm769, %v640, %v777
    %v786 = vsel %vm770, %v642, %v778
    %v787 = vsel %vm771, %v681, %v779
    %v788 = vsel %vm772, %v683, %v780
    %v789 = vsel %vm773, %v722, %v781
    %v790 = vsel %vm774, %v724, %v782
    %v791 = vsel %vm775, %v763, %v783
    %v792 = vsel %vm776, %v765, %v784
    %v793 = vpack.c.bf16 %v785, %v785
    %v794 = vpack.c.bf16 %v786, %v786
    %v795 = vpack.c.bf16 %v787, %v787
    %v796 = vpack.c.bf16 %v788, %v788
    %v797 = vpack.c.bf16 %v789, %v789
    %v798 = vpack.c.bf16 %v790, %v790
    %v799 = vpack.c.bf16 %v791, %v791
    %v800 = vpack.c.bf16 %v792, %v792
    %v801 = vld [vmem:[#allocation8] sm:$0xff]
    %v802 = vld [vmem:[#allocation8 + $0x8] sm:$0xff]
    %v803 = vld [vmem:[#allocation8 + $0x10] sm:$0xff]
    %v804 = vld [vmem:[#allocation8 + $0x18] sm:$0xff]
    %v805 = vld [vmem:[#allocation8 + $0x20] sm:$0xff]
    %v806 = vld [vmem:[#allocation8 + $0x28] sm:$0xff]
    %v807 = vld [vmem:[#allocation8 + $0x30] sm:$0xff]
    %v808 = vld [vmem:[#allocation8 + $0x38] sm:$0xff]
    %v809 = vld [vmem:[#allocation8 + $0x40] sm:$0xff]
    %v810 = vld [vmem:[#allocation8 + $0x48] sm:$0xff]
    %v811 = vld [vmem:[#allocation8 + $0x50] sm:$0xff]
    %v812 = vld [vmem:[#allocation8 + $0x58] sm:$0xff]
    %v813 = vld [vmem:[#allocation8 + $0x60] sm:$0xff]
    %v814 = vld [vmem:[#allocation8 + $0x68] sm:$0xff]
    %v815 = vld [vmem:[#allocation8 + $0x70] sm:$0xff]
    %v816 = vld [vmem:[#allocation8 + $0x78] sm:$0xff]
    %v817 = vld [vmem:[#allocation8 + $0x80] sm:$0xff]
    %v818 = vld [vmem:[#allocation8 + $0x88] sm:$0xff]
    %v819 = vld [vmem:[#allocation8 + $0x90] sm:$0xff]
    %v820 = vld [vmem:[#allocation8 + $0x98] sm:$0xff]
    %v821 = vld [vmem:[#allocation8 + $0xa0] sm:$0xff]
    %v822 = vld [vmem:[#allocation8 + $0xa8] sm:$0xff]
    %v823 = vld [vmem:[#allocation8 + $0xb0] sm:$0xff]
    %v824 = vld [vmem:[#allocation8 + $0xb8] sm:$0xff]
    %v825 = vld [vmem:[#allocation8 + $0xc0] sm:$0xff]
    %v826 = vld [vmem:[#allocation8 + $0xc8] sm:$0xff]
    %v827 = vld [vmem:[#allocation8 + $0xd0] sm:$0xff]
    %v828 = vld [vmem:[#allocation8 + $0xd8] sm:$0xff]
    %v829 = vld [vmem:[#allocation8 + $0xe0] sm:$0xff]
    %v830 = vld [vmem:[#allocation8 + $0xe8] sm:$0xff]
    %v831 = vld [vmem:[#allocation8 + $0xf0] sm:$0xff]
    %v832 = vld [vmem:[#allocation8 + $0xf8] sm:$0xff]
    %v833 = vld [vmem:[#allocation8 + $0x100] sm:$0xff]
    %v834 = vld [vmem:[#allocation8 + $0x108] sm:$0xff]
    %v835 = vld [vmem:[#allocation8 + $0x110] sm:$0xff]
    %v836 = vld [vmem:[#allocation8 + $0x118] sm:$0xff]
    %v837 = vld [vmem:[#allocation8 + $0x120] sm:$0xff]
    %v838 = vld [vmem:[#allocation8 + $0x128] sm:$0xff]
    %v839 = vld [vmem:[#allocation8 + $0x130] sm:$0xff]
    %v840 = vld [vmem:[#allocation8 + $0x138] sm:$0xff]
    %v841 = vld [vmem:[#allocation8 + $0x140] sm:$0xff]
    %v842 = vld [vmem:[#allocation8 + $0x148] sm:$0xff]
    %v843 = vld [vmem:[#allocation8 + $0x150] sm:$0xff]
    %v844 = vld [vmem:[#allocation8 + $0x158] sm:$0xff]
    %v845 = vld [vmem:[#allocation8 + $0x160] sm:$0xff]
    %v846 = vld [vmem:[#allocation8 + $0x168] sm:$0xff]
    %v847 = vld [vmem:[#allocation8 + $0x170] sm:$0xff]
    %v848 = vld [vmem:[#allocation8 + $0x178] sm:$0xff]
    %v849 = vld [vmem:[#allocation8 + $0x180] sm:$0xff]
    %v850 = vld [vmem:[#allocation8 + $0x188] sm:$0xff]
    %v851 = vld [vmem:[#allocation8 + $0x190] sm:$0xff]
    %v852 = vld [vmem:[#allocation8 + $0x198] sm:$0xff]
    %v853 = vld [vmem:[#allocation8 + $0x1a0] sm:$0xff]
    %v854 = vld [vmem:[#allocation8 + $0x1a8] sm:$0xff]
    %v855 = vld [vmem:[#allocation8 + $0x1b0] sm:$0xff]
    %v856 = vld [vmem:[#allocation8 + $0x1b8] sm:$0xff]
    %v857 = vld [vmem:[#allocation8 + $0x1c0] sm:$0xff]
    %v858 = vld [vmem:[#allocation8 + $0x1c8] sm:$0xff]
    %v859 = vld [vmem:[#allocation8 + $0x1d0] sm:$0xff]
    %v860 = vld [vmem:[#allocation8 + $0x1d8] sm:$0xff]
    %v861 = vld [vmem:[#allocation8 + $0x1e0] sm:$0xff]
    %v862 = vld [vmem:[#allocation8 + $0x1e8] sm:$0xff]
    %v863 = vld [vmem:[#allocation8 + $0x1f0] sm:$0xff]
    %v864 = vld [vmem:[#allocation8 + $0x1f8] sm:$0xff]
    %v865 = vld [vmem:[#allocation8 + $0x200] sm:$0xff]
    %v866 = vld [vmem:[#allocation8 + $0x208] sm:$0xff]
    %v867 = vld [vmem:[#allocation8 + $0x210] sm:$0xff]
    %v868 = vld [vmem:[#allocation8 + $0x218] sm:$0xff]
    %v869 = vld [vmem:[#allocation8 + $0x220] sm:$0xff]
    %v870 = vld [vmem:[#allocation8 + $0x228] sm:$0xff]
    %v871 = vld [vmem:[#allocation8 + $0x230] sm:$0xff]
    %v872 = vld [vmem:[#allocation8 + $0x238] sm:$0xff]
    %v873 = vld [vmem:[#allocation8 + $0x240] sm:$0xff]
    %v874 = vld [vmem:[#allocation8 + $0x248] sm:$0xff]
    %v875 = vld [vmem:[#allocation8 + $0x250] sm:$0xff]
    %v876 = vld [vmem:[#allocation8 + $0x258] sm:$0xff]
    %v877 = vld [vmem:[#allocation8 + $0x260] sm:$0xff]
    %v878 = vld [vmem:[#allocation8 + $0x268] sm:$0xff]
    %v879 = vld [vmem:[#allocation8 + $0x270] sm:$0xff]
    %v880 = vld [vmem:[#allocation8 + $0x278] sm:$0xff]
    %v881 = vld [vmem:[#allocation8 + $0x280] sm:$0xff]
    %v882 = vld [vmem:[#allocation8 + $0x288] sm:$0xff]
    %v883 = vld [vmem:[#allocation8 + $0x290] sm:$0xff]
    %v884 = vld [vmem:[#allocation8 + $0x298] sm:$0xff]
    %v885 = vld [vmem:[#allocation8 + $0x2a0] sm:$0xff]
    %v886 = vld [vmem:[#allocation8 + $0x2a8] sm:$0xff]
    %v887 = vld [vmem:[#allocation8 + $0x2b0] sm:$0xff]
    %v888 = vld [vmem:[#allocation8 + $0x2b8] sm:$0xff]
    %v889 = vld [vmem:[#allocation8 + $0x2c0] sm:$0xff]
    %v890 = vld [vmem:[#allocation8 + $0x2c8] sm:$0xff]
    %v891 = vld [vmem:[#allocation8 + $0x2d0] sm:$0xff]
    %v892 = vld [vmem:[#allocation8 + $0x2d8] sm:$0xff]
    %v893 = vld [vmem:[#allocation8 + $0x2e0] sm:$0xff]
    %v894 = vld [vmem:[#allocation8 + $0x2e8] sm:$0xff]
    %v895 = vld [vmem:[#allocation8 + $0x2f0] sm:$0xff]
    %v896 = vld [vmem:[#allocation8 + $0x2f8] sm:$0xff]
    %v897 = vld [vmem:[#allocation8 + $0x300] sm:$0xff]
    %v898 = vld [vmem:[#allocation8 + $0x308] sm:$0xff]
    %v899 = vld [vmem:[#allocation8 + $0x310] sm:$0xff]
    %v900 = vld [vmem:[#allocation8 + $0x318] sm:$0xff]
    %v901 = vld [vmem:[#allocation8 + $0x320] sm:$0xff]
    %v902 = vld [vmem:[#allocation8 + $0x328] sm:$0xff]
    %v903 = vld [vmem:[#allocation8 + $0x330] sm:$0xff]
    %v904 = vld [vmem:[#allocation8 + $0x338] sm:$0xff]
    %v905 = vld [vmem:[#allocation8 + $0x340] sm:$0xff]
    %v906 = vld [vmem:[#allocation8 + $0x348] sm:$0xff]
    %v907 = vld [vmem:[#allocation8 + $0x350] sm:$0xff]
    %v908 = vld [vmem:[#allocation8 + $0x358] sm:$0xff]
    %v909 = vld [vmem:[#allocation8 + $0x360] sm:$0xff]
    %v910 = vld [vmem:[#allocation8 + $0x368] sm:$0xff]
    %v911 = vld [vmem:[#allocation8 + $0x370] sm:$0xff]
    %v912 = vld [vmem:[#allocation8 + $0x378] sm:$0xff]
    %v913 = vld [vmem:[#allocation8 + $0x380] sm:$0xff]
    %v914 = vld [vmem:[#allocation8 + $0x388] sm:$0xff]
    %v915 = vld [vmem:[#allocation8 + $0x390] sm:$0xff]
    %v916 = vld [vmem:[#allocation8 + $0x398] sm:$0xff]
    %v917 = vld [vmem:[#allocation8 + $0x3a0] sm:$0xff]
    %v918 = vld [vmem:[#allocation8 + $0x3a8] sm:$0xff]
    %v919 = vld [vmem:[#allocation8 + $0x3b0] sm:$0xff]
    %v920 = vld [vmem:[#allocation8 + $0x3b8] sm:$0xff]
    %v921 = vld [vmem:[#allocation8 + $0x3c0] sm:$0xff]
    %v922 = vld [vmem:[#allocation8 + $0x3c8] sm:$0xff]
    %v923 = vld [vmem:[#allocation8 + $0x3d0] sm:$0xff]
    %v924 = vld [vmem:[#allocation8 + $0x3d8] sm:$0xff]
    %v925 = vld [vmem:[#allocation8 + $0x3e0] sm:$0xff]
    %v926 = vld [vmem:[#allocation8 + $0x3e8] sm:$0xff]
    %v927 = vld [vmem:[#allocation8 + $0x3f0] sm:$0xff]
    %v928 = vld [vmem:[#allocation8 + $0x3f8] sm:$0xff]
    %v929 = vld [vmem:[#allocation8 + $0x400] sm:$0xff]
    %v930 = vld [vmem:[#allocation8 + $0x408] sm:$0xff]
    %v931 = vld [vmem:[#allocation8 + $0x410] sm:$0xff]
    %v932 = vld [vmem:[#allocation8 + $0x418] sm:$0xff]
    %v933 = vld [vmem:[#allocation8 + $0x420] sm:$0xff]
    %v934 = vld [vmem:[#allocation8 + $0x428] sm:$0xff]
    %v935 = vld [vmem:[#allocation8 + $0x430] sm:$0xff]
    %v936 = vld [vmem:[#allocation8 + $0x438] sm:$0xff]
    %v937 = vld [vmem:[#allocation8 + $0x440] sm:$0xff]
    %v938 = vld [vmem:[#allocation8 + $0x448] sm:$0xff]
    %v939 = vld [vmem:[#allocation8 + $0x450] sm:$0xff]
    %v940 = vld [vmem:[#allocation8 + $0x458] sm:$0xff]
    %v941 = vld [vmem:[#allocation8 + $0x460] sm:$0xff]
    %v942 = vld [vmem:[#allocation8 + $0x468] sm:$0xff]
    %v943 = vld [vmem:[#allocation8 + $0x470] sm:$0xff]
    %v944 = vld [vmem:[#allocation8 + $0x478] sm:$0xff]
    %v945 = vld [vmem:[#allocation8 + $0x480] sm:$0xff]
    %v946 = vld [vmem:[#allocation8 + $0x488] sm:$0xff]
    %v947 = vld [vmem:[#allocation8 + $0x490] sm:$0xff]
    %v948 = vld [vmem:[#allocation8 + $0x498] sm:$0xff]
    %v949 = vld [vmem:[#allocation8 + $0x4a0] sm:$0xff]
    %v950 = vld [vmem:[#allocation8 + $0x4a8] sm:$0xff]
    %v951 = vld [vmem:[#allocation8 + $0x4b0] sm:$0xff]
    %v952 = vld [vmem:[#allocation8 + $0x4b8] sm:$0xff]
    %v953 = vld [vmem:[#allocation8 + $0x4c0] sm:$0xff]
    %v954 = vld [vmem:[#allocation8 + $0x4c8] sm:$0xff]
    %v955 = vld [vmem:[#allocation8 + $0x4d0] sm:$0xff]
    %v956 = vld [vmem:[#allocation8 + $0x4d8] sm:$0xff]
    %v957 = vld [vmem:[#allocation8 + $0x4e0] sm:$0xff]
    %v958 = vld [vmem:[#allocation8 + $0x4e8] sm:$0xff]
    %v959 = vld [vmem:[#allocation8 + $0x4f0] sm:$0xff]
    %v960 = vld [vmem:[#allocation8 + $0x4f8] sm:$0xff]
    %v961 = vld [vmem:[#allocation8 + $0x500] sm:$0xff]
    %v962 = vld [vmem:[#allocation8 + $0x508] sm:$0xff]
    %v963 = vld [vmem:[#allocation8 + $0x510] sm:$0xff]
    %v964 = vld [vmem:[#allocation8 + $0x518] sm:$0xff]
    %v965 = vld [vmem:[#allocation8 + $0x520] sm:$0xff]
    %v966 = vld [vmem:[#allocation8 + $0x528] sm:$0xff]
    %v967 = vld [vmem:[#allocation8 + $0x530] sm:$0xff]
    %v968 = vld [vmem:[#allocation8 + $0x538] sm:$0xff]
    %v969 = vld [vmem:[#allocation8 + $0x540] sm:$0xff]
    %v970 = vld [vmem:[#allocation8 + $0x548] sm:$0xff]
    %v971 = vld [vmem:[#allocation8 + $0x550] sm:$0xff]
    %v972 = vld [vmem:[#allocation8 + $0x558] sm:$0xff]
    %v973 = vld [vmem:[#allocation8 + $0x560] sm:$0xff]
    %v974 = vld [vmem:[#allocation8 + $0x568] sm:$0xff]
    %v975 = vld [vmem:[#allocation8 + $0x570] sm:$0xff]
    %v976 = vld [vmem:[#allocation8 + $0x578] sm:$0xff]
    %v977 = vld [vmem:[#allocation8 + $0x580] sm:$0xff]
    %v978 = vld [vmem:[#allocation8 + $0x588] sm:$0xff]
    %v979 = vld [vmem:[#allocation8 + $0x590] sm:$0xff]
    %v980 = vld [vmem:[#allocation8 + $0x598] sm:$0xff]
    %v981 = vld [vmem:[#allocation8 + $0x5a0] sm:$0xff]
    %v982 = vld [vmem:[#allocation8 + $0x5a8] sm:$0xff]
    %v983 = vld [vmem:[#allocation8 + $0x5b0] sm:$0xff]
    %v984 = vld [vmem:[#allocation8 + $0x5b8] sm:$0xff]
    %v985 = vld [vmem:[#allocation8 + $0x5c0] sm:$0xff]
    %v986 = vld [vmem:[#allocation8 + $0x5c8] sm:$0xff]
    %v987 = vld [vmem:[#allocation8 + $0x5d0] sm:$0xff]
    %v988 = vld [vmem:[#allocation8 + $0x5d8] sm:$0xff]
    %v989 = vld [vmem:[#allocation8 + $0x5e0] sm:$0xff]
    %v990 = vld [vmem:[#allocation8 + $0x5e8] sm:$0xff]
    %v991 = vld [vmem:[#allocation8 + $0x5f0] sm:$0xff]
    %v992 = vld [vmem:[#allocation8 + $0x5f8] sm:$0xff]
    %v993 = vld [vmem:[#allocation8 + $0x600] sm:$0xff]
    %v994 = vld [vmem:[#allocation8 + $0x608] sm:$0xff]
    %v995 = vld [vmem:[#allocation8 + $0x610] sm:$0xff]
    %v996 = vld [vmem:[#allocation8 + $0x618] sm:$0xff]
    %v997 = vld [vmem:[#allocation8 + $0x620] sm:$0xff]
    %v998 = vld [vmem:[#allocation8 + $0x628] sm:$0xff]
    %v999 = vld [vmem:[#allocation8 + $0x630] sm:$0xff]
    %v1000 = vld [vmem:[#allocation8 + $0x638] sm:$0xff]
    %v1001 = vld [vmem:[#allocation8 + $0x640] sm:$0xff]
    %v1002 = vld [vmem:[#allocation8 + $0x648] sm:$0xff]
    %v1003 = vld [vmem:[#allocation8 + $0x650] sm:$0xff]
    %v1004 = vld [vmem:[#allocation8 + $0x658] sm:$0xff]
    %v1005 = vld [vmem:[#allocation8 + $0x660] sm:$0xff]
    %v1006 = vld [vmem:[#allocation8 + $0x668] sm:$0xff]
    %v1007 = vld [vmem:[#allocation8 + $0x670] sm:$0xff]
    %v1008 = vld [vmem:[#allocation8 + $0x678] sm:$0xff]
    %v1009 = vld [vmem:[#allocation8 + $0x680] sm:$0xff]
    %v1010 = vld [vmem:[#allocation8 + $0x688] sm:$0xff]
    %v1011 = vld [vmem:[#allocation8 + $0x690] sm:$0xff]
    %v1012 = vld [vmem:[#allocation8 + $0x698] sm:$0xff]
    %v1013 = vld [vmem:[#allocation8 + $0x6a0] sm:$0xff]
    %v1014 = vld [vmem:[#allocation8 + $0x6a8] sm:$0xff]
    %v1015 = vld [vmem:[#allocation8 + $0x6b0] sm:$0xff]
    %v1016 = vld [vmem:[#allocation8 + $0x6b8] sm:$0xff]
    %v1017 = vld [vmem:[#allocation8 + $0x6c0] sm:$0xff]
    %v1018 = vld [vmem:[#allocation8 + $0x6c8] sm:$0xff]
    %v1019 = vld [vmem:[#allocation8 + $0x6d0] sm:$0xff]
    %v1020 = vld [vmem:[#allocation8 + $0x6d8] sm:$0xff]
    %v1021 = vld [vmem:[#allocation8 + $0x6e0] sm:$0xff]
    %v1022 = vld [vmem:[#allocation8 + $0x6e8] sm:$0xff]
    %v1023 = vld [vmem:[#allocation8 + $0x6f0] sm:$0xff]
    %v1024 = vld [vmem:[#allocation8 + $0x6f8] sm:$0xff]
    %v1025 = vld [vmem:[#allocation8 + $0x700] sm:$0xff]
    %v1026 = vld [vmem:[#allocation8 + $0x708] sm:$0xff]
    %v1027 = vld [vmem:[#allocation8 + $0x710] sm:$0xff]
    %v1028 = vld [vmem:[#allocation8 + $0x718] sm:$0xff]
    %v1029 = vld [vmem:[#allocation8 + $0x720] sm:$0xff]
    %v1030 = vld [vmem:[#allocation8 + $0x728] sm:$0xff]
    %v1031 = vld [vmem:[#allocation8 + $0x730] sm:$0xff]
    %v1032 = vld [vmem:[#allocation8 + $0x738] sm:$0xff]
    %v1033 = vld [vmem:[#allocation8 + $0x740] sm:$0xff]
    %v1034 = vld [vmem:[#allocation8 + $0x748] sm:$0xff]
    %v1035 = vld [vmem:[#allocation8 + $0x750] sm:$0xff]
    %v1036 = vld [vmem:[#allocation8 + $0x758] sm:$0xff]
    %v1037 = vld [vmem:[#allocation8 + $0x760] sm:$0xff]
    %v1038 = vld [vmem:[#allocation8 + $0x768] sm:$0xff]
    %v1039 = vld [vmem:[#allocation8 + $0x770] sm:$0xff]
    %v1040 = vld [vmem:[#allocation8 + $0x778] sm:$0xff]
    %v1041 = vld [vmem:[#allocation8 + $0x780] sm:$0xff]
    %v1042 = vld [vmem:[#allocation8 + $0x788] sm:$0xff]
    %v1043 = vld [vmem:[#allocation8 + $0x790] sm:$0xff]
    %v1044 = vld [vmem:[#allocation8 + $0x798] sm:$0xff]
    %v1045 = vld [vmem:[#allocation8 + $0x7a0] sm:$0xff]
    %v1046 = vld [vmem:[#allocation8 + $0x7a8] sm:$0xff]
    %v1047 = vld [vmem:[#allocation8 + $0x7b0] sm:$0xff]
    %v1048 = vld [vmem:[#allocation8 + $0x7b8] sm:$0xff]
    %v1049 = vld [vmem:[#allocation8 + $0x7c0] sm:$0xff]
    %v1050 = vld [vmem:[#allocation8 + $0x7c8] sm:$0xff]
    %v1051 = vld [vmem:[#allocation8 + $0x7d0] sm:$0xff]
    %v1052 = vld [vmem:[#allocation8 + $0x7d8] sm:$0xff]
    %v1053 = vld [vmem:[#allocation8 + $0x7e0] sm:$0xff]
    %v1054 = vld [vmem:[#allocation8 + $0x7e8] sm:$0xff]
    %v1055 = vld [vmem:[#allocation8 + $0x7f0] sm:$0xff]
    %v1056 = vld [vmem:[#allocation8 + $0x7f8] sm:$0xff]
    %v1057 = vld [vmem:[#allocation8 + $0x800] sm:$0xff]
    %v1058 = vld [vmem:[#allocation8 + $0x808] sm:$0xff]
    %v1059 = vld [vmem:[#allocation8 + $0x810] sm:$0xff]
    %v1060 = vld [vmem:[#allocation8 + $0x818] sm:$0xff]
    %v1061 = vld [vmem:[#allocation8 + $0x820] sm:$0xff]
    %v1062 = vld [vmem:[#allocation8 + $0x828] sm:$0xff]
    %v1063 = vld [vmem:[#allocation8 + $0x830] sm:$0xff]
    %v1064 = vld [vmem:[#allocation8 + $0x838] sm:$0xff]
    %v1065 = vld [vmem:[#allocation8 + $0x840] sm:$0xff]
    %v1066 = vld [vmem:[#allocation8 + $0x848] sm:$0xff]
    %v1067 = vld [vmem:[#allocation8 + $0x850] sm:$0xff]
    %v1068 = vld [vmem:[#allocation8 + $0x858] sm:$0xff]
    %v1069 = vld [vmem:[#allocation8 + $0x860] sm:$0xff]
    %v1070 = vld [vmem:[#allocation8 + $0x868] sm:$0xff]
    %v1071 = vld [vmem:[#allocation8 + $0x870] sm:$0xff]
    %v1072 = vld [vmem:[#allocation8 + $0x878] sm:$0xff]
    %v1073 = vld [vmem:[#allocation8 + $0x880] sm:$0xff]
    %v1074 = vld [vmem:[#allocation8 + $0x888] sm:$0xff]
    %v1075 = vld [vmem:[#allocation8 + $0x890] sm:$0xff]
    %v1076 = vld [vmem:[#allocation8 + $0x898] sm:$0xff]
    %v1077 = vld [vmem:[#allocation8 + $0x8a0] sm:$0xff]
    %v1078 = vld [vmem:[#allocation8 + $0x8a8] sm:$0xff]
    %v1079 = vld [vmem:[#allocation8 + $0x8b0] sm:$0xff]
    %v1080 = vld [vmem:[#allocation8 + $0x8b8] sm:$0xff]
    %v1081 = vld [vmem:[#allocation8 + $0x8c0] sm:$0xff]
    %v1082 = vld [vmem:[#allocation8 + $0x8c8] sm:$0xff]
    %v1083 = vld [vmem:[#allocation8 + $0x8d0] sm:$0xff]
    %v1084 = vld [vmem:[#allocation8 + $0x8d8] sm:$0xff]
    %v1085 = vld [vmem:[#allocation8 + $0x8e0] sm:$0xff]
    %v1086 = vld [vmem:[#allocation8 + $0x8e8] sm:$0xff]
    %v1087 = vld [vmem:[#allocation8 + $0x8f0] sm:$0xff]
    %v1088 = vld [vmem:[#allocation8 + $0x8f8] sm:$0xff]
    %v1089 = vld [vmem:[#allocation8 + $0x900] sm:$0xff]
    %v1090 = vld [vmem:[#allocation8 + $0x908] sm:$0xff]
    %v1091 = vld [vmem:[#allocation8 + $0x910] sm:$0xff]
    %v1092 = vld [vmem:[#allocation8 + $0x918] sm:$0xff]
    %v1093 = vld [vmem:[#allocation8 + $0x920] sm:$0xff]
    %v1094 = vld [vmem:[#allocation8 + $0x928] sm:$0xff]
    %v1095 = vld [vmem:[#allocation8 + $0x930] sm:$0xff]
    %v1096 = vld [vmem:[#allocation8 + $0x938] sm:$0xff]
    %v1097 = vld [vmem:[#allocation8 + $0x940] sm:$0xff]
    %v1098 = vld [vmem:[#allocation8 + $0x948] sm:$0xff]
    %v1099 = vld [vmem:[#allocation8 + $0x950] sm:$0xff]
    %v1100 = vld [vmem:[#allocation8 + $0x958] sm:$0xff]
    %v1101 = vld [vmem:[#allocation8 + $0x960] sm:$0xff]
    %v1102 = vld [vmem:[#allocation8 + $0x968] sm:$0xff]
    %v1103 = vld [vmem:[#allocation8 + $0x970] sm:$0xff]
    %v1104 = vld [vmem:[#allocation8 + $0x978] sm:$0xff]
    %v1105 = vld [vmem:[#allocation8 + $0x980] sm:$0xff]
    %v1106 = vld [vmem:[#allocation8 + $0x988] sm:$0xff]
    %v1107 = vld [vmem:[#allocation8 + $0x990] sm:$0xff]
    %v1108 = vld [vmem:[#allocation8 + $0x998] sm:$0xff]
    %v1109 = vld [vmem:[#allocation8 + $0x9a0] sm:$0xff]
    %v1110 = vld [vmem:[#allocation8 + $0x9a8] sm:$0xff]
    %v1111 = vld [vmem:[#allocation8 + $0x9b0] sm:$0xff]
    %v1112 = vld [vmem:[#allocation8 + $0x9b8] sm:$0xff]
    %v1113 = vld [vmem:[#allocation8 + $0x9c0] sm:$0xff]
    %v1114 = vld [vmem:[#allocation8 + $0x9c8] sm:$0xff]
    %v1115 = vld [vmem:[#allocation8 + $0x9d0] sm:$0xff]
    %v1116 = vld [vmem:[#allocation8 + $0x9d8] sm:$0xff]
    %v1117 = vld [vmem:[#allocation8 + $0x9e0] sm:$0xff]
    %v1118 = vld [vmem:[#allocation8 + $0x9e8] sm:$0xff]
    %v1119 = vld [vmem:[#allocation8 + $0x9f0] sm:$0xff]
    %v1120 = vld [vmem:[#allocation8 + $0x9f8] sm:$0xff]
    %v1121 = vld [vmem:[#allocation8 + $0xa00] sm:$0xff]
    %v1122 = vld [vmem:[#allocation8 + $0xa08] sm:$0xff]
    %v1123 = vld [vmem:[#allocation8 + $0xa10] sm:$0xff]
    %v1124 = vld [vmem:[#allocation8 + $0xa18] sm:$0xff]
    %v1125 = vld [vmem:[#allocation8 + $0xa20] sm:$0xff]
    %v1126 = vld [vmem:[#allocation8 + $0xa28] sm:$0xff]
    %v1127 = vld [vmem:[#allocation8 + $0xa30] sm:$0xff]
    %v1128 = vld [vmem:[#allocation8 + $0xa38] sm:$0xff]
    %v1129 = vld [vmem:[#allocation8 + $0xa40] sm:$0xff]
    %v1130 = vld [vmem:[#allocation8 + $0xa48] sm:$0xff]
    %v1131 = vld [vmem:[#allocation8 + $0xa50] sm:$0xff]
    %v1132 = vld [vmem:[#allocation8 + $0xa58] sm:$0xff]
    %v1133 = vld [vmem:[#allocation8 + $0xa60] sm:$0xff]
    %v1134 = vld [vmem:[#allocation8 + $0xa68] sm:$0xff]
    %v1135 = vld [vmem:[#allocation8 + $0xa70] sm:$0xff]
    %v1136 = vld [vmem:[#allocation8 + $0xa78] sm:$0xff]
    %v1137 = vld [vmem:[#allocation8 + $0xa80] sm:$0xff]
    %v1138 = vld [vmem:[#allocation8 + $0xa88] sm:$0xff]
    %v1139 = vld [vmem:[#allocation8 + $0xa90] sm:$0xff]
    %v1140 = vld [vmem:[#allocation8 + $0xa98] sm:$0xff]
    %v1141 = vld [vmem:[#allocation8 + $0xaa0] sm:$0xff]
    %v1142 = vld [vmem:[#allocation8 + $0xaa8] sm:$0xff]
    %v1143 = vld [vmem:[#allocation8 + $0xab0] sm:$0xff]
    %v1144 = vld [vmem:[#allocation8 + $0xab8] sm:$0xff]
    %v1145 = vld [vmem:[#allocation8 + $0xac0] sm:$0xff]
    %v1146 = vld [vmem:[#allocation8 + $0xac8] sm:$0xff]
    %v1147 = vld [vmem:[#allocation8 + $0xad0] sm:$0xff]
    %v1148 = vld [vmem:[#allocation8 + $0xad8] sm:$0xff]
    %v1149 = vld [vmem:[#allocation8 + $0xae0] sm:$0xff]
    %v1150 = vld [vmem:[#allocation8 + $0xae8] sm:$0xff]
    %v1151 = vld [vmem:[#allocation8 + $0xaf0] sm:$0xff]
    %v1152 = vld [vmem:[#allocation8 + $0xaf8] sm:$0xff]
    %v1153 = vld [vmem:[#allocation8 + $0xb00] sm:$0xff]
    %v1154 = vld [vmem:[#allocation8 + $0xb08] sm:$0xff]
    %v1155 = vld [vmem:[#allocation8 + $0xb10] sm:$0xff]
    %v1156 = vld [vmem:[#allocation8 + $0xb18] sm:$0xff]
    %v1157 = vld [vmem:[#allocation8 + $0xb20] sm:$0xff]
    %v1158 = vld [vmem:[#allocation8 + $0xb28] sm:$0xff]
    %v1159 = vld [vmem:[#allocation8 + $0xb30] sm:$0xff]
    %v1160 = vld [vmem:[#allocation8 + $0xb38] sm:$0xff]
    %v1161 = vld [vmem:[#allocation8 + $0xb40] sm:$0xff]
    %v1162 = vld [vmem:[#allocation8 + $0xb48] sm:$0xff]
    %v1163 = vld [vmem:[#allocation8 + $0xb50] sm:$0xff]
    %v1164 = vld [vmem:[#allocation8 + $0xb58] sm:$0xff]
    %v1165 = vld [vmem:[#allocation8 + $0xb60] sm:$0xff]
    %v1166 = vld [vmem:[#allocation8 + $0xb68] sm:$0xff]
    %v1167 = vld [vmem:[#allocation8 + $0xb70] sm:$0xff]
    %v1168 = vld [vmem:[#allocation8 + $0xb78] sm:$0xff]
    %v1169 = vld [vmem:[#allocation8 + $0xb80] sm:$0xff]
    %v1170 = vld [vmem:[#allocation8 + $0xb88] sm:$0xff]
    %v1171 = vld [vmem:[#allocation8 + $0xb90] sm:$0xff]
    %v1172 = vld [vmem:[#allocation8 + $0xb98] sm:$0xff]
    %v1173 = vld [vmem:[#allocation8 + $0xba0] sm:$0xff]
    %v1174 = vld [vmem:[#allocation8 + $0xba8] sm:$0xff]
    %v1175 = vld [vmem:[#allocation8 + $0xbb0] sm:$0xff]
    %v1176 = vld [vmem:[#allocation8 + $0xbb8] sm:$0xff]
    %v1177 = vld [vmem:[#allocation8 + $0xbc0] sm:$0xff]
    %v1178 = vld [vmem:[#allocation8 + $0xbc8] sm:$0xff]
    %v1179 = vld [vmem:[#allocation8 + $0xbd0] sm:$0xff]
    %v1180 = vld [vmem:[#allocation8 + $0xbd8] sm:$0xff]
    %v1181 = vld [vmem:[#allocation8 + $0xbe0] sm:$0xff]
    %v1182 = vld [vmem:[#allocation8 + $0xbe8] sm:$0xff]
    %v1183 = vld [vmem:[#allocation8 + $0xbf0] sm:$0xff]
    %v1184 = vld [vmem:[#allocation8 + $0xbf8] sm:$0xff]
    %v1185 = vld [vmem:[#allocation8 + $0xc00] sm:$0xff]
    %v1186 = vld [vmem:[#allocation8 + $0xc08] sm:$0xff]
    %v1187 = vld [vmem:[#allocation8 + $0xc10] sm:$0xff]
    %v1188 = vld [vmem:[#allocation8 + $0xc18] sm:$0xff]
    %v1189 = vld [vmem:[#allocation8 + $0xc20] sm:$0xff]
    %v1190 = vld [vmem:[#allocation8 + $0xc28] sm:$0xff]
    %v1191 = vld [vmem:[#allocation8 + $0xc30] sm:$0xff]
    %v1192 = vld [vmem:[#allocation8 + $0xc38] sm:$0xff]
    %v1193 = vld [vmem:[#allocation8 + $0xc40] sm:$0xff]
    %v1194 = vld [vmem:[#allocation8 + $0xc48] sm:$0xff]
    %v1195 = vld [vmem:[#allocation8 + $0xc50] sm:$0xff]
    %v1196 = vld [vmem:[#allocation8 + $0xc58] sm:$0xff]
    %v1197 = vld [vmem:[#allocation8 + $0xc60] sm:$0xff]
    %v1198 = vld [vmem:[#allocation8 + $0xc68] sm:$0xff]
    %v1199 = vld [vmem:[#allocation8 + $0xc70] sm:$0xff]
    %v1200 = vld [vmem:[#allocation8 + $0xc78] sm:$0xff]
    %v1201 = vld [vmem:[#allocation8 + $0xc80] sm:$0xff]
    %v1202 = vld [vmem:[#allocation8 + $0xc88] sm:$0xff]
    %v1203 = vld [vmem:[#allocation8 + $0xc90] sm:$0xff]
    %v1204 = vld [vmem:[#allocation8 + $0xc98] sm:$0xff]
    %v1205 = vld [vmem:[#allocation8 + $0xca0] sm:$0xff]
    %v1206 = vld [vmem:[#allocation8 + $0xca8] sm:$0xff]
    %v1207 = vld [vmem:[#allocation8 + $0xcb0] sm:$0xff]
    %v1208 = vld [vmem:[#allocation8 + $0xcb8] sm:$0xff]
    %v1209 = vld [vmem:[#allocation8 + $0xcc0] sm:$0xff]
    %v1210 = vld [vmem:[#allocation8 + $0xcc8] sm:$0xff]
    %v1211 = vld [vmem:[#allocation8 + $0xcd0] sm:$0xff]
    %v1212 = vld [vmem:[#allocation8 + $0xcd8] sm:$0xff]
    %v1213 = vld [vmem:[#allocation8 + $0xce0] sm:$0xff]
    %v1214 = vld [vmem:[#allocation8 + $0xce8] sm:$0xff]
    %v1215 = vld [vmem:[#allocation8 + $0xcf0] sm:$0xff]
    %v1216 = vld [vmem:[#allocation8 + $0xcf8] sm:$0xff]
    %v1217 = vld [vmem:[#allocation8 + $0xd00] sm:$0xff]
    %v1218 = vld [vmem:[#allocation8 + $0xd08] sm:$0xff]
    %v1219 = vld [vmem:[#allocation8 + $0xd10] sm:$0xff]
    %v1220 = vld [vmem:[#allocation8 + $0xd18] sm:$0xff]
    %v1221 = vld [vmem:[#allocation8 + $0xd20] sm:$0xff]
    %v1222 = vld [vmem:[#allocation8 + $0xd28] sm:$0xff]
    %v1223 = vld [vmem:[#allocation8 + $0xd30] sm:$0xff]
    %v1224 = vld [vmem:[#allocation8 + $0xd38] sm:$0xff]
    %v1225 = vld [vmem:[#allocation8 + $0xd40] sm:$0xff]
    %v1226 = vld [vmem:[#allocation8 + $0xd48] sm:$0xff]
    %v1227 = vld [vmem:[#allocation8 + $0xd50] sm:$0xff]
    %v1228 = vld [vmem:[#allocation8 + $0xd58] sm:$0xff]
    %v1229 = vld [vmem:[#allocation8 + $0xd60] sm:$0xff]
    %v1230 = vld [vmem:[#allocation8 + $0xd68] sm:$0xff]
    %v1231 = vld [vmem:[#allocation8 + $0xd70] sm:$0xff]
    %v1232 = vld [vmem:[#allocation8 + $0xd78] sm:$0xff]
    %v1233 = vld [vmem:[#allocation8 + $0xd80] sm:$0xff]
    %v1234 = vld [vmem:[#allocation8 + $0xd88] sm:$0xff]
    %v1235 = vld [vmem:[#allocation8 + $0xd90] sm:$0xff]
    %v1236 = vld [vmem:[#allocation8 + $0xd98] sm:$0xff]
    %v1237 = vld [vmem:[#allocation8 + $0xda0] sm:$0xff]
    %v1238 = vld [vmem:[#allocation8 + $0xda8] sm:$0xff]
    %v1239 = vld [vmem:[#allocation8 + $0xdb0] sm:$0xff]
    %v1240 = vld [vmem:[#allocation8 + $0xdb8] sm:$0xff]
    %v1241 = vld [vmem:[#allocation8 + $0xdc0] sm:$0xff]
    %v1242 = vld [vmem:[#allocation8 + $0xdc8] sm:$0xff]
    %v1243 = vld [vmem:[#allocation8 + $0xdd0] sm:$0xff]
    %v1244 = vld [vmem:[#allocation8 + $0xdd8] sm:$0xff]
    %v1245 = vld [vmem:[#allocation8 + $0xde0] sm:$0xff]
    %v1246 = vld [vmem:[#allocation8 + $0xde8] sm:$0xff]
    %v1247 = vld [vmem:[#allocation8 + $0xdf0] sm:$0xff]
    %v1248 = vld [vmem:[#allocation8 + $0xdf8] sm:$0xff]
    %v1249 = vld [vmem:[#allocation8 + $0xe00] sm:$0xff]
    %v1250 = vld [vmem:[#allocation8 + $0xe08] sm:$0xff]
    %v1251 = vld [vmem:[#allocation8 + $0xe10] sm:$0xff]
    %v1252 = vld [vmem:[#allocation8 + $0xe18] sm:$0xff]
    %v1253 = vld [vmem:[#allocation8 + $0xe20] sm:$0xff]
    %v1254 = vld [vmem:[#allocation8 + $0xe28] sm:$0xff]
    %v1255 = vld [vmem:[#allocation8 + $0xe30] sm:$0xff]
    %v1256 = vld [vmem:[#allocation8 + $0xe38] sm:$0xff]
    %v1257 = vld [vmem:[#allocation8 + $0xe40] sm:$0xff]
    %v1258 = vld [vmem:[#allocation8 + $0xe48] sm:$0xff]
    %v1259 = vld [vmem:[#allocation8 + $0xe50] sm:$0xff]
    %v1260 = vld [vmem:[#allocation8 + $0xe58] sm:$0xff]
    %v1261 = vld [vmem:[#allocation8 + $0xe60] sm:$0xff]
    %v1262 = vld [vmem:[#allocation8 + $0xe68] sm:$0xff]
    %v1263 = vld [vmem:[#allocation8 + $0xe70] sm:$0xff]
    %v1264 = vld [vmem:[#allocation8 + $0xe78] sm:$0xff]
    %v1265 = vld [vmem:[#allocation8 + $0xe80] sm:$0xff]
    %v1266 = vld [vmem:[#allocation8 + $0xe88] sm:$0xff]
    %v1267 = vld [vmem:[#allocation8 + $0xe90] sm:$0xff]
    %v1268 = vld [vmem:[#allocation8 + $0xe98] sm:$0xff]
    %v1269 = vld [vmem:[#allocation8 + $0xea0] sm:$0xff]
    %v1270 = vld [vmem:[#allocation8 + $0xea8] sm:$0xff]
    %v1271 = vld [vmem:[#allocation8 + $0xeb0] sm:$0xff]
    %v1272 = vld [vmem:[#allocation8 + $0xeb8] sm:$0xff]
    %v1273 = vld [vmem:[#allocation8 + $0xec0] sm:$0xff]
    %v1274 = vld [vmem:[#allocation8 + $0xec8] sm:$0xff]
    %v1275 = vld [vmem:[#allocation8 + $0xed0] sm:$0xff]
    %v1276 = vld [vmem:[#allocation8 + $0xed8] sm:$0xff]
    %v1277 = vld [vmem:[#allocation8 + $0xee0] sm:$0xff]
    %v1278 = vld [vmem:[#allocation8 + $0xee8] sm:$0xff]
    %v1279 = vld [vmem:[#allocation8 + $0xef0] sm:$0xff]
    %v1280 = vld [vmem:[#allocation8 + $0xef8] sm:$0xff]
    %v1281 = vld [vmem:[#allocation8 + $0xf00] sm:$0xff]
    %v1282 = vld [vmem:[#allocation8 + $0xf08] sm:$0xff]
    %v1283 = vld [vmem:[#allocation8 + $0xf10] sm:$0xff]
    %v1284 = vld [vmem:[#allocation8 + $0xf18] sm:$0xff]
    %v1285 = vld [vmem:[#allocation8 + $0xf20] sm:$0xff]
    %v1286 = vld [vmem:[#allocation8 + $0xf28] sm:$0xff]
    %v1287 = vld [vmem:[#allocation8 + $0xf30] sm:$0xff]
    %v1288 = vld [vmem:[#allocation8 + $0xf38] sm:$0xff]
    %v1289 = vld [vmem:[#allocation8 + $0xf40] sm:$0xff]
    %v1290 = vld [vmem:[#allocation8 + $0xf48] sm:$0xff]
    %v1291 = vld [vmem:[#allocation8 + $0xf50] sm:$0xff]
    %v1292 = vld [vmem:[#allocation8 + $0xf58] sm:$0xff]
    %v1293 = vld [vmem:[#allocation8 + $0xf60] sm:$0xff]
    %v1294 = vld [vmem:[#allocation8 + $0xf68] sm:$0xff]
    %v1295 = vld [vmem:[#allocation8 + $0xf70] sm:$0xff]
    %v1296 = vld [vmem:[#allocation8 + $0xf78] sm:$0xff]
    %v1297 = vld [vmem:[#allocation8 + $0xf80] sm:$0xff]
    %v1298 = vld [vmem:[#allocation8 + $0xf88] sm:$0xff]
    %v1299 = vld [vmem:[#allocation8 + $0xf90] sm:$0xff]
    %v1300 = vld [vmem:[#allocation8 + $0xf98] sm:$0xff]
    %v1301 = vld [vmem:[#allocation8 + $0xfa0] sm:$0xff]
    %v1302 = vld [vmem:[#allocation8 + $0xfa8] sm:$0xff]
    %v1303 = vld [vmem:[#allocation8 + $0xfb0] sm:$0xff]
    %v1304 = vld [vmem:[#allocation8 + $0xfb8] sm:$0xff]
    %v1305 = vld [vmem:[#allocation8 + $0xfc0] sm:$0xff]
    %v1306 = vld [vmem:[#allocation8 + $0xfc8] sm:$0xff]
    %v1307 = vld [vmem:[#allocation8 + $0xfd0] sm:$0xff]
    %v1308 = vld [vmem:[#allocation8 + $0xfd8] sm:$0xff]
    %v1309 = vld [vmem:[#allocation8 + $0xfe0] sm:$0xff]
    %v1310 = vld [vmem:[#allocation8 + $0xfe8] sm:$0xff]
    %v1311 = vld [vmem:[#allocation8 + $0xff0] sm:$0xff]
    %v1312 = vld [vmem:[#allocation8 + $0xff8] sm:$0xff]
    %v1313 = vld [vmem:[#allocation10] sm:$0xff]
    %v1315 = vlaneseq
    %v1316 = vshrl.u32 %v1315, 7
    %v1317 = vsub.s32 0, %v1316
    %v1318 = vrot.slane %v1313, %v1317
    %v1319 = vlaneseq
    %v1320 = vshrl.u32 %v1319, 7
    %v1321 = vsub.s32 1, %v1320
    %v1322 = vrot.slane %v1313, %v1321
    %v1323 = vlaneseq
    %v1324 = vshrl.u32 %v1323, 7
    %v1325 = vsub.s32 2, %v1324
    %v1326 = vrot.slane %v1313, %v1325
    %v1327 = vlaneseq
    %v1328 = vshrl.u32 %v1327, 7
    %v1329 = vsub.s32 3, %v1328
    %v1330 = vrot.slane %v1313, %v1329
    %v1331 = vlaneseq
    %v1332 = vshrl.u32 %v1331, 7
    %v1333 = vsub.s32 4, %v1332
    %v1334 = vrot.slane %v1313, %v1333
    %v1335 = vlaneseq
    %v1336 = vshrl.u32 %v1335, 7
    %v1337 = vsub.s32 5, %v1336
    %v1338 = vrot.slane %v1313, %v1337
    %v1339 = vlaneseq
    %v1340 = vshrl.u32 %v1339, 7
    %v1341 = vsub.s32 6, %v1340
    %v1342 = vrot.slane %v1313, %v1341
    %v1343 = vlaneseq
    %v1344 = vshrl.u32 %v1343, 7
    %v1345 = vsub.s32 7, %v1344
    %v1346 = vrot.slane %v1313, %v1345
    %v1867 = vunpack.c.l.b16 %v801
    %v1868 = vunpack.c.h.b16 %v801
    %v1869 = vunpack.c.l.b16 %v802
    %v1870 = vunpack.c.h.b16 %v802
    %v1871 = vunpack.c.l.b16 %v803
    %v1872 = vunpack.c.h.b16 %v803
    %v1873 = vunpack.c.l.b16 %v804
    %v1874 = vunpack.c.h.b16 %v804
    %v1875 = vunpack.c.l.b16 %v805
    %v1876 = vunpack.c.h.b16 %v805
    %v1877 = vunpack.c.l.b16 %v806
    %v1878 = vunpack.c.h.b16 %v806
    %v1879 = vunpack.c.l.b16 %v807
    %v1880 = vunpack.c.h.b16 %v807
    %v1881 = vunpack.c.l.b16 %v808
    %v1882 = vunpack.c.h.b16 %v808
    %v1883 = vunpack.c.l.b16 %v809
    %v1884 = vunpack.c.h.b16 %v809
    %v1885 = vunpack.c.l.b16 %v810
    %v1886 = vunpack.c.h.b16 %v810
    %v1887 = vunpack.c.l.b16 %v811
    %v1888 = vunpack.c.h.b16 %v811
    %v1889 = vunpack.c.l.b16 %v812
    %v1890 = vunpack.c.h.b16 %v812
    %v1891 = vunpack.c.l.b16 %v813
    %v1892 = vunpack.c.h.b16 %v813
    %v1893 = vunpack.c.l.b16 %v814
    %v1894 = vunpack.c.h.b16 %v814
    %v1895 = vunpack.c.l.b16 %v815
    %v1896 = vunpack.c.h.b16 %v815
    %v1897 = vunpack.c.l.b16 %v816
    %v1898 = vunpack.c.h.b16 %v816
    %v1899 = vunpack.c.l.b16 %v817
    %v1900 = vunpack.c.h.b16 %v817
    %v1901 = vunpack.c.l.b16 %v818
    %v1902 = vunpack.c.h.b16 %v818
    %v1903 = vunpack.c.l.b16 %v819
    %v1904 = vunpack.c.h.b16 %v819
    %v1905 = vunpack.c.l.b16 %v820
    %v1906 = vunpack.c.h.b16 %v820
    %v1907 = vunpack.c.l.b16 %v821
    %v1908 = vunpack.c.h.b16 %v821
    %v1909 = vunpack.c.l.b16 %v822
    %v1910 = vunpack.c.h.b16 %v822
    %v1911 = vunpack.c.l.b16 %v823
    %v1912 = vunpack.c.h.b16 %v823
    %v1913 = vunpack.c.l.b16 %v824
    %v1914 = vunpack.c.h.b16 %v824
    %v1915 = vunpack.c.l.b16 %v825
    %v1916 = vunpack.c.h.b16 %v825
    %v1917 = vunpack.c.l.b16 %v826
    %v1918 = vunpack.c.h.b16 %v826
    %v1919 = vunpack.c.l.b16 %v827
    %v1920 = vunpack.c.h.b16 %v827
    %v1921 = vunpack.c.l.b16 %v828
    %v1922 = vunpack.c.h.b16 %v828
    %v1923 = vunpack.c.l.b16 %v829
    %v1924 = vunpack.c.h.b16 %v829
    %v1925 = vunpack.c.l.b16 %v830
    %v1926 = vunpack.c.h.b16 %v830
    %v1927 = vunpack.c.l.b16 %v831
    %v1928 = vunpack.c.h.b16 %v831
    %v1929 = vunpack.c.l.b16 %v832
    %v1930 = vunpack.c.h.b16 %v832
    %v1931 = vunpack.c.l.b16 %v833
    %v1932 = vunpack.c.h.b16 %v833
    %v1933 = vunpack.c.l.b16 %v834
    %v1934 = vunpack.c.h.b16 %v834
    %v1935 = vunpack.c.l.b16 %v835
    %v1936 = vunpack.c.h.b16 %v835
    %v1937 = vunpack.c.l.b16 %v836
    %v1938 = vunpack.c.h.b16 %v836
    %v1939 = vunpack.c.l.b16 %v837
    %v1940 = vunpack.c.h.b16 %v837
    %v1941 = vunpack.c.l.b16 %v838
    %v1942 = vunpack.c.h.b16 %v838
    %v1943 = vunpack.c.l.b16 %v839
    %v1944 = vunpack.c.h.b16 %v839
    %v1945 = vunpack.c.l.b16 %v840
    %v1946 = vunpack.c.h.b16 %v840
    %v1947 = vunpack.c.l.b16 %v841
    %v1948 = vunpack.c.h.b16 %v841
    %v1949 = vunpack.c.l.b16 %v842
    %v1950 = vunpack.c.h.b16 %v842
    %v1951 = vunpack.c.l.b16 %v843
    %v1952 = vunpack.c.h.b16 %v843
    %v1953 = vunpack.c.l.b16 %v844
    %v1954 = vunpack.c.h.b16 %v844
    %v1955 = vunpack.c.l.b16 %v845
    %v1956 = vunpack.c.h.b16 %v845
    %v1957 = vunpack.c.l.b16 %v846
    %v1958 = vunpack.c.h.b16 %v846
    %v1959 = vunpack.c.l.b16 %v847
    %v1960 = vunpack.c.h.b16 %v847
    %v1961 = vunpack.c.l.b16 %v848
    %v1962 = vunpack.c.h.b16 %v848
    %v1963 = vunpack.c.l.b16 %v849
    %v1964 = vunpack.c.h.b16 %v849
    %v1965 = vunpack.c.l.b16 %v850
    %v1966 = vunpack.c.h.b16 %v850
    %v1967 = vunpack.c.l.b16 %v851
    %v1968 = vunpack.c.h.b16 %v851
    %v1969 = vunpack.c.l.b16 %v852
    %v1970 = vunpack.c.h.b16 %v852
    %v1971 = vunpack.c.l.b16 %v853
    %v1972 = vunpack.c.h.b16 %v853
    %v1973 = vunpack.c.l.b16 %v854
    %v1974 = vunpack.c.h.b16 %v854
    %v1975 = vunpack.c.l.b16 %v855
    %v1976 = vunpack.c.h.b16 %v855
    %v1977 = vunpack.c.l.b16 %v856
    %v1978 = vunpack.c.h.b16 %v856
    %v1979 = vunpack.c.l.b16 %v857
    %v1980 = vunpack.c.h.b16 %v857
    %v1981 = vunpack.c.l.b16 %v858
    %v1982 = vunpack.c.h.b16 %v858
    %v1983 = vunpack.c.l.b16 %v859
    %v1984 = vunpack.c.h.b16 %v859
    %v1985 = vunpack.c.l.b16 %v860
    %v1986 = vunpack.c.h.b16 %v860
    %v1987 = vunpack.c.l.b16 %v861
    %v1988 = vunpack.c.h.b16 %v861
    %v1989 = vunpack.c.l.b16 %v862
    %v1990 = vunpack.c.h.b16 %v862
    %v1991 = vunpack.c.l.b16 %v863
    %v1992 = vunpack.c.h.b16 %v863
    %v1993 = vunpack.c.l.b16 %v864
    %v1994 = vunpack.c.h.b16 %v864
    %v1995 = vunpack.c.l.b16 %v865
    %v1996 = vunpack.c.h.b16 %v865
    %v1997 = vunpack.c.l.b16 %v866
    %v1998 = vunpack.c.h.b16 %v866
    %v1999 = vunpack.c.l.b16 %v867
    %v2000 = vunpack.c.h.b16 %v867
    %v2001 = vunpack.c.l.b16 %v868
    %v2002 = vunpack.c.h.b16 %v868
    %v2003 = vunpack.c.l.b16 %v869
    %v2004 = vunpack.c.h.b16 %v869
    %v2005 = vunpack.c.l.b16 %v870
    %v2006 = vunpack.c.h.b16 %v870
    %v2007 = vunpack.c.l.b16 %v871
    %v2008 = vunpack.c.h.b16 %v871
    %v2009 = vunpack.c.l.b16 %v872
    %v2010 = vunpack.c.h.b16 %v872
    %v2011 = vunpack.c.l.b16 %v873
    %v2012 = vunpack.c.h.b16 %v873
    %v2013 = vunpack.c.l.b16 %v874
    %v2014 = vunpack.c.h.b16 %v874
    %v2015 = vunpack.c.l.b16 %v875
    %v2016 = vunpack.c.h.b16 %v875
    %v2017 = vunpack.c.l.b16 %v876
    %v2018 = vunpack.c.h.b16 %v876
    %v2019 = vunpack.c.l.b16 %v877
    %v2020 = vunpack.c.h.b16 %v877
    %v2021 = vunpack.c.l.b16 %v878
    %v2022 = vunpack.c.h.b16 %v878
    %v2023 = vunpack.c.l.b16 %v879
    %v2024 = vunpack.c.h.b16 %v879
    %v2025 = vunpack.c.l.b16 %v880
    %v2026 = vunpack.c.h.b16 %v880
    %v2027 = vunpack.c.l.b16 %v881
    %v2028 = vunpack.c.h.b16 %v881
    %v2029 = vunpack.c.l.b16 %v882
    %v2030 = vunpack.c.h.b16 %v882
    %v2031 = vunpack.c.l.b16 %v883
    %v2032 = vunpack.c.h.b16 %v883
    %v2033 = vunpack.c.l.b16 %v884
    %v2034 = vunpack.c.h.b16 %v884
    %v2035 = vunpack.c.l.b16 %v885
    %v2036 = vunpack.c.h.b16 %v885
    %v2037 = vunpack.c.l.b16 %v886
    %v2038 = vunpack.c.h.b16 %v886
    %v2039 = vunpack.c.l.b16 %v887
    %v2040 = vunpack.c.h.b16 %v887
    %v2041 = vunpack.c.l.b16 %v888
    %v2042 = vunpack.c.h.b16 %v888
    %v2043 = vunpack.c.l.b16 %v889
    %v2044 = vunpack.c.h.b16 %v889
    %v2045 = vunpack.c.l.b16 %v890
    %v2046 = vunpack.c.h.b16 %v890
    %v2047 = vunpack.c.l.b16 %v891
    %v2048 = vunpack.c.h.b16 %v891
    %v2049 = vunpack.c.l.b16 %v892
    %v2050 = vunpack.c.h.b16 %v892
    %v2051 = vunpack.c.l.b16 %v893
    %v2052 = vunpack.c.h.b16 %v893
    %v2053 = vunpack.c.l.b16 %v894
    %v2054 = vunpack.c.h.b16 %v894
    %v2055 = vunpack.c.l.b16 %v895
    %v2056 = vunpack.c.h.b16 %v895
    %v2057 = vunpack.c.l.b16 %v896
    %v2058 = vunpack.c.h.b16 %v896
    %v2059 = vunpack.c.l.b16 %v897
    %v2060 = vunpack.c.h.b16 %v897
    %v2061 = vunpack.c.l.b16 %v898
    %v2062 = vunpack.c.h.b16 %v898
    %v2063 = vunpack.c.l.b16 %v899
    %v2064 = vunpack.c.h.b16 %v899
    %v2065 = vunpack.c.l.b16 %v900
    %v2066 = vunpack.c.h.b16 %v900
    %v2067 = vunpack.c.l.b16 %v901
    %v2068 = vunpack.c.h.b16 %v901
    %v2069 = vunpack.c.l.b16 %v902
    %v2070 = vunpack.c.h.b16 %v902
    %v2071 = vunpack.c.l.b16 %v903
    %v2072 = vunpack.c.h.b16 %v903
    %v2073 = vunpack.c.l.b16 %v904
    %v2074 = vunpack.c.h.b16 %v904
    %v2075 = vunpack.c.l.b16 %v905
    %v2076 = vunpack.c.h.b16 %v905
    %v2077 = vunpack.c.l.b16 %v906
    %v2078 = vunpack.c.h.b16 %v906
    %v2079 = vunpack.c.l.b16 %v907
    %v2080 = vunpack.c.h.b16 %v907
    %v2081 = vunpack.c.l.b16 %v908
    %v2082 = vunpack.c.h.b16 %v908
    %v2083 = vunpack.c.l.b16 %v909
    %v2084 = vunpack.c.h.b16 %v909
    %v2085 = vunpack.c.l.b16 %v910
    %v2086 = vunpack.c.h.b16 %v910
    %v2087 = vunpack.c.l.b16 %v911
    %v2088 = vunpack.c.h.b16 %v911
    %v2089 = vunpack.c.l.b16 %v912
    %v2090 = vunpack.c.h.b16 %v912
    %v2091 = vunpack.c.l.b16 %v913
    %v2092 = vunpack.c.h.b16 %v913
    %v2093 = vunpack.c.l.b16 %v914
    %v2094 = vunpack.c.h.b16 %v914
    %v2095 = vunpack.c.l.b16 %v915
    %v2096 = vunpack.c.h.b16 %v915
    %v2097 = vunpack.c.l.b16 %v916
    %v2098 = vunpack.c.h.b16 %v916
    %v2099 = vunpack.c.l.b16 %v917
    %v2100 = vunpack.c.h.b16 %v917
    %v2101 = vunpack.c.l.b16 %v918
    %v2102 = vunpack.c.h.b16 %v918
    %v2103 = vunpack.c.l.b16 %v919
    %v2104 = vunpack.c.h.b16 %v919
    %v2105 = vunpack.c.l.b16 %v920
    %v2106 = vunpack.c.h.b16 %v920
    %v2107 = vunpack.c.l.b16 %v921
    %v2108 = vunpack.c.h.b16 %v921
    %v2109 = vunpack.c.l.b16 %v922
    %v2110 = vunpack.c.h.b16 %v922
    %v2111 = vunpack.c.l.b16 %v923
    %v2112 = vunpack.c.h.b16 %v923
    %v2113 = vunpack.c.l.b16 %v924
    %v2114 = vunpack.c.h.b16 %v924
    %v2115 = vunpack.c.l.b16 %v925
    %v2116 = vunpack.c.h.b16 %v925
    %v2117 = vunpack.c.l.b16 %v926
    %v2118 = vunpack.c.h.b16 %v926
    %v2119 = vunpack.c.l.b16 %v927
    %v2120 = vunpack.c.h.b16 %v927
    %v2121 = vunpack.c.l.b16 %v928
    %v2122 = vunpack.c.h.b16 %v928
    %v2123 = vunpack.c.l.b16 %v929
    %v2124 = vunpack.c.h.b16 %v929
    %v2125 = vunpack.c.l.b16 %v930
    %v2126 = vunpack.c.h.b16 %v930
    %v2127 = vunpack.c.l.b16 %v931
    %v2128 = vunpack.c.h.b16 %v931
    %v2129 = vunpack.c.l.b16 %v932
    %v2130 = vunpack.c.h.b16 %v932
    %v2131 = vunpack.c.l.b16 %v933
    %v2132 = vunpack.c.h.b16 %v933
    %v2133 = vunpack.c.l.b16 %v934
    %v2134 = vunpack.c.h.b16 %v934
    %v2135 = vunpack.c.l.b16 %v935
    %v2136 = vunpack.c.h.b16 %v935
    %v2137 = vunpack.c.l.b16 %v936
    %v2138 = vunpack.c.h.b16 %v936
    %v2139 = vunpack.c.l.b16 %v937
    %v2140 = vunpack.c.h.b16 %v937
    %v2141 = vunpack.c.l.b16 %v938
    %v2142 = vunpack.c.h.b16 %v938
    %v2143 = vunpack.c.l.b16 %v939
    %v2144 = vunpack.c.h.b16 %v939
    %v2145 = vunpack.c.l.b16 %v940
    %v2146 = vunpack.c.h.b16 %v940
    %v2147 = vunpack.c.l.b16 %v941
    %v2148 = vunpack.c.h.b16 %v941
    %v2149 = vunpack.c.l.b16 %v942
    %v2150 = vunpack.c.h.b16 %v942
    %v2151 = vunpack.c.l.b16 %v943
    %v2152 = vunpack.c.h.b16 %v943
    %v2153 = vunpack.c.l.b16 %v944
    %v2154 = vunpack.c.h.b16 %v944
    %v2155 = vunpack.c.l.b16 %v945
    %v2156 = vunpack.c.h.b16 %v945
    %v2157 = vunpack.c.l.b16 %v946
    %v2158 = vunpack.c.h.b16 %v946
    %v2159 = vunpack.c.l.b16 %v947
    %v2160 = vunpack.c.h.b16 %v947
    %v2161 = vunpack.c.l.b16 %v948
    %v2162 = vunpack.c.h.b16 %v948
    %v2163 = vunpack.c.l.b16 %v949
    %v2164 = vunpack.c.h.b16 %v949
    %v2165 = vunpack.c.l.b16 %v950
    %v2166 = vunpack.c.h.b16 %v950
    %v2167 = vunpack.c.l.b16 %v951
    %v2168 = vunpack.c.h.b16 %v951
    %v2169 = vunpack.c.l.b16 %v952
    %v2170 = vunpack.c.h.b16 %v952
    %v2171 = vunpack.c.l.b16 %v953
    %v2172 = vunpack.c.h.b16 %v953
    %v2173 = vunpack.c.l.b16 %v954
    %v2174 = vunpack.c.h.b16 %v954
    %v2175 = vunpack.c.l.b16 %v955
    %v2176 = vunpack.c.h.b16 %v955
    %v2177 = vunpack.c.l.b16 %v956
    %v2178 = vunpack.c.h.b16 %v956
    %v2179 = vunpack.c.l.b16 %v957
    %v2180 = vunpack.c.h.b16 %v957
    %v2181 = vunpack.c.l.b16 %v958
    %v2182 = vunpack.c.h.b16 %v958
    %v2183 = vunpack.c.l.b16 %v959
    %v2184 = vunpack.c.h.b16 %v959
    %v2185 = vunpack.c.l.b16 %v960
    %v2186 = vunpack.c.h.b16 %v960
    %v2187 = vunpack.c.l.b16 %v961
    %v2188 = vunpack.c.h.b16 %v961
    %v2189 = vunpack.c.l.b16 %v962
    %v2190 = vunpack.c.h.b16 %v962
    %v2191 = vunpack.c.l.b16 %v963
    %v2192 = vunpack.c.h.b16 %v963
    %v2193 = vunpack.c.l.b16 %v964
    %v2194 = vunpack.c.h.b16 %v964
    %v2195 = vunpack.c.l.b16 %v965
    %v2196 = vunpack.c.h.b16 %v965
    %v2197 = vunpack.c.l.b16 %v966
    %v2198 = vunpack.c.h.b16 %v966
    %v2199 = vunpack.c.l.b16 %v967
    %v2200 = vunpack.c.h.b16 %v967
    %v2201 = vunpack.c.l.b16 %v968
    %v2202 = vunpack.c.h.b16 %v968
    %v2203 = vunpack.c.l.b16 %v969
    %v2204 = vunpack.c.h.b16 %v969
    %v2205 = vunpack.c.l.b16 %v970
    %v2206 = vunpack.c.h.b16 %v970
    %v2207 = vunpack.c.l.b16 %v971
    %v2208 = vunpack.c.h.b16 %v971
    %v2209 = vunpack.c.l.b16 %v972
    %v2210 = vunpack.c.h.b16 %v972
    %v2211 = vunpack.c.l.b16 %v973
    %v2212 = vunpack.c.h.b16 %v973
    %v2213 = vunpack.c.l.b16 %v974
    %v2214 = vunpack.c.h.b16 %v974
    %v2215 = vunpack.c.l.b16 %v975
    %v2216 = vunpack.c.h.b16 %v975
    %v2217 = vunpack.c.l.b16 %v976
    %v2218 = vunpack.c.h.b16 %v976
    %v2219 = vunpack.c.l.b16 %v977
    %v2220 = vunpack.c.h.b16 %v977
    %v2221 = vunpack.c.l.b16 %v978
    %v2222 = vunpack.c.h.b16 %v978
    %v2223 = vunpack.c.l.b16 %v979
    %v2224 = vunpack.c.h.b16 %v979
    %v2225 = vunpack.c.l.b16 %v980
    %v2226 = vunpack.c.h.b16 %v980
    %v2227 = vunpack.c.l.b16 %v981
    %v2228 = vunpack.c.h.b16 %v981
    %v2229 = vunpack.c.l.b16 %v982
    %v2230 = vunpack.c.h.b16 %v982
    %v2231 = vunpack.c.l.b16 %v983
    %v2232 = vunpack.c.h.b16 %v983
    %v2233 = vunpack.c.l.b16 %v984
    %v2234 = vunpack.c.h.b16 %v984
    %v2235 = vunpack.c.l.b16 %v985
    %v2236 = vunpack.c.h.b16 %v985
    %v2237 = vunpack.c.l.b16 %v986
    %v2238 = vunpack.c.h.b16 %v986
    %v2239 = vunpack.c.l.b16 %v987
    %v2240 = vunpack.c.h.b16 %v987
    %v2241 = vunpack.c.l.b16 %v988
    %v2242 = vunpack.c.h.b16 %v988
    %v2243 = vunpack.c.l.b16 %v989
    %v2244 = vunpack.c.h.b16 %v989
    %v2245 = vunpack.c.l.b16 %v990
    %v2246 = vunpack.c.h.b16 %v990
    %v2247 = vunpack.c.l.b16 %v991
    %v2248 = vunpack.c.h.b16 %v991
    %v2249 = vunpack.c.l.b16 %v992
    %v2250 = vunpack.c.h.b16 %v992
    %v2251 = vunpack.c.l.b16 %v993
    %v2252 = vunpack.c.h.b16 %v993
    %v2253 = vunpack.c.l.b16 %v994
    %v2254 = vunpack.c.h.b16 %v994
    %v2255 = vunpack.c.l.b16 %v995
    %v2256 = vunpack.c.h.b16 %v995
    %v2257 = vunpack.c.l.b16 %v996
    %v2258 = vunpack.c.h.b16 %v996
    %v2259 = vunpack.c.l.b16 %v997
    %v2260 = vunpack.c.h.b16 %v997
    %v2261 = vunpack.c.l.b16 %v998
    %v2262 = vunpack.c.h.b16 %v998
    %v2263 = vunpack.c.l.b16 %v999
    %v2264 = vunpack.c.h.b16 %v999
    %v2265 = vunpack.c.l.b16 %v1000
    %v2266 = vunpack.c.h.b16 %v1000
    %v2267 = vunpack.c.l.b16 %v1001
    %v2268 = vunpack.c.h.b16 %v1001
    %v2269 = vunpack.c.l.b16 %v1002
    %v2270 = vunpack.c.h.b16 %v1002
    %v2271 = vunpack.c.l.b16 %v1003
    %v2272 = vunpack.c.h.b16 %v1003
    %v2273 = vunpack.c.l.b16 %v1004
    %v2274 = vunpack.c.h.b16 %v1004
    %v2275 = vunpack.c.l.b16 %v1005
    %v2276 = vunpack.c.h.b16 %v1005
    %v2277 = vunpack.c.l.b16 %v1006
    %v2278 = vunpack.c.h.b16 %v1006
    %v2279 = vunpack.c.l.b16 %v1007
    %v2280 = vunpack.c.h.b16 %v1007
    %v2281 = vunpack.c.l.b16 %v1008
    %v2282 = vunpack.c.h.b16 %v1008
    %v2283 = vunpack.c.l.b16 %v1009
    %v2284 = vunpack.c.h.b16 %v1009
    %v2285 = vunpack.c.l.b16 %v1010
    %v2286 = vunpack.c.h.b16 %v1010
    %v2287 = vunpack.c.l.b16 %v1011
    %v2288 = vunpack.c.h.b16 %v1011
    %v2289 = vunpack.c.l.b16 %v1012
    %v2290 = vunpack.c.h.b16 %v1012
    %v2291 = vunpack.c.l.b16 %v1013
    %v2292 = vunpack.c.h.b16 %v1013
    %v2293 = vunpack.c.l.b16 %v1014
    %v2294 = vunpack.c.h.b16 %v1014
    %v2295 = vunpack.c.l.b16 %v1015
    %v2296 = vunpack.c.h.b16 %v1015
    %v2297 = vunpack.c.l.b16 %v1016
    %v2298 = vunpack.c.h.b16 %v1016
    %v2299 = vunpack.c.l.b16 %v1017
    %v2300 = vunpack.c.h.b16 %v1017
    %v2301 = vunpack.c.l.b16 %v1018
    %v2302 = vunpack.c.h.b16 %v1018
    %v2303 = vunpack.c.l.b16 %v1019
    %v2304 = vunpack.c.h.b16 %v1019
    %v2305 = vunpack.c.l.b16 %v1020
    %v2306 = vunpack.c.h.b16 %v1020
    %v2307 = vunpack.c.l.b16 %v1021
    %v2308 = vunpack.c.h.b16 %v1021
    %v2309 = vunpack.c.l.b16 %v1022
    %v2310 = vunpack.c.h.b16 %v1022
    %v2311 = vunpack.c.l.b16 %v1023
    %v2312 = vunpack.c.h.b16 %v1023
    %v2313 = vunpack.c.l.b16 %v1024
    %v2314 = vunpack.c.h.b16 %v1024
    %v2315 = vunpack.c.l.b16 %v1025
    %v2316 = vunpack.c.h.b16 %v1025
    %v2317 = vunpack.c.l.b16 %v1026
    %v2318 = vunpack.c.h.b16 %v1026
    %v2319 = vunpack.c.l.b16 %v1027
    %v2320 = vunpack.c.h.b16 %v1027
    %v2321 = vunpack.c.l.b16 %v1028
    %v2322 = vunpack.c.h.b16 %v1028
    %v2323 = vunpack.c.l.b16 %v1029
    %v2324 = vunpack.c.h.b16 %v1029
    %v2325 = vunpack.c.l.b16 %v1030
    %v2326 = vunpack.c.h.b16 %v1030
    %v2327 = vunpack.c.l.b16 %v1031
    %v2328 = vunpack.c.h.b16 %v1031
    %v2329 = vunpack.c.l.b16 %v1032
    %v2330 = vunpack.c.h.b16 %v1032
    %v2331 = vunpack.c.l.b16 %v1033
    %v2332 = vunpack.c.h.b16 %v1033
    %v2333 = vunpack.c.l.b16 %v1034
    %v2334 = vunpack.c.h.b16 %v1034
    %v2335 = vunpack.c.l.b16 %v1035
    %v2336 = vunpack.c.h.b16 %v1035
    %v2337 = vunpack.c.l.b16 %v1036
    %v2338 = vunpack.c.h.b16 %v1036
    %v2339 = vunpack.c.l.b16 %v1037
    %v2340 = vunpack.c.h.b16 %v1037
    %v2341 = vunpack.c.l.b16 %v1038
    %v2342 = vunpack.c.h.b16 %v1038
    %v2343 = vunpack.c.l.b16 %v1039
    %v2344 = vunpack.c.h.b16 %v1039
    %v2345 = vunpack.c.l.b16 %v1040
    %v2346 = vunpack.c.h.b16 %v1040
    %v2347 = vunpack.c.l.b16 %v1041
    %v2348 = vunpack.c.h.b16 %v1041
    %v2349 = vunpack.c.l.b16 %v1042
    %v2350 = vunpack.c.h.b16 %v1042
    %v2351 = vunpack.c.l.b16 %v1043
    %v2352 = vunpack.c.h.b16 %v1043
    %v2353 = vunpack.c.l.b16 %v1044
    %v2354 = vunpack.c.h.b16 %v1044
    %v2355 = vunpack.c.l.b16 %v1045
    %v2356 = vunpack.c.h.b16 %v1045
    %v2357 = vunpack.c.l.b16 %v1046
    %v2358 = vunpack.c.h.b16 %v1046
    %v2359 = vunpack.c.l.b16 %v1047
    %v2360 = vunpack.c.h.b16 %v1047
    %v2361 = vunpack.c.l.b16 %v1048
    %v2362 = vunpack.c.h.b16 %v1048
    %v2363 = vunpack.c.l.b16 %v1049
    %v2364 = vunpack.c.h.b16 %v1049
    %v2365 = vunpack.c.l.b16 %v1050
    %v2366 = vunpack.c.h.b16 %v1050
    %v2367 = vunpack.c.l.b16 %v1051
    %v2368 = vunpack.c.h.b16 %v1051
    %v2369 = vunpack.c.l.b16 %v1052
    %v2370 = vunpack.c.h.b16 %v1052
    %v2371 = vunpack.c.l.b16 %v1053
    %v2372 = vunpack.c.h.b16 %v1053
    %v2373 = vunpack.c.l.b16 %v1054
    %v2374 = vunpack.c.h.b16 %v1054
    %v2375 = vunpack.c.l.b16 %v1055
    %v2376 = vunpack.c.h.b16 %v1055
    %v2377 = vunpack.c.l.b16 %v1056
    %v2378 = vunpack.c.h.b16 %v1056
    %v2379 = vunpack.c.l.b16 %v1057
    %v2380 = vunpack.c.h.b16 %v1057
    %v2381 = vunpack.c.l.b16 %v1058
    %v2382 = vunpack.c.h.b16 %v1058
    %v2383 = vunpack.c.l.b16 %v1059
    %v2384 = vunpack.c.h.b16 %v1059
    %v2385 = vunpack.c.l.b16 %v1060
    %v2386 = vunpack.c.h.b16 %v1060
    %v2387 = vunpack.c.l.b16 %v1061
    %v2388 = vunpack.c.h.b16 %v1061
    %v2389 = vunpack.c.l.b16 %v1062
    %v2390 = vunpack.c.h.b16 %v1062
    %v2391 = vunpack.c.l.b16 %v1063
    %v2392 = vunpack.c.h.b16 %v1063
    %v2393 = vunpack.c.l.b16 %v1064
    %v2394 = vunpack.c.h.b16 %v1064
    %v2395 = vunpack.c.l.b16 %v1065
    %v2396 = vunpack.c.h.b16 %v1065
    %v2397 = vunpack.c.l.b16 %v1066
    %v2398 = vunpack.c.h.b16 %v1066
    %v2399 = vunpack.c.l.b16 %v1067
    %v2400 = vunpack.c.h.b16 %v1067
    %v2401 = vunpack.c.l.b16 %v1068
    %v2402 = vunpack.c.h.b16 %v1068
    %v2403 = vunpack.c.l.b16 %v1069
    %v2404 = vunpack.c.h.b16 %v1069
    %v2405 = vunpack.c.l.b16 %v1070
    %v2406 = vunpack.c.h.b16 %v1070
    %v2407 = vunpack.c.l.b16 %v1071
    %v2408 = vunpack.c.h.b16 %v1071
    %v2409 = vunpack.c.l.b16 %v1072
    %v2410 = vunpack.c.h.b16 %v1072
    %v2411 = vunpack.c.l.b16 %v1073
    %v2412 = vunpack.c.h.b16 %v1073
    %v2413 = vunpack.c.l.b16 %v1074
    %v2414 = vunpack.c.h.b16 %v1074
    %v2415 = vunpack.c.l.b16 %v1075
    %v2416 = vunpack.c.h.b16 %v1075
    %v2417 = vunpack.c.l.b16 %v1076
    %v2418 = vunpack.c.h.b16 %v1076
    %v2419 = vunpack.c.l.b16 %v1077
    %v2420 = vunpack.c.h.b16 %v1077
    %v2421 = vunpack.c.l.b16 %v1078
    %v2422 = vunpack.c.h.b16 %v1078
    %v2423 = vunpack.c.l.b16 %v1079
    %v2424 = vunpack.c.h.b16 %v1079
    %v2425 = vunpack.c.l.b16 %v1080
    %v2426 = vunpack.c.h.b16 %v1080
    %v2427 = vunpack.c.l.b16 %v1081
    %v2428 = vunpack.c.h.b16 %v1081
    %v2429 = vunpack.c.l.b16 %v1082
    %v2430 = vunpack.c.h.b16 %v1082
    %v2431 = vunpack.c.l.b16 %v1083
    %v2432 = vunpack.c.h.b16 %v1083
    %v2433 = vunpack.c.l.b16 %v1084
    %v2434 = vunpack.c.h.b16 %v1084
    %v2435 = vunpack.c.l.b16 %v1085
    %v2436 = vunpack.c.h.b16 %v1085
    %v2437 = vunpack.c.l.b16 %v1086
    %v2438 = vunpack.c.h.b16 %v1086
    %v2439 = vunpack.c.l.b16 %v1087
    %v2440 = vunpack.c.h.b16 %v1087
    %v2441 = vunpack.c.l.b16 %v1088
    %v2442 = vunpack.c.h.b16 %v1088
    %v2443 = vunpack.c.l.b16 %v1089
    %v2444 = vunpack.c.h.b16 %v1089
    %v2445 = vunpack.c.l.b16 %v1090
    %v2446 = vunpack.c.h.b16 %v1090
    %v2447 = vunpack.c.l.b16 %v1091
    %v2448 = vunpack.c.h.b16 %v1091
    %v2449 = vunpack.c.l.b16 %v1092
    %v2450 = vunpack.c.h.b16 %v1092
    %v2451 = vunpack.c.l.b16 %v1093
    %v2452 = vunpack.c.h.b16 %v1093
    %v2453 = vunpack.c.l.b16 %v1094
    %v2454 = vunpack.c.h.b16 %v1094
    %v2455 = vunpack.c.l.b16 %v1095
    %v2456 = vunpack.c.h.b16 %v1095
    %v2457 = vunpack.c.l.b16 %v1096
    %v2458 = vunpack.c.h.b16 %v1096
    %v2459 = vunpack.c.l.b16 %v1097
    %v2460 = vunpack.c.h.b16 %v1097
    %v2461 = vunpack.c.l.b16 %v1098
    %v2462 = vunpack.c.h.b16 %v1098
    %v2463 = vunpack.c.l.b16 %v1099
    %v2464 = vunpack.c.h.b16 %v1099
    %v2465 = vunpack.c.l.b16 %v1100
    %v2466 = vunpack.c.h.b16 %v1100
    %v2467 = vunpack.c.l.b16 %v1101
    %v2468 = vunpack.c.h.b16 %v1101
    %v2469 = vunpack.c.l.b16 %v1102
    %v2470 = vunpack.c.h.b16 %v1102
    %v2471 = vunpack.c.l.b16 %v1103
    %v2472 = vunpack.c.h.b16 %v1103
    %v2473 = vunpack.c.l.b16 %v1104
    %v2474 = vunpack.c.h.b16 %v1104
    %v2475 = vunpack.c.l.b16 %v1105
    %v2476 = vunpack.c.h.b16 %v1105
    %v2477 = vunpack.c.l.b16 %v1106
    %v2478 = vunpack.c.h.b16 %v1106
    %v2479 = vunpack.c.l.b16 %v1107
    %v2480 = vunpack.c.h.b16 %v1107
    %v2481 = vunpack.c.l.b16 %v1108
    %v2482 = vunpack.c.h.b16 %v1108
    %v2483 = vunpack.c.l.b16 %v1109
    %v2484 = vunpack.c.h.b16 %v1109
    %v2485 = vunpack.c.l.b16 %v1110
    %v2486 = vunpack.c.h.b16 %v1110
    %v2487 = vunpack.c.l.b16 %v1111
    %v2488 = vunpack.c.h.b16 %v1111
    %v2489 = vunpack.c.l.b16 %v1112
    %v2490 = vunpack.c.h.b16 %v1112
    %v2491 = vunpack.c.l.b16 %v1113
    %v2492 = vunpack.c.h.b16 %v1113
    %v2493 = vunpack.c.l.b16 %v1114
    %v2494 = vunpack.c.h.b16 %v1114
    %v2495 = vunpack.c.l.b16 %v1115
    %v2496 = vunpack.c.h.b16 %v1115
    %v2497 = vunpack.c.l.b16 %v1116
    %v2498 = vunpack.c.h.b16 %v1116
    %v2499 = vunpack.c.l.b16 %v1117
    %v2500 = vunpack.c.h.b16 %v1117
    %v2501 = vunpack.c.l.b16 %v1118
    %v2502 = vunpack.c.h.b16 %v1118
    %v2503 = vunpack.c.l.b16 %v1119
    %v2504 = vunpack.c.h.b16 %v1119
    %v2505 = vunpack.c.l.b16 %v1120
    %v2506 = vunpack.c.h.b16 %v1120
    %v2507 = vunpack.c.l.b16 %v1121
    %v2508 = vunpack.c.h.b16 %v1121
    %v2509 = vunpack.c.l.b16 %v1122
    %v2510 = vunpack.c.h.b16 %v1122
    %v2511 = vunpack.c.l.b16 %v1123
    %v2512 = vunpack.c.h.b16 %v1123
    %v2513 = vunpack.c.l.b16 %v1124
    %v2514 = vunpack.c.h.b16 %v1124
    %v2515 = vunpack.c.l.b16 %v1125
    %v2516 = vunpack.c.h.b16 %v1125
    %v2517 = vunpack.c.l.b16 %v1126
    %v2518 = vunpack.c.h.b16 %v1126
    %v2519 = vunpack.c.l.b16 %v1127
    %v2520 = vunpack.c.h.b16 %v1127
    %v2521 = vunpack.c.l.b16 %v1128
    %v2522 = vunpack.c.h.b16 %v1128
    %v2523 = vunpack.c.l.b16 %v1129
    %v2524 = vunpack.c.h.b16 %v1129
    %v2525 = vunpack.c.l.b16 %v1130
    %v2526 = vunpack.c.h.b16 %v1130
    %v2527 = vunpack.c.l.b16 %v1131
    %v2528 = vunpack.c.h.b16 %v1131
    %v2529 = vunpack.c.l.b16 %v1132
    %v2530 = vunpack.c.h.b16 %v1132
    %v2531 = vunpack.c.l.b16 %v1133
    %v2532 = vunpack.c.h.b16 %v1133
    %v2533 = vunpack.c.l.b16 %v1134
    %v2534 = vunpack.c.h.b16 %v1134
    %v2535 = vunpack.c.l.b16 %v1135
    %v2536 = vunpack.c.h.b16 %v1135
    %v2537 = vunpack.c.l.b16 %v1136
    %v2538 = vunpack.c.h.b16 %v1136
    %v2539 = vunpack.c.l.b16 %v1137
    %v2540 = vunpack.c.h.b16 %v1137
    %v2541 = vunpack.c.l.b16 %v1138
    %v2542 = vunpack.c.h.b16 %v1138
    %v2543 = vunpack.c.l.b16 %v1139
    %v2544 = vunpack.c.h.b16 %v1139
    %v2545 = vunpack.c.l.b16 %v1140
    %v2546 = vunpack.c.h.b16 %v1140
    %v2547 = vunpack.c.l.b16 %v1141
    %v2548 = vunpack.c.h.b16 %v1141
    %v2549 = vunpack.c.l.b16 %v1142
    %v2550 = vunpack.c.h.b16 %v1142
    %v2551 = vunpack.c.l.b16 %v1143
    %v2552 = vunpack.c.h.b16 %v1143
    %v2553 = vunpack.c.l.b16 %v1144
    %v2554 = vunpack.c.h.b16 %v1144
    %v2555 = vunpack.c.l.b16 %v1145
    %v2556 = vunpack.c.h.b16 %v1145
    %v2557 = vunpack.c.l.b16 %v1146
    %v2558 = vunpack.c.h.b16 %v1146
    %v2559 = vunpack.c.l.b16 %v1147
    %v2560 = vunpack.c.h.b16 %v1147
    %v2561 = vunpack.c.l.b16 %v1148
    %v2562 = vunpack.c.h.b16 %v1148
    %v2563 = vunpack.c.l.b16 %v1149
    %v2564 = vunpack.c.h.b16 %v1149
    %v2565 = vunpack.c.l.b16 %v1150
    %v2566 = vunpack.c.h.b16 %v1150
    %v2567 = vunpack.c.l.b16 %v1151
    %v2568 = vunpack.c.h.b16 %v1151
    %v2569 = vunpack.c.l.b16 %v1152
    %v2570 = vunpack.c.h.b16 %v1152
    %v2571 = vunpack.c.l.b16 %v1153
    %v2572 = vunpack.c.h.b16 %v1153
    %v2573 = vunpack.c.l.b16 %v1154
    %v2574 = vunpack.c.h.b16 %v1154
    %v2575 = vunpack.c.l.b16 %v1155
    %v2576 = vunpack.c.h.b16 %v1155
    %v2577 = vunpack.c.l.b16 %v1156
    %v2578 = vunpack.c.h.b16 %v1156
    %v2579 = vunpack.c.l.b16 %v1157
    %v2580 = vunpack.c.h.b16 %v1157
    %v2581 = vunpack.c.l.b16 %v1158
    %v2582 = vunpack.c.h.b16 %v1158
    %v2583 = vunpack.c.l.b16 %v1159
    %v2584 = vunpack.c.h.b16 %v1159
    %v2585 = vunpack.c.l.b16 %v1160
    %v2586 = vunpack.c.h.b16 %v1160
    %v2587 = vunpack.c.l.b16 %v1161
    %v2588 = vunpack.c.h.b16 %v1161
    %v2589 = vunpack.c.l.b16 %v1162
    %v2590 = vunpack.c.h.b16 %v1162
    %v2591 = vunpack.c.l.b16 %v1163
    %v2592 = vunpack.c.h.b16 %v1163
    %v2593 = vunpack.c.l.b16 %v1164
    %v2594 = vunpack.c.h.b16 %v1164
    %v2595 = vunpack.c.l.b16 %v1165
    %v2596 = vunpack.c.h.b16 %v1165
    %v2597 = vunpack.c.l.b16 %v1166
    %v2598 = vunpack.c.h.b16 %v1166
    %v2599 = vunpack.c.l.b16 %v1167
    %v2600 = vunpack.c.h.b16 %v1167
    %v2601 = vunpack.c.l.b16 %v1168
    %v2602 = vunpack.c.h.b16 %v1168
    %v2603 = vunpack.c.l.b16 %v1169
    %v2604 = vunpack.c.h.b16 %v1169
    %v2605 = vunpack.c.l.b16 %v1170
    %v2606 = vunpack.c.h.b16 %v1170
    %v2607 = vunpack.c.l.b16 %v1171
    %v2608 = vunpack.c.h.b16 %v1171
    %v2609 = vunpack.c.l.b16 %v1172
    %v2610 = vunpack.c.h.b16 %v1172
    %v2611 = vunpack.c.l.b16 %v1173
    %v2612 = vunpack.c.h.b16 %v1173
    %v2613 = vunpack.c.l.b16 %v1174
    %v2614 = vunpack.c.h.b16 %v1174
    %v2615 = vunpack.c.l.b16 %v1175
    %v2616 = vunpack.c.h.b16 %v1175
    %v2617 = vunpack.c.l.b16 %v1176
    %v2618 = vunpack.c.h.b16 %v1176
    %v2619 = vunpack.c.l.b16 %v1177
    %v2620 = vunpack.c.h.b16 %v1177
    %v2621 = vunpack.c.l.b16 %v1178
    %v2622 = vunpack.c.h.b16 %v1178
    %v2623 = vunpack.c.l.b16 %v1179
    %v2624 = vunpack.c.h.b16 %v1179
    %v2625 = vunpack.c.l.b16 %v1180
    %v2626 = vunpack.c.h.b16 %v1180
    %v2627 = vunpack.c.l.b16 %v1181
    %v2628 = vunpack.c.h.b16 %v1181
    %v2629 = vunpack.c.l.b16 %v1182
    %v2630 = vunpack.c.h.b16 %v1182
    %v2631 = vunpack.c.l.b16 %v1183
    %v2632 = vunpack.c.h.b16 %v1183
    %v2633 = vunpack.c.l.b16 %v1184
    %v2634 = vunpack.c.h.b16 %v1184
    %v2635 = vunpack.c.l.b16 %v1185
    %v2636 = vunpack.c.h.b16 %v1185
    %v2637 = vunpack.c.l.b16 %v1186
    %v2638 = vunpack.c.h.b16 %v1186
    %v2639 = vunpack.c.l.b16 %v1187
    %v2640 = vunpack.c.h.b16 %v1187
    %v2641 = vunpack.c.l.b16 %v1188
    %v2642 = vunpack.c.h.b16 %v1188
    %v2643 = vunpack.c.l.b16 %v1189
    %v2644 = vunpack.c.h.b16 %v1189
    %v2645 = vunpack.c.l.b16 %v1190
    %v2646 = vunpack.c.h.b16 %v1190
    %v2647 = vunpack.c.l.b16 %v1191
    %v2648 = vunpack.c.h.b16 %v1191
    %v2649 = vunpack.c.l.b16 %v1192
    %v2650 = vunpack.c.h.b16 %v1192
    %v2651 = vunpack.c.l.b16 %v1193
    %v2652 = vunpack.c.h.b16 %v1193
    %v2653 = vunpack.c.l.b16 %v1194
    %v2654 = vunpack.c.h.b16 %v1194
    %v2655 = vunpack.c.l.b16 %v1195
    %v2656 = vunpack.c.h.b16 %v1195
    %v2657 = vunpack.c.l.b16 %v1196
    %v2658 = vunpack.c.h.b16 %v1196
    %v2659 = vunpack.c.l.b16 %v1197
    %v2660 = vunpack.c.h.b16 %v1197
    %v2661 = vunpack.c.l.b16 %v1198
    %v2662 = vunpack.c.h.b16 %v1198
    %v2663 = vunpack.c.l.b16 %v1199
    %v2664 = vunpack.c.h.b16 %v1199
    %v2665 = vunpack.c.l.b16 %v1200
    %v2666 = vunpack.c.h.b16 %v1200
    %v2667 = vunpack.c.l.b16 %v1201
    %v2668 = vunpack.c.h.b16 %v1201
    %v2669 = vunpack.c.l.b16 %v1202
    %v2670 = vunpack.c.h.b16 %v1202
    %v2671 = vunpack.c.l.b16 %v1203
    %v2672 = vunpack.c.h.b16 %v1203
    %v2673 = vunpack.c.l.b16 %v1204
    %v2674 = vunpack.c.h.b16 %v1204
    %v2675 = vunpack.c.l.b16 %v1205
    %v2676 = vunpack.c.h.b16 %v1205
    %v2677 = vunpack.c.l.b16 %v1206
    %v2678 = vunpack.c.h.b16 %v1206
    %v2679 = vunpack.c.l.b16 %v1207
    %v2680 = vunpack.c.h.b16 %v1207
    %v2681 = vunpack.c.l.b16 %v1208
    %v2682 = vunpack.c.h.b16 %v1208
    %v2683 = vunpack.c.l.b16 %v1209
    %v2684 = vunpack.c.h.b16 %v1209
    %v2685 = vunpack.c.l.b16 %v1210
    %v2686 = vunpack.c.h.b16 %v1210
    %v2687 = vunpack.c.l.b16 %v1211
    %v2688 = vunpack.c.h.b16 %v1211
    %v2689 = vunpack.c.l.b16 %v1212
    %v2690 = vunpack.c.h.b16 %v1212
    %v2691 = vunpack.c.l.b16 %v1213
    %v2692 = vunpack.c.h.b16 %v1213
    %v2693 = vunpack.c.l.b16 %v1214
    %v2694 = vunpack.c.h.b16 %v1214
    %v2695 = vunpack.c.l.b16 %v1215
    %v2696 = vunpack.c.h.b16 %v1215
    %v2697 = vunpack.c.l.b16 %v1216
    %v2698 = vunpack.c.h.b16 %v1216
    %v2699 = vunpack.c.l.b16 %v1217
    %v2700 = vunpack.c.h.b16 %v1217
    %v2701 = vunpack.c.l.b16 %v1218
    %v2702 = vunpack.c.h.b16 %v1218
    %v2703 = vunpack.c.l.b16 %v1219
    %v2704 = vunpack.c.h.b16 %v1219
    %v2705 = vunpack.c.l.b16 %v1220
    %v2706 = vunpack.c.h.b16 %v1220
    %v2707 = vunpack.c.l.b16 %v1221
    %v2708 = vunpack.c.h.b16 %v1221
    %v2709 = vunpack.c.l.b16 %v1222
    %v2710 = vunpack.c.h.b16 %v1222
    %v2711 = vunpack.c.l.b16 %v1223
    %v2712 = vunpack.c.h.b16 %v1223
    %v2713 = vunpack.c.l.b16 %v1224
    %v2714 = vunpack.c.h.b16 %v1224
    %v2715 = vunpack.c.l.b16 %v1225
    %v2716 = vunpack.c.h.b16 %v1225
    %v2717 = vunpack.c.l.b16 %v1226
    %v2718 = vunpack.c.h.b16 %v1226
    %v2719 = vunpack.c.l.b16 %v1227
    %v2720 = vunpack.c.h.b16 %v1227
    %v2721 = vunpack.c.l.b16 %v1228
    %v2722 = vunpack.c.h.b16 %v1228
    %v2723 = vunpack.c.l.b16 %v1229
    %v2724 = vunpack.c.h.b16 %v1229
    %v2725 = vunpack.c.l.b16 %v1230
    %v2726 = vunpack.c.h.b16 %v1230
    %v2727 = vunpack.c.l.b16 %v1231
    %v2728 = vunpack.c.h.b16 %v1231
    %v2729 = vunpack.c.l.b16 %v1232
    %v2730 = vunpack.c.h.b16 %v1232
    %v2731 = vunpack.c.l.b16 %v1233
    %v2732 = vunpack.c.h.b16 %v1233
    %v2733 = vunpack.c.l.b16 %v1234
    %v2734 = vunpack.c.h.b16 %v1234
    %v2735 = vunpack.c.l.b16 %v1235
    %v2736 = vunpack.c.h.b16 %v1235
    %v2737 = vunpack.c.l.b16 %v1236
    %v2738 = vunpack.c.h.b16 %v1236
    %v2739 = vunpack.c.l.b16 %v1237
    %v2740 = vunpack.c.h.b16 %v1237
    %v2741 = vunpack.c.l.b16 %v1238
    %v2742 = vunpack.c.h.b16 %v1238
    %v2743 = vunpack.c.l.b16 %v1239
    %v2744 = vunpack.c.h.b16 %v1239
    %v2745 = vunpack.c.l.b16 %v1240
    %v2746 = vunpack.c.h.b16 %v1240
    %v2747 = vunpack.c.l.b16 %v1241
    %v2748 = vunpack.c.h.b16 %v1241
    %v2749 = vunpack.c.l.b16 %v1242
    %v2750 = vunpack.c.h.b16 %v1242
    %v2751 = vunpack.c.l.b16 %v1243
    %v2752 = vunpack.c.h.b16 %v1243
    %v2753 = vunpack.c.l.b16 %v1244
    %v2754 = vunpack.c.h.b16 %v1244
    %v2755 = vunpack.c.l.b16 %v1245
    %v2756 = vunpack.c.h.b16 %v1245
    %v2757 = vunpack.c.l.b16 %v1246
    %v2758 = vunpack.c.h.b16 %v1246
    %v2759 = vunpack.c.l.b16 %v1247
    %v2760 = vunpack.c.h.b16 %v1247
    %v2761 = vunpack.c.l.b16 %v1248
    %v2762 = vunpack.c.h.b16 %v1248
    %v2763 = vunpack.c.l.b16 %v1249
    %v2764 = vunpack.c.h.b16 %v1249
    %v2765 = vunpack.c.l.b16 %v1250
    %v2766 = vunpack.c.h.b16 %v1250
    %v2767 = vunpack.c.l.b16 %v1251
    %v2768 = vunpack.c.h.b16 %v1251
    %v2769 = vunpack.c.l.b16 %v1252
    %v2770 = vunpack.c.h.b16 %v1252
    %v2771 = vunpack.c.l.b16 %v1253
    %v2772 = vunpack.c.h.b16 %v1253
    %v2773 = vunpack.c.l.b16 %v1254
    %v2774 = vunpack.c.h.b16 %v1254
    %v2775 = vunpack.c.l.b16 %v1255
    %v2776 = vunpack.c.h.b16 %v1255
    %v2777 = vunpack.c.l.b16 %v1256
    %v2778 = vunpack.c.h.b16 %v1256
    %v2779 = vunpack.c.l.b16 %v1257
    %v2780 = vunpack.c.h.b16 %v1257
    %v2781 = vunpack.c.l.b16 %v1258
    %v2782 = vunpack.c.h.b16 %v1258
    %v2783 = vunpack.c.l.b16 %v1259
    %v2784 = vunpack.c.h.b16 %v1259
    %v2785 = vunpack.c.l.b16 %v1260
    %v2786 = vunpack.c.h.b16 %v1260
    %v2787 = vunpack.c.l.b16 %v1261
    %v2788 = vunpack.c.h.b16 %v1261
    %v2789 = vunpack.c.l.b16 %v1262
    %v2790 = vunpack.c.h.b16 %v1262
    %v2791 = vunpack.c.l.b16 %v1263
    %v2792 = vunpack.c.h.b16 %v1263
    %v2793 = vunpack.c.l.b16 %v1264
    %v2794 = vunpack.c.h.b16 %v1264
    %v2795 = vunpack.c.l.b16 %v1265
    %v2796 = vunpack.c.h.b16 %v1265
    %v2797 = vunpack.c.l.b16 %v1266
    %v2798 = vunpack.c.h.b16 %v1266
    %v2799 = vunpack.c.l.b16 %v1267
    %v2800 = vunpack.c.h.b16 %v1267
    %v2801 = vunpack.c.l.b16 %v1268
    %v2802 = vunpack.c.h.b16 %v1268
    %v2803 = vunpack.c.l.b16 %v1269
    %v2804 = vunpack.c.h.b16 %v1269
    %v2805 = vunpack.c.l.b16 %v1270
    %v2806 = vunpack.c.h.b16 %v1270
    %v2807 = vunpack.c.l.b16 %v1271
    %v2808 = vunpack.c.h.b16 %v1271
    %v2809 = vunpack.c.l.b16 %v1272
    %v2810 = vunpack.c.h.b16 %v1272
    %v2811 = vunpack.c.l.b16 %v1273
    %v2812 = vunpack.c.h.b16 %v1273
    %v2813 = vunpack.c.l.b16 %v1274
    %v2814 = vunpack.c.h.b16 %v1274
    %v2815 = vunpack.c.l.b16 %v1275
    %v2816 = vunpack.c.h.b16 %v1275
    %v2817 = vunpack.c.l.b16 %v1276
    %v2818 = vunpack.c.h.b16 %v1276
    %v2819 = vunpack.c.l.b16 %v1277
    %v2820 = vunpack.c.h.b16 %v1277
    %v2821 = vunpack.c.l.b16 %v1278
    %v2822 = vunpack.c.h.b16 %v1278
    %v2823 = vunpack.c.l.b16 %v1279
    %v2824 = vunpack.c.h.b16 %v1279
    %v2825 = vunpack.c.l.b16 %v1280
    %v2826 = vunpack.c.h.b16 %v1280
    %v2827 = vunpack.c.l.b16 %v1281
    %v2828 = vunpack.c.h.b16 %v1281
    %v2829 = vunpack.c.l.b16 %v1282
    %v2830 = vunpack.c.h.b16 %v1282
    %v2831 = vunpack.c.l.b16 %v1283
    %v2832 = vunpack.c.h.b16 %v1283
    %v2833 = vunpack.c.l.b16 %v1284
    %v2834 = vunpack.c.h.b16 %v1284
    %v2835 = vunpack.c.l.b16 %v1285
    %v2836 = vunpack.c.h.b16 %v1285
    %v2837 = vunpack.c.l.b16 %v1286
    %v2838 = vunpack.c.h.b16 %v1286
    %v2839 = vunpack.c.l.b16 %v1287
    %v2840 = vunpack.c.h.b16 %v1287
    %v2841 = vunpack.c.l.b16 %v1288
    %v2842 = vunpack.c.h.b16 %v1288
    %v2843 = vunpack.c.l.b16 %v1289
    %v2844 = vunpack.c.h.b16 %v1289
    %v2845 = vunpack.c.l.b16 %v1290
    %v2846 = vunpack.c.h.b16 %v1290
    %v2847 = vunpack.c.l.b16 %v1291
    %v2848 = vunpack.c.h.b16 %v1291
    %v2849 = vunpack.c.l.b16 %v1292
    %v2850 = vunpack.c.h.b16 %v1292
    %v2851 = vunpack.c.l.b16 %v1293
    %v2852 = vunpack.c.h.b16 %v1293
    %v2853 = vunpack.c.l.b16 %v1294
    %v2854 = vunpack.c.h.b16 %v1294
    %v2855 = vunpack.c.l.b16 %v1295
    %v2856 = vunpack.c.h.b16 %v1295
    %v2857 = vunpack.c.l.b16 %v1296
    %v2858 = vunpack.c.h.b16 %v1296
    %v2859 = vunpack.c.l.b16 %v1297
    %v2860 = vunpack.c.h.b16 %v1297
    %v2861 = vunpack.c.l.b16 %v1298
    %v2862 = vunpack.c.h.b16 %v1298
    %v2863 = vunpack.c.l.b16 %v1299
    %v2864 = vunpack.c.h.b16 %v1299
    %v2865 = vunpack.c.l.b16 %v1300
    %v2866 = vunpack.c.h.b16 %v1300
    %v2867 = vunpack.c.l.b16 %v1301
    %v2868 = vunpack.c.h.b16 %v1301
    %v2869 = vunpack.c.l.b16 %v1302
    %v2870 = vunpack.c.h.b16 %v1302
    %v2871 = vunpack.c.l.b16 %v1303
    %v2872 = vunpack.c.h.b16 %v1303
    %v2873 = vunpack.c.l.b16 %v1304
    %v2874 = vunpack.c.h.b16 %v1304
    %v2875 = vunpack.c.l.b16 %v1305
    %v2876 = vunpack.c.h.b16 %v1305
    %v2877 = vunpack.c.l.b16 %v1306
    %v2878 = vunpack.c.h.b16 %v1306
    %v2879 = vunpack.c.l.b16 %v1307
    %v2880 = vunpack.c.h.b16 %v1307
    %v2881 = vunpack.c.l.b16 %v1308
    %v2882 = vunpack.c.h.b16 %v1308
    %v2883 = vunpack.c.l.b16 %v1309
    %v2884 = vunpack.c.h.b16 %v1309
    %v2885 = vunpack.c.l.b16 %v1310
    %v2886 = vunpack.c.h.b16 %v1310
    %v2887 = vunpack.c.l.b16 %v1311
    %v2888 = vunpack.c.h.b16 %v1311
    %v2889 = vunpack.c.l.b16 %v1312
    %v2890 = vunpack.c.h.b16 %v1312
    %v2891 = vpack.c.b16 %v1875, %v1867
    %v2892 = vpack.c.b16 %v1876, %v1868
    %v2893 = vpack.c.b16 %v1877, %v1869
    %v2894 = vpack.c.b16 %v1878, %v1870
    %v2895 = vpack.c.b16 %v1879, %v1871
    %v2896 = vpack.c.b16 %v1880, %v1872
    %v2897 = vpack.c.b16 %v1881, %v1873
    %v2898 = vpack.c.b16 %v1882, %v1874
    %v2899 = vpack.c.b16 %v1891, %v1883
    %v2900 = vpack.c.b16 %v1892, %v1884
    %v2901 = vpack.c.b16 %v1893, %v1885
    %v2902 = vpack.c.b16 %v1894, %v1886
    %v2903 = vpack.c.b16 %v1895, %v1887
    %v2904 = vpack.c.b16 %v1896, %v1888
    %v2905 = vpack.c.b16 %v1897, %v1889
    %v2906 = vpack.c.b16 %v1898, %v1890
    %v2907 = vpack.c.b16 %v1907, %v1899
    %v2908 = vpack.c.b16 %v1908, %v1900
    %v2909 = vpack.c.b16 %v1909, %v1901
    %v2910 = vpack.c.b16 %v1910, %v1902
    %v2911 = vpack.c.b16 %v1911, %v1903
    %v2912 = vpack.c.b16 %v1912, %v1904
    %v2913 = vpack.c.b16 %v1913, %v1905
    %v2914 = vpack.c.b16 %v1914, %v1906
    %v2915 = vpack.c.b16 %v1923, %v1915
    %v2916 = vpack.c.b16 %v1924, %v1916
    %v2917 = vpack.c.b16 %v1925, %v1917
    %v2918 = vpack.c.b16 %v1926, %v1918
    %v2919 = vpack.c.b16 %v1927, %v1919
    %v2920 = vpack.c.b16 %v1928, %v1920
    %v2921 = vpack.c.b16 %v1929, %v1921
    %v2922 = vpack.c.b16 %v1930, %v1922
    %v2923 = vpack.c.b16 %v1939, %v1931
    %v2924 = vpack.c.b16 %v1940, %v1932
    %v2925 = vpack.c.b16 %v1941, %v1933
    %v2926 = vpack.c.b16 %v1942, %v1934
    %v2927 = vpack.c.b16 %v1943, %v1935
    %v2928 = vpack.c.b16 %v1944, %v1936
    %v2929 = vpack.c.b16 %v1945, %v1937
    %v2930 = vpack.c.b16 %v1946, %v1938
    %v2931 = vpack.c.b16 %v1955, %v1947
    %v2932 = vpack.c.b16 %v1956, %v1948
    %v2933 = vpack.c.b16 %v1957, %v1949
    %v2934 = vpack.c.b16 %v1958, %v1950
    %v2935 = vpack.c.b16 %v1959, %v1951
    %v2936 = vpack.c.b16 %v1960, %v1952
    %v2937 = vpack.c.b16 %v1961, %v1953
    %v2938 = vpack.c.b16 %v1962, %v1954
    %v2939 = vpack.c.b16 %v1971, %v1963
    %v2940 = vpack.c.b16 %v1972, %v1964
    %v2941 = vpack.c.b16 %v1973, %v1965
    %v2942 = vpack.c.b16 %v1974, %v1966
    %v2943 = vpack.c.b16 %v1975, %v1967
    %v2944 = vpack.c.b16 %v1976, %v1968
    %v2945 = vpack.c.b16 %v1977, %v1969
    %v2946 = vpack.c.b16 %v1978, %v1970
    %v2947 = vpack.c.b16 %v1987, %v1979
    %v2948 = vpack.c.b16 %v1988, %v1980
    %v2949 = vpack.c.b16 %v1989, %v1981
    %v2950 = vpack.c.b16 %v1990, %v1982
    %v2951 = vpack.c.b16 %v1991, %v1983
    %v2952 = vpack.c.b16 %v1992, %v1984
    %v2953 = vpack.c.b16 %v1993, %v1985
    %v2954 = vpack.c.b16 %v1994, %v1986
    %v2955 = vpack.c.b16 %v2003, %v1995
    %v2956 = vpack.c.b16 %v2004, %v1996
    %v2957 = vpack.c.b16 %v2005, %v1997
    %v2958 = vpack.c.b16 %v2006, %v1998
    %v2959 = vpack.c.b16 %v2007, %v1999
    %v2960 = vpack.c.b16 %v2008, %v2000
    %v2961 = vpack.c.b16 %v2009, %v2001
    %v2962 = vpack.c.b16 %v2010, %v2002
    %v2963 = vpack.c.b16 %v2019, %v2011
    %v2964 = vpack.c.b16 %v2020, %v2012
    %v2965 = vpack.c.b16 %v2021, %v2013
    %v2966 = vpack.c.b16 %v2022, %v2014
    %v2967 = vpack.c.b16 %v2023, %v2015
    %v2968 = vpack.c.b16 %v2024, %v2016
    %v2969 = vpack.c.b16 %v2025, %v2017
    %v2970 = vpack.c.b16 %v2026, %v2018
    %v2971 = vpack.c.b16 %v2035, %v2027
    %v2972 = vpack.c.b16 %v2036, %v2028
    %v2973 = vpack.c.b16 %v2037, %v2029
    %v2974 = vpack.c.b16 %v2038, %v2030
    %v2975 = vpack.c.b16 %v2039, %v2031
    %v2976 = vpack.c.b16 %v2040, %v2032
    %v2977 = vpack.c.b16 %v2041, %v2033
    %v2978 = vpack.c.b16 %v2042, %v2034
    %v2979 = vpack.c.b16 %v2051, %v2043
    %v2980 = vpack.c.b16 %v2052, %v2044
    %v2981 = vpack.c.b16 %v2053, %v2045
    %v2982 = vpack.c.b16 %v2054, %v2046
    %v2983 = vpack.c.b16 %v2055, %v2047
    %v2984 = vpack.c.b16 %v2056, %v2048
    %v2985 = vpack.c.b16 %v2057, %v2049
    %v2986 = vpack.c.b16 %v2058, %v2050
    %v2987 = vpack.c.b16 %v2067, %v2059
    %v2988 = vpack.c.b16 %v2068, %v2060
    %v2989 = vpack.c.b16 %v2069, %v2061
    %v2990 = vpack.c.b16 %v2070, %v2062
    %v2991 = vpack.c.b16 %v2071, %v2063
    %v2992 = vpack.c.b16 %v2072, %v2064
    %v2993 = vpack.c.b16 %v2073, %v2065
    %v2994 = vpack.c.b16 %v2074, %v2066
    %v2995 = vpack.c.b16 %v2083, %v2075
    %v2996 = vpack.c.b16 %v2084, %v2076
    %v2997 = vpack.c.b16 %v2085, %v2077
    %v2998 = vpack.c.b16 %v2086, %v2078
    %v2999 = vpack.c.b16 %v2087, %v2079
    %v3000 = vpack.c.b16 %v2088, %v2080
    %v3001 = vpack.c.b16 %v2089, %v2081
    %v3002 = vpack.c.b16 %v2090, %v2082
    %v3003 = vpack.c.b16 %v2099, %v2091
    %v3004 = vpack.c.b16 %v2100, %v2092
    %v3005 = vpack.c.b16 %v2101, %v2093
    %v3006 = vpack.c.b16 %v2102, %v2094
    %v3007 = vpack.c.b16 %v2103, %v2095
    %v3008 = vpack.c.b16 %v2104, %v2096
    %v3009 = vpack.c.b16 %v2105, %v2097
    %v3010 = vpack.c.b16 %v2106, %v2098
    %v3011 = vpack.c.b16 %v2115, %v2107
    %v3012 = vpack.c.b16 %v2116, %v2108
    %v3013 = vpack.c.b16 %v2117, %v2109
    %v3014 = vpack.c.b16 %v2118, %v2110
    %v3015 = vpack.c.b16 %v2119, %v2111
    %v3016 = vpack.c.b16 %v2120, %v2112
    %v3017 = vpack.c.b16 %v2121, %v2113
    %v3018 = vpack.c.b16 %v2122, %v2114
    %v3019 = vpack.c.b16 %v2131, %v2123
    %v3020 = vpack.c.b16 %v2132, %v2124
    %v3021 = vpack.c.b16 %v2133, %v2125
    %v3022 = vpack.c.b16 %v2134, %v2126
    %v3023 = vpack.c.b16 %v2135, %v2127
    %v3024 = vpack.c.b16 %v2136, %v2128
    %v3025 = vpack.c.b16 %v2137, %v2129
    %v3026 = vpack.c.b16 %v2138, %v2130
    %v3027 = vpack.c.b16 %v2147, %v2139
    %v3028 = vpack.c.b16 %v2148, %v2140
    %v3029 = vpack.c.b16 %v2149, %v2141
    %v3030 = vpack.c.b16 %v2150, %v2142
    %v3031 = vpack.c.b16 %v2151, %v2143
    %v3032 = vpack.c.b16 %v2152, %v2144
    %v3033 = vpack.c.b16 %v2153, %v2145
    %v3034 = vpack.c.b16 %v2154, %v2146
    %v3035 = vpack.c.b16 %v2163, %v2155
    %v3036 = vpack.c.b16 %v2164, %v2156
    %v3037 = vpack.c.b16 %v2165, %v2157
    %v3038 = vpack.c.b16 %v2166, %v2158
    %v3039 = vpack.c.b16 %v2167, %v2159
    %v3040 = vpack.c.b16 %v2168, %v2160
    %v3041 = vpack.c.b16 %v2169, %v2161
    %v3042 = vpack.c.b16 %v2170, %v2162
    %v3043 = vpack.c.b16 %v2179, %v2171
    %v3044 = vpack.c.b16 %v2180, %v2172
    %v3045 = vpack.c.b16 %v2181, %v2173
    %v3046 = vpack.c.b16 %v2182, %v2174
    %v3047 = vpack.c.b16 %v2183, %v2175
    %v3048 = vpack.c.b16 %v2184, %v2176
    %v3049 = vpack.c.b16 %v2185, %v2177
    %v3050 = vpack.c.b16 %v2186, %v2178
    %v3051 = vpack.c.b16 %v2195, %v2187
    %v3052 = vpack.c.b16 %v2196, %v2188
    %v3053 = vpack.c.b16 %v2197, %v2189
    %v3054 = vpack.c.b16 %v2198, %v2190
    %v3055 = vpack.c.b16 %v2199, %v2191
    %v3056 = vpack.c.b16 %v2200, %v2192
    %v3057 = vpack.c.b16 %v2201, %v2193
    %v3058 = vpack.c.b16 %v2202, %v2194
    %v3059 = vpack.c.b16 %v2211, %v2203
    %v3060 = vpack.c.b16 %v2212, %v2204
    %v3061 = vpack.c.b16 %v2213, %v2205
    %v3062 = vpack.c.b16 %v2214, %v2206
    %v3063 = vpack.c.b16 %v2215, %v2207
    %v3064 = vpack.c.b16 %v2216, %v2208
    %v3065 = vpack.c.b16 %v2217, %v2209
    %v3066 = vpack.c.b16 %v2218, %v2210
    %v3067 = vpack.c.b16 %v2227, %v2219
    %v3068 = vpack.c.b16 %v2228, %v2220
    %v3069 = vpack.c.b16 %v2229, %v2221
    %v3070 = vpack.c.b16 %v2230, %v2222
    %v3071 = vpack.c.b16 %v2231, %v2223
    %v3072 = vpack.c.b16 %v2232, %v2224
    %v3073 = vpack.c.b16 %v2233, %v2225
    %v3074 = vpack.c.b16 %v2234, %v2226
    %v3075 = vpack.c.b16 %v2243, %v2235
    %v3076 = vpack.c.b16 %v2244, %v2236
    %v3077 = vpack.c.b16 %v2245, %v2237
    %v3078 = vpack.c.b16 %v2246, %v2238
    %v3079 = vpack.c.b16 %v2247, %v2239
    %v3080 = vpack.c.b16 %v2248, %v2240
    %v3081 = vpack.c.b16 %v2249, %v2241
    %v3082 = vpack.c.b16 %v2250, %v2242
    %v3083 = vpack.c.b16 %v2259, %v2251
    %v3084 = vpack.c.b16 %v2260, %v2252
    %v3085 = vpack.c.b16 %v2261, %v2253
    %v3086 = vpack.c.b16 %v2262, %v2254
    %v3087 = vpack.c.b16 %v2263, %v2255
    %v3088 = vpack.c.b16 %v2264, %v2256
    %v3089 = vpack.c.b16 %v2265, %v2257
    %v3090 = vpack.c.b16 %v2266, %v2258
    %v3091 = vpack.c.b16 %v2275, %v2267
    %v3092 = vpack.c.b16 %v2276, %v2268
    %v3093 = vpack.c.b16 %v2277, %v2269
    %v3094 = vpack.c.b16 %v2278, %v2270
    %v3095 = vpack.c.b16 %v2279, %v2271
    %v3096 = vpack.c.b16 %v2280, %v2272
    %v3097 = vpack.c.b16 %v2281, %v2273
    %v3098 = vpack.c.b16 %v2282, %v2274
    %v3099 = vpack.c.b16 %v2291, %v2283
    %v3100 = vpack.c.b16 %v2292, %v2284
    %v3101 = vpack.c.b16 %v2293, %v2285
    %v3102 = vpack.c.b16 %v2294, %v2286
    %v3103 = vpack.c.b16 %v2295, %v2287
    %v3104 = vpack.c.b16 %v2296, %v2288
    %v3105 = vpack.c.b16 %v2297, %v2289
    %v3106 = vpack.c.b16 %v2298, %v2290
    %v3107 = vpack.c.b16 %v2307, %v2299
    %v3108 = vpack.c.b16 %v2308, %v2300
    %v3109 = vpack.c.b16 %v2309, %v2301
    %v3110 = vpack.c.b16 %v2310, %v2302
    %v3111 = vpack.c.b16 %v2311, %v2303
    %v3112 = vpack.c.b16 %v2312, %v2304
    %v3113 = vpack.c.b16 %v2313, %v2305
    %v3114 = vpack.c.b16 %v2314, %v2306
    %v3115 = vpack.c.b16 %v2323, %v2315
    %v3116 = vpack.c.b16 %v2324, %v2316
    %v3117 = vpack.c.b16 %v2325, %v2317
    %v3118 = vpack.c.b16 %v2326, %v2318
    %v3119 = vpack.c.b16 %v2327, %v2319
    %v3120 = vpack.c.b16 %v2328, %v2320
    %v3121 = vpack.c.b16 %v2329, %v2321
    %v3122 = vpack.c.b16 %v2330, %v2322
    %v3123 = vpack.c.b16 %v2339, %v2331
    %v3124 = vpack.c.b16 %v2340, %v2332
    %v3125 = vpack.c.b16 %v2341, %v2333
    %v3126 = vpack.c.b16 %v2342, %v2334
    %v3127 = vpack.c.b16 %v2343, %v2335
    %v3128 = vpack.c.b16 %v2344, %v2336
    %v3129 = vpack.c.b16 %v2345, %v2337
    %v3130 = vpack.c.b16 %v2346, %v2338
    %v3131 = vpack.c.b16 %v2355, %v2347
    %v3132 = vpack.c.b16 %v2356, %v2348
    %v3133 = vpack.c.b16 %v2357, %v2349
    %v3134 = vpack.c.b16 %v2358, %v2350
    %v3135 = vpack.c.b16 %v2359, %v2351
    %v3136 = vpack.c.b16 %v2360, %v2352
    %v3137 = vpack.c.b16 %v2361, %v2353
    %v3138 = vpack.c.b16 %v2362, %v2354
    %v3139 = vpack.c.b16 %v2371, %v2363
    %v3140 = vpack.c.b16 %v2372, %v2364
    %v3141 = vpack.c.b16 %v2373, %v2365
    %v3142 = vpack.c.b16 %v2374, %v2366
    %v3143 = vpack.c.b16 %v2375, %v2367
    %v3144 = vpack.c.b16 %v2376, %v2368
    %v3145 = vpack.c.b16 %v2377, %v2369
    %v3146 = vpack.c.b16 %v2378, %v2370
    %v3147 = vpack.c.b16 %v2387, %v2379
    %v3148 = vpack.c.b16 %v2388, %v2380
    %v3149 = vpack.c.b16 %v2389, %v2381
    %v3150 = vpack.c.b16 %v2390, %v2382
    %v3151 = vpack.c.b16 %v2391, %v2383
    %v3152 = vpack.c.b16 %v2392, %v2384
    %v3153 = vpack.c.b16 %v2393, %v2385
    %v3154 = vpack.c.b16 %v2394, %v2386
    %v3155 = vpack.c.b16 %v2403, %v2395
    %v3156 = vpack.c.b16 %v2404, %v2396
    %v3157 = vpack.c.b16 %v2405, %v2397
    %v3158 = vpack.c.b16 %v2406, %v2398
    %v3159 = vpack.c.b16 %v2407, %v2399
    %v3160 = vpack.c.b16 %v2408, %v2400
    %v3161 = vpack.c.b16 %v2409, %v2401
    %v3162 = vpack.c.b16 %v2410, %v2402
    %v3163 = vpack.c.b16 %v2419, %v2411
    %v3164 = vpack.c.b16 %v2420, %v2412
    %v3165 = vpack.c.b16 %v2421, %v2413
    %v3166 = vpack.c.b16 %v2422, %v2414
    %v3167 = vpack.c.b16 %v2423, %v2415
    %v3168 = vpack.c.b16 %v2424, %v2416
    %v3169 = vpack.c.b16 %v2425, %v2417
    %v3170 = vpack.c.b16 %v2426, %v2418
    %v3171 = vpack.c.b16 %v2435, %v2427
    %v3172 = vpack.c.b16 %v2436, %v2428
    %v3173 = vpack.c.b16 %v2437, %v2429
    %v3174 = vpack.c.b16 %v2438, %v2430
    %v3175 = vpack.c.b16 %v2439, %v2431
    %v3176 = vpack.c.b16 %v2440, %v2432
    %v3177 = vpack.c.b16 %v2441, %v2433
    %v3178 = vpack.c.b16 %v2442, %v2434
    %v3179 = vpack.c.b16 %v2451, %v2443
    %v3180 = vpack.c.b16 %v2452, %v2444
    %v3181 = vpack.c.b16 %v2453, %v2445
    %v3182 = vpack.c.b16 %v2454, %v2446
    %v3183 = vpack.c.b16 %v2455, %v2447
    %v3184 = vpack.c.b16 %v2456, %v2448
    %v3185 = vpack.c.b16 %v2457, %v2449
    %v3186 = vpack.c.b16 %v2458, %v2450
    %v3187 = vpack.c.b16 %v2467, %v2459
    %v3188 = vpack.c.b16 %v2468, %v2460
    %v3189 = vpack.c.b16 %v2469, %v2461
    %v3190 = vpack.c.b16 %v2470, %v2462
    %v3191 = vpack.c.b16 %v2471, %v2463
    %v3192 = vpack.c.b16 %v2472, %v2464
    %v3193 = vpack.c.b16 %v2473, %v2465
    %v3194 = vpack.c.b16 %v2474, %v2466
    %v3195 = vpack.c.b16 %v2483, %v2475
    %v3196 = vpack.c.b16 %v2484, %v2476
    %v3197 = vpack.c.b16 %v2485, %v2477
    %v3198 = vpack.c.b16 %v2486, %v2478
    %v3199 = vpack.c.b16 %v2487, %v2479
    %v3200 = vpack.c.b16 %v2488, %v2480
    %v3201 = vpack.c.b16 %v2489, %v2481
    %v3202 = vpack.c.b16 %v2490, %v2482
    %v3203 = vpack.c.b16 %v2499, %v2491
    %v3204 = vpack.c.b16 %v2500, %v2492
    %v3205 = vpack.c.b16 %v2501, %v2493
    %v3206 = vpack.c.b16 %v2502, %v2494
    %v3207 = vpack.c.b16 %v2503, %v2495
    %v3208 = vpack.c.b16 %v2504, %v2496
    %v3209 = vpack.c.b16 %v2505, %v2497
    %v3210 = vpack.c.b16 %v2506, %v2498
    %v3211 = vpack.c.b16 %v2515, %v2507
    %v3212 = vpack.c.b16 %v2516, %v2508
    %v3213 = vpack.c.b16 %v2517, %v2509
    %v3214 = vpack.c.b16 %v2518, %v2510
    %v3215 = vpack.c.b16 %v2519, %v2511
    %v3216 = vpack.c.b16 %v2520, %v2512
    %v3217 = vpack.c.b16 %v2521, %v2513
    %v3218 = vpack.c.b16 %v2522, %v2514
    %v3219 = vpack.c.b16 %v2531, %v2523
    %v3220 = vpack.c.b16 %v2532, %v2524
    %v3221 = vpack.c.b16 %v2533, %v2525
    %v3222 = vpack.c.b16 %v2534, %v2526
    %v3223 = vpack.c.b16 %v2535, %v2527
    %v3224 = vpack.c.b16 %v2536, %v2528
    %v3225 = vpack.c.b16 %v2537, %v2529
    %v3226 = vpack.c.b16 %v2538, %v2530
    %v3227 = vpack.c.b16 %v2547, %v2539
    %v3228 = vpack.c.b16 %v2548, %v2540
    %v3229 = vpack.c.b16 %v2549, %v2541
    %v3230 = vpack.c.b16 %v2550, %v2542
    %v3231 = vpack.c.b16 %v2551, %v2543
    %v3232 = vpack.c.b16 %v2552, %v2544
    %v3233 = vpack.c.b16 %v2553, %v2545
    %v3234 = vpack.c.b16 %v2554, %v2546
    %v3235 = vpack.c.b16 %v2563, %v2555
    %v3236 = vpack.c.b16 %v2564, %v2556
    %v3237 = vpack.c.b16 %v2565, %v2557
    %v3238 = vpack.c.b16 %v2566, %v2558
    %v3239 = vpack.c.b16 %v2567, %v2559
    %v3240 = vpack.c.b16 %v2568, %v2560
    %v3241 = vpack.c.b16 %v2569, %v2561
    %v3242 = vpack.c.b16 %v2570, %v2562
    %v3243 = vpack.c.b16 %v2579, %v2571
    %v3244 = vpack.c.b16 %v2580, %v2572
    %v3245 = vpack.c.b16 %v2581, %v2573
    %v3246 = vpack.c.b16 %v2582, %v2574
    %v3247 = vpack.c.b16 %v2583, %v2575
    %v3248 = vpack.c.b16 %v2584, %v2576
    %v3249 = vpack.c.b16 %v2585, %v2577
    %v3250 = vpack.c.b16 %v2586, %v2578
    %v3251 = vpack.c.b16 %v2595, %v2587
    %v3252 = vpack.c.b16 %v2596, %v2588
    %v3253 = vpack.c.b16 %v2597, %v2589
    %v3254 = vpack.c.b16 %v2598, %v2590
    %v3255 = vpack.c.b16 %v2599, %v2591
    %v3256 = vpack.c.b16 %v2600, %v2592
    %v3257 = vpack.c.b16 %v2601, %v2593
    %v3258 = vpack.c.b16 %v2602, %v2594
    %v3259 = vpack.c.b16 %v2611, %v2603
    %v3260 = vpack.c.b16 %v2612, %v2604
    %v3261 = vpack.c.b16 %v2613, %v2605
    %v3262 = vpack.c.b16 %v2614, %v2606
    %v3263 = vpack.c.b16 %v2615, %v2607
    %v3264 = vpack.c.b16 %v2616, %v2608
    %v3265 = vpack.c.b16 %v2617, %v2609
    %v3266 = vpack.c.b16 %v2618, %v2610
    %v3267 = vpack.c.b16 %v2627, %v2619
    %v3268 = vpack.c.b16 %v2628, %v2620
    %v3269 = vpack.c.b16 %v2629, %v2621
    %v3270 = vpack.c.b16 %v2630, %v2622
    %v3271 = vpack.c.b16 %v2631, %v2623
    %v3272 = vpack.c.b16 %v2632, %v2624
    %v3273 = vpack.c.b16 %v2633, %v2625
    %v3274 = vpack.c.b16 %v2634, %v2626
    %v3275 = vpack.c.b16 %v2643, %v2635
    %v3276 = vpack.c.b16 %v2644, %v2636
    %v3277 = vpack.c.b16 %v2645, %v2637
    %v3278 = vpack.c.b16 %v2646, %v2638
    %v3279 = vpack.c.b16 %v2647, %v2639
    %v3280 = vpack.c.b16 %v2648, %v2640
    %v3281 = vpack.c.b16 %v2649, %v2641
    %v3282 = vpack.c.b16 %v2650, %v2642
    %v3283 = vpack.c.b16 %v2659, %v2651
    %v3284 = vpack.c.b16 %v2660, %v2652
    %v3285 = vpack.c.b16 %v2661, %v2653
    %v3286 = vpack.c.b16 %v2662, %v2654
    %v3287 = vpack.c.b16 %v2663, %v2655
    %v3288 = vpack.c.b16 %v2664, %v2656
    %v3289 = vpack.c.b16 %v2665, %v2657
    %v3290 = vpack.c.b16 %v2666, %v2658
    %v3291 = vpack.c.b16 %v2675, %v2667
    %v3292 = vpack.c.b16 %v2676, %v2668
    %v3293 = vpack.c.b16 %v2677, %v2669
    %v3294 = vpack.c.b16 %v2678, %v2670
    %v3295 = vpack.c.b16 %v2679, %v2671
    %v3296 = vpack.c.b16 %v2680, %v2672
    %v3297 = vpack.c.b16 %v2681, %v2673
    %v3298 = vpack.c.b16 %v2682, %v2674
    %v3299 = vpack.c.b16 %v2691, %v2683
    %v3300 = vpack.c.b16 %v2692, %v2684
    %v3301 = vpack.c.b16 %v2693, %v2685
    %v3302 = vpack.c.b16 %v2694, %v2686
    %v3303 = vpack.c.b16 %v2695, %v2687
    %v3304 = vpack.c.b16 %v2696, %v2688
    %v3305 = vpack.c.b16 %v2697, %v2689
    %v3306 = vpack.c.b16 %v2698, %v2690
    %v3307 = vpack.c.b16 %v2707, %v2699
    %v3308 = vpack.c.b16 %v2708, %v2700
    %v3309 = vpack.c.b16 %v2709, %v2701
    %v3310 = vpack.c.b16 %v2710, %v2702
    %v3311 = vpack.c.b16 %v2711, %v2703
    %v3312 = vpack.c.b16 %v2712, %v2704
    %v3313 = vpack.c.b16 %v2713, %v2705
    %v3314 = vpack.c.b16 %v2714, %v2706
    %v3315 = vpack.c.b16 %v2723, %v2715
    %v3316 = vpack.c.b16 %v2724, %v2716
    %v3317 = vpack.c.b16 %v2725, %v2717
    %v3318 = vpack.c.b16 %v2726, %v2718
    %v3319 = vpack.c.b16 %v2727, %v2719
    %v3320 = vpack.c.b16 %v2728, %v2720
    %v3321 = vpack.c.b16 %v2729, %v2721
    %v3322 = vpack.c.b16 %v2730, %v2722
    %v3323 = vpack.c.b16 %v2739, %v2731
    %v3324 = vpack.c.b16 %v2740, %v2732
    %v3325 = vpack.c.b16 %v2741, %v2733
    %v3326 = vpack.c.b16 %v2742, %v2734
    %v3327 = vpack.c.b16 %v2743, %v2735
    %v3328 = vpack.c.b16 %v2744, %v2736
    %v3329 = vpack.c.b16 %v2745, %v2737
    %v3330 = vpack.c.b16 %v2746, %v2738
    %v3331 = vpack.c.b16 %v2755, %v2747
    %v3332 = vpack.c.b16 %v2756, %v2748
    %v3333 = vpack.c.b16 %v2757, %v2749
    %v3334 = vpack.c.b16 %v2758, %v2750
    %v3335 = vpack.c.b16 %v2759, %v2751
    %v3336 = vpack.c.b16 %v2760, %v2752
    %v3337 = vpack.c.b16 %v2761, %v2753
    %v3338 = vpack.c.b16 %v2762, %v2754
    %v3339 = vpack.c.b16 %v2771, %v2763
    %v3340 = vpack.c.b16 %v2772, %v2764
    %v3341 = vpack.c.b16 %v2773, %v2765
    %v3342 = vpack.c.b16 %v2774, %v2766
    %v3343 = vpack.c.b16 %v2775, %v2767
    %v3344 = vpack.c.b16 %v2776, %v2768
    %v3345 = vpack.c.b16 %v2777, %v2769
    %v3346 = vpack.c.b16 %v2778, %v2770
    %v3347 = vpack.c.b16 %v2787, %v2779
    %v3348 = vpack.c.b16 %v2788, %v2780
    %v3349 = vpack.c.b16 %v2789, %v2781
    %v3350 = vpack.c.b16 %v2790, %v2782
    %v3351 = vpack.c.b16 %v2791, %v2783
    %v3352 = vpack.c.b16 %v2792, %v2784
    %v3353 = vpack.c.b16 %v2793, %v2785
    %v3354 = vpack.c.b16 %v2794, %v2786
    %v3355 = vpack.c.b16 %v2803, %v2795
    %v3356 = vpack.c.b16 %v2804, %v2796
    %v3357 = vpack.c.b16 %v2805, %v2797
    %v3358 = vpack.c.b16 %v2806, %v2798
    %v3359 = vpack.c.b16 %v2807, %v2799
    %v3360 = vpack.c.b16 %v2808, %v2800
    %v3361 = vpack.c.b16 %v2809, %v2801
    %v3362 = vpack.c.b16 %v2810, %v2802
    %v3363 = vpack.c.b16 %v2819, %v2811
    %v3364 = vpack.c.b16 %v2820, %v2812
    %v3365 = vpack.c.b16 %v2821, %v2813
    %v3366 = vpack.c.b16 %v2822, %v2814
    %v3367 = vpack.c.b16 %v2823, %v2815
    %v3368 = vpack.c.b16 %v2824, %v2816
    %v3369 = vpack.c.b16 %v2825, %v2817
    %v3370 = vpack.c.b16 %v2826, %v2818
    %v3371 = vpack.c.b16 %v2835, %v2827
    %v3372 = vpack.c.b16 %v2836, %v2828
    %v3373 = vpack.c.b16 %v2837, %v2829
    %v3374 = vpack.c.b16 %v2838, %v2830
    %v3375 = vpack.c.b16 %v2839, %v2831
    %v3376 = vpack.c.b16 %v2840, %v2832
    %v3377 = vpack.c.b16 %v2841, %v2833
    %v3378 = vpack.c.b16 %v2842, %v2834
    %v3379 = vpack.c.b16 %v2851, %v2843
    %v3380 = vpack.c.b16 %v2852, %v2844
    %v3381 = vpack.c.b16 %v2853, %v2845
    %v3382 = vpack.c.b16 %v2854, %v2846
    %v3383 = vpack.c.b16 %v2855, %v2847
    %v3384 = vpack.c.b16 %v2856, %v2848
    %v3385 = vpack.c.b16 %v2857, %v2849
    %v3386 = vpack.c.b16 %v2858, %v2850
    %v3387 = vpack.c.b16 %v2867, %v2859
    %v3388 = vpack.c.b16 %v2868, %v2860
    %v3389 = vpack.c.b16 %v2869, %v2861
    %v3390 = vpack.c.b16 %v2870, %v2862
    %v3391 = vpack.c.b16 %v2871, %v2863
    %v3392 = vpack.c.b16 %v2872, %v2864
    %v3393 = vpack.c.b16 %v2873, %v2865
    %v3394 = vpack.c.b16 %v2874, %v2866
    %v3395 = vpack.c.b16 %v2883, %v2875
    %v3396 = vpack.c.b16 %v2884, %v2876
    %v3397 = vpack.c.b16 %v2885, %v2877
    %v3398 = vpack.c.b16 %v2886, %v2878
    %v3399 = vpack.c.b16 %v2887, %v2879
    %v3400 = vpack.c.b16 %v2888, %v2880
    %v3401 = vpack.c.b16 %v2889, %v2881
    %v3402 = vpack.c.b16 %v2890, %v2882
    %3915 = vmatprep.subr.bf16.mxu0 %v2948
    %3916 = vmatpush1.bf16.msra.mxu0 %v2947
    %3917 = vmatprep.subr.bf16.mxu0 %v2940
    %3918 = vmatpush1.bf16.msra.mxu0 %v2939
    %3919 = vmatprep.subr.bf16.mxu0 %v2932
    %3920 = vmatpush1.bf16.msra.mxu0 %v2931
    %3921 = vmatprep.subr.bf16.mxu0 %v2924
    %3922 = vmatpush1.bf16.msra.mxu0 %v2923
    %3923 = vmatprep.subr.bf16.mxu0 %v2916
    %3924 = vmatpush1.bf16.msra.mxu0 %v2915
    %3925 = vmatprep.subr.bf16.mxu0 %v2908
    %3926 = vmatpush1.bf16.msra.mxu0 %v2907
    %3927 = vmatprep.subr.bf16.mxu0 %v2900
    %3928 = vmatpush1.bf16.msra.mxu0 %v2899
    %3929 = vmatprep.subr.bf16.mxu0 %v2892
    %3930 = vmatpush1.bf16.msra.mxu0 %v2891
    %3931 = vmatprep.subr.bf16.mxu0 %v3012
    %3932 = vmatpush2.bf16.msra.mxu0 %v3011
    %3933 = vmatprep.subr.bf16.mxu0 %v3004
    %3934 = vmatpush2.bf16.msra.mxu0 %v3003
    %3935 = vmatprep.subr.bf16.mxu0 %v2996
    %3936 = vmatpush2.bf16.msra.mxu0 %v2995
    %3937 = vmatprep.subr.bf16.mxu0 %v2988
    %3938 = vmatpush2.bf16.msra.mxu0 %v2987
    %3939 = vmatprep.subr.bf16.mxu0 %v2980
    %3940 = vmatpush2.bf16.msra.mxu0 %v2979
    %3941 = vmatprep.subr.bf16.mxu0 %v2972
    %3942 = vmatpush2.bf16.msra.mxu0 %v2971
    %3943 = vmatprep.subr.bf16.mxu0 %v2964
    %3944 = vmatpush2.bf16.msra.mxu0 %v2963
    %3945 = vmatprep.subr.bf16.mxu0 %v2956
    %3946 = vmatpush2.bf16.msra.mxu0 %v2955
    %3947 = vmatprep.mubr.bf16.mxu0 %v794
    %3948 = vmatmul.mubr.bf16.gmra.mxu0 %v793
    %v3949 = vpop.f32.mrf.mxu0
    %v3950 = vadd.f32 %v1318, %v3949
    %v3951 = vpop.f32.mrf.mxu0
    %v3952 = vadd.f32 %v1322, %v3951
    %v3953 = vpop.f32.mrf.mxu0
    %v3954 = vpop.f32.mrf.mxu0
    %3955 = vdwg.mxu0
    %3956 = vmatprep.subr.bf16.mxu0 %v3076
    %3957 = vmatpush1.bf16.msra.mxu0 %v3075
    %3958 = vmatprep.subr.bf16.mxu0 %v3068
    %3959 = vmatpush1.bf16.msra.mxu0 %v3067
    %3960 = vmatprep.subr.bf16.mxu0 %v3060
    %3961 = vmatpush1.bf16.msra.mxu0 %v3059
    %3962 = vmatprep.subr.bf16.mxu0 %v3052
    %3963 = vmatpush1.bf16.msra.mxu0 %v3051
    %3964 = vmatprep.subr.bf16.mxu0 %v3044
    %3965 = vmatpush1.bf16.msra.mxu0 %v3043
    %3966 = vmatprep.subr.bf16.mxu0 %v3036
    %3967 = vmatpush1.bf16.msra.mxu0 %v3035
    %3968 = vmatprep.subr.bf16.mxu0 %v3028
    %3969 = vmatpush1.bf16.msra.mxu0 %v3027
    %3970 = vmatprep.subr.bf16.mxu0 %v3020
    %3971 = vmatpush1.bf16.msra.mxu0 %v3019
    %3972 = vmatprep.subr.bf16.mxu0 %v3140
    %3973 = vmatpush2.bf16.msra.mxu0 %v3139
    %3974 = vmatprep.subr.bf16.mxu0 %v3132
    %3975 = vmatpush2.bf16.msra.mxu0 %v3131
    %3976 = vmatprep.subr.bf16.mxu0 %v3124
    %3977 = vmatpush2.bf16.msra.mxu0 %v3123
    %3978 = vmatprep.subr.bf16.mxu0 %v3116
    %3979 = vmatpush2.bf16.msra.mxu0 %v3115
    %3980 = vmatprep.subr.bf16.mxu0 %v3108
    %3981 = vmatpush2.bf16.msra.mxu0 %v3107
    %3982 = vmatprep.subr.bf16.mxu0 %v3100
    %3983 = vmatpush2.bf16.msra.mxu0 %v3099
    %3984 = vmatprep.subr.bf16.mxu0 %v3092
    %3985 = vmatpush2.bf16.msra.mxu0 %v3091
    %3986 = vmatprep.subr.bf16.mxu0 %v3084
    %3987 = vmatpush2.bf16.msra.mxu0 %v3083
    %3988 = vmatprep.mubr.bf16.mxu0 %v796
    %3989 = vmatmul.mubr.bf16.gmra.mxu0 %v795
    %v3990 = vpop.f32.mrf.mxu0
    %v3991 = vadd.f32 %v3950, %v3990
    %v3992 = vpop.f32.mrf.mxu0
    %v3993 = vadd.f32 %v3952, %v3992
    %v3994 = vpop.f32.mrf.mxu0
    %v3995 = vpop.f32.mrf.mxu0
    %3996 = vdwg.mxu0
    %3997 = vmatprep.subr.bf16.mxu0 %v3204
    %3998 = vmatpush1.bf16.msra.mxu0 %v3203
    %3999 = vmatprep.subr.bf16.mxu0 %v3196
    %4000 = vmatpush1.bf16.msra.mxu0 %v3195
    %4001 = vmatprep.subr.bf16.mxu0 %v3188
    %4002 = vmatpush1.bf16.msra.mxu0 %v3187
    %4003 = vmatprep.subr.bf16.mxu0 %v3180
    %4004 = vmatpush1.bf16.msra.mxu0 %v3179
    %4005 = vmatprep.subr.bf16.mxu0 %v3172
    %4006 = vmatpush1.bf16.msra.mxu0 %v3171
    %4007 = vmatprep.subr.bf16.mxu0 %v3164
    %4008 = vmatpush1.bf16.msra.mxu0 %v3163
    %4009 = vmatprep.subr.bf16.mxu0 %v3156
    %4010 = vmatpush1.bf16.msra.mxu0 %v3155
    %4011 = vmatprep.subr.bf16.mxu0 %v3148
    %4012 = vmatpush1.bf16.msra.mxu0 %v3147
    %4013 = vmatprep.subr.bf16.mxu0 %v3268
    %4014 = vmatpush2.bf16.msra.mxu0 %v3267
    %4015 = vmatprep.subr.bf16.mxu0 %v3260
    %4016 = vmatpush2.bf16.msra.mxu0 %v3259
    %4017 = vmatprep.subr.bf16.mxu0 %v3252
    %4018 = vmatpush2.bf16.msra.mxu0 %v3251
    %4019 = vmatprep.subr.bf16.mxu0 %v3244
    %4020 = vmatpush2.bf16.msra.mxu0 %v3243
    %4021 = vmatprep.subr.bf16.mxu0 %v3236
    %4022 = vmatpush2.bf16.msra.mxu0 %v3235
    %4023 = vmatprep.subr.bf16.mxu0 %v3228
    %4024 = vmatpush2.bf16.msra.mxu0 %v3227
    %4025 = vmatprep.subr.bf16.mxu0 %v3220
    %4026 = vmatpush2.bf16.msra.mxu0 %v3219
    %4027 = vmatprep.subr.bf16.mxu0 %v3212
    %4028 = vmatpush2.bf16.msra.mxu0 %v3211
    %4029 = vmatprep.mubr.bf16.mxu0 %v798
    %4030 = vmatmul.mubr.bf16.gmra.mxu0 %v797
    %v4031 = vpop.f32.mrf.mxu0
    %v4032 = vadd.f32 %v3991, %v4031
    %v4033 = vpop.f32.mrf.mxu0
    %v4034 = vadd.f32 %v3993, %v4033
    %v4035 = vpop.f32.mrf.mxu0
    %v4036 = vpop.f32.mrf.mxu0
    %4037 = vdwg.mxu0
    %4038 = vmatprep.subr.bf16.mxu0 %v3332
    %4039 = vmatpush1.bf16.msra.mxu0 %v3331
    %4040 = vmatprep.subr.bf16.mxu0 %v3324
    %4041 = vmatpush1.bf16.msra.mxu0 %v3323
    %4042 = vmatprep.subr.bf16.mxu0 %v3316
    %4043 = vmatpush1.bf16.msra.mxu0 %v3315
    %4044 = vmatprep.subr.bf16.mxu0 %v3308
    %4045 = vmatpush1.bf16.msra.mxu0 %v3307
    %4046 = vmatprep.subr.bf16.mxu0 %v3300
    %4047 = vmatpush1.bf16.msra.mxu0 %v3299
    %4048 = vmatprep.subr.bf16.mxu0 %v3292
    %4049 = vmatpush1.bf16.msra.mxu0 %v3291
    %4050 = vmatprep.subr.bf16.mxu0 %v3284
    %4051 = vmatpush1.bf16.msra.mxu0 %v3283
    %4052 = vmatprep.subr.bf16.mxu0 %v3276
    %4053 = vmatpush1.bf16.msra.mxu0 %v3275
    %4054 = vmatprep.subr.bf16.mxu0 %v3396
    %4055 = vmatpush2.bf16.msra.mxu0 %v3395
    %4056 = vmatprep.subr.bf16.mxu0 %v3388
    %4057 = vmatpush2.bf16.msra.mxu0 %v3387
    %4058 = vmatprep.subr.bf16.mxu0 %v3380
    %4059 = vmatpush2.bf16.msra.mxu0 %v3379
    %4060 = vmatprep.subr.bf16.mxu0 %v3372
    %4061 = vmatpush2.bf16.msra.mxu0 %v3371
    %4062 = vmatprep.subr.bf16.mxu0 %v3364
    %4063 = vmatpush2.bf16.msra.mxu0 %v3363
    %4064 = vmatprep.subr.bf16.mxu0 %v3356
    %4065 = vmatpush2.bf16.msra.mxu0 %v3355
    %4066 = vmatprep.subr.bf16.mxu0 %v3348
    %4067 = vmatpush2.bf16.msra.mxu0 %v3347
    %4068 = vmatprep.subr.bf16.mxu0 %v3340
    %4069 = vmatpush2.bf16.msra.mxu0 %v3339
    %4070 = vmatprep.mubr.bf16.mxu0 %v800
    %4071 = vmatmul.mubr.bf16.gmra.mxu0 %v799
    %v4072 = vpop.f32.mrf.mxu0
    %v4073 = vadd.f32 %v4032, %v4072
    %v4074 = vpop.f32.mrf.mxu0
    %v4075 = vadd.f32 %v4034, %v4074
    %v4076 = vpop.f32.mrf.mxu0
    %v4077 = vpop.f32.mrf.mxu0
    %4078 = vdwg.mxu0
    %4079 = vmatprep.subr.bf16.mxu0 %v2950
    %4080 = vmatpush1.bf16.msra.mxu0 %v2949
    %4081 = vmatprep.subr.bf16.mxu0 %v2942
    %4082 = vmatpush1.bf16.msra.mxu0 %v2941
    %4083 = vmatprep.subr.bf16.mxu0 %v2934
    %4084 = vmatpush1.bf16.msra.mxu0 %v2933
    %4085 = vmatprep.subr.bf16.mxu0 %v2926
    %4086 = vmatpush1.bf16.msra.mxu0 %v2925
    %4087 = vmatprep.subr.bf16.mxu0 %v2918
    %4088 = vmatpush1.bf16.msra.mxu0 %v2917
    %4089 = vmatprep.subr.bf16.mxu0 %v2910
    %4090 = vmatpush1.bf16.msra.mxu0 %v2909
    %4091 = vmatprep.subr.bf16.mxu0 %v2902
    %4092 = vmatpush1.bf16.msra.mxu0 %v2901
    %4093 = vmatprep.subr.bf16.mxu0 %v2894
    %4094 = vmatpush1.bf16.msra.mxu0 %v2893
    %4095 = vmatprep.subr.bf16.mxu0 %v3014
    %4096 = vmatpush2.bf16.msra.mxu0 %v3013
    %4097 = vmatprep.subr.bf16.mxu0 %v3006
    %4098 = vmatpush2.bf16.msra.mxu0 %v3005
    %4099 = vmatprep.subr.bf16.mxu0 %v2998
    %4100 = vmatpush2.bf16.msra.mxu0 %v2997
    %4101 = vmatprep.subr.bf16.mxu0 %v2990
    %4102 = vmatpush2.bf16.msra.mxu0 %v2989
    %4103 = vmatprep.subr.bf16.mxu0 %v2982
    %4104 = vmatpush2.bf16.msra.mxu0 %v2981
    %4105 = vmatprep.subr.bf16.mxu0 %v2974
    %4106 = vmatpush2.bf16.msra.mxu0 %v2973
    %4107 = vmatprep.subr.bf16.mxu0 %v2966
    %4108 = vmatpush2.bf16.msra.mxu0 %v2965
    %4109 = vmatprep.subr.bf16.mxu0 %v2958
    %4110 = vmatpush2.bf16.msra.mxu0 %v2957
    %4111 = vmatprep.mubr.bf16.mxu0 %v794
    %4112 = vmatmul.mubr.bf16.gmra.mxu0 %v793
    %v4113 = vpop.f32.mrf.mxu0
    %v4114 = vadd.f32 %v1326, %v4113
    %v4115 = vpop.f32.mrf.mxu0
    %v4116 = vadd.f32 %v1330, %v4115
    %v4117 = vpop.f32.mrf.mxu0
    %v4118 = vpop.f32.mrf.mxu0
    %4119 = vdwg.mxu0
    %4120 = vmatprep.subr.bf16.mxu0 %v3078
    %4121 = vmatpush1.bf16.msra.mxu0 %v3077
    %4122 = vmatprep.subr.bf16.mxu0 %v3070
    %4123 = vmatpush1.bf16.msra.mxu0 %v3069
    %4124 = vmatprep.subr.bf16.mxu0 %v3062
    %4125 = vmatpush1.bf16.msra.mxu0 %v3061
    %4126 = vmatprep.subr.bf16.mxu0 %v3054
    %4127 = vmatpush1.bf16.msra.mxu0 %v3053
    %4128 = vmatprep.subr.bf16.mxu0 %v3046
    %4129 = vmatpush1.bf16.msra.mxu0 %v3045
    %4130 = vmatprep.subr.bf16.mxu0 %v3038
    %4131 = vmatpush1.bf16.msra.mxu0 %v3037
    %4132 = vmatprep.subr.bf16.mxu0 %v3030
    %4133 = vmatpush1.bf16.msra.mxu0 %v3029
    %4134 = vmatprep.subr.bf16.mxu0 %v3022
    %4135 = vmatpush1.bf16.msra.mxu0 %v3021
    %4136 = vmatprep.subr.bf16.mxu0 %v3142
    %4137 = vmatpush2.bf16.msra.mxu0 %v3141
    %4138 = vmatprep.subr.bf16.mxu0 %v3134
    %4139 = vmatpush2.bf16.msra.mxu0 %v3133
    %4140 = vmatprep.subr.bf16.mxu0 %v3126
    %4141 = vmatpush2.bf16.msra.mxu0 %v3125
    %4142 = vmatprep.subr.bf16.mxu0 %v3118
    %4143 = vmatpush2.bf16.msra.mxu0 %v3117
    %4144 = vmatprep.subr.bf16.mxu0 %v3110
    %4145 = vmatpush2.bf16.msra.mxu0 %v3109
    %4146 = vmatprep.subr.bf16.mxu0 %v3102
    %4147 = vmatpush2.bf16.msra.mxu0 %v3101
    %4148 = vmatprep.subr.bf16.mxu0 %v3094
    %4149 = vmatpush2.bf16.msra.mxu0 %v3093
    %4150 = vmatprep.subr.bf16.mxu0 %v3086
    %4151 = vmatpush2.bf16.msra.mxu0 %v3085
    %4152 = vmatprep.mubr.bf16.mxu0 %v796
    %4153 = vmatmul.mubr.bf16.gmra.mxu0 %v795
    %v4154 = vpop.f32.mrf.mxu0
    %v4155 = vadd.f32 %v4114, %v4154
    %v4156 = vpop.f32.mrf.mxu0
    %v4157 = vadd.f32 %v4116, %v4156
    %v4158 = vpop.f32.mrf.mxu0
    %v4159 = vpop.f32.mrf.mxu0
    %4160 = vdwg.mxu0
    %4161 = vmatprep.subr.bf16.mxu0 %v3206
    %4162 = vmatpush1.bf16.msra.mxu0 %v3205
    %4163 = vmatprep.subr.bf16.mxu0 %v3198
    %4164 = vmatpush1.bf16.msra.mxu0 %v3197
    %4165 = vmatprep.subr.bf16.mxu0 %v3190
    %4166 = vmatpush1.bf16.msra.mxu0 %v3189
    %4167 = vmatprep.subr.bf16.mxu0 %v3182
    %4168 = vmatpush1.bf16.msra.mxu0 %v3181
    %4169 = vmatprep.subr.bf16.mxu0 %v3174
    %4170 = vmatpush1.bf16.msra.mxu0 %v3173
    %4171 = vmatprep.subr.bf16.mxu0 %v3166
    %4172 = vmatpush1.bf16.msra.mxu0 %v3165
    %4173 = vmatprep.subr.bf16.mxu0 %v3158
    %4174 = vmatpush1.bf16.msra.mxu0 %v3157
    %4175 = vmatprep.subr.bf16.mxu0 %v3150
    %4176 = vmatpush1.bf16.msra.mxu0 %v3149
    %4177 = vmatprep.subr.bf16.mxu0 %v3270
    %4178 = vmatpush2.bf16.msra.mxu0 %v3269
    %4179 = vmatprep.subr.bf16.mxu0 %v3262
    %4180 = vmatpush2.bf16.msra.mxu0 %v3261
    %4181 = vmatprep.subr.bf16.mxu0 %v3254
    %4182 = vmatpush2.bf16.msra.mxu0 %v3253
    %4183 = vmatprep.subr.bf16.mxu0 %v3246
    %4184 = vmatpush2.bf16.msra.mxu0 %v3245
    %4185 = vmatprep.subr.bf16.mxu0 %v3238
    %4186 = vmatpush2.bf16.msra.mxu0 %v3237
    %4187 = vmatprep.subr.bf16.mxu0 %v3230
    %4188 = vmatpush2.bf16.msra.mxu0 %v3229
    %4189 = vmatprep.subr.bf16.mxu0 %v3222
    %4190 = vmatpush2.bf16.msra.mxu0 %v3221
    %4191 = vmatprep.subr.bf16.mxu0 %v3214
    %4192 = vmatpush2.bf16.msra.mxu0 %v3213
    %4193 = vmatprep.mubr.bf16.mxu0 %v798
    %4194 = vmatmul.mubr.bf16.gmra.mxu0 %v797
    %v4195 = vpop.f32.mrf.mxu0
    %v4196 = vadd.f32 %v4155, %v4195
    %v4197 = vpop.f32.mrf.mxu0
    %v4198 = vadd.f32 %v4157, %v4197
    %v4199 = vpop.f32.mrf.mxu0
    %v4200 = vpop.f32.mrf.mxu0
    %4201 = vdwg.mxu0
    %4202 = vmatprep.subr.bf16.mxu0 %v3334
    %4203 = vmatpush1.bf16.msra.mxu0 %v3333
    %4204 = vmatprep.subr.bf16.mxu0 %v3326
    %4205 = vmatpush1.bf16.msra.mxu0 %v3325
    %4206 = vmatprep.subr.bf16.mxu0 %v3318
    %4207 = vmatpush1.bf16.msra.mxu0 %v3317
    %4208 = vmatprep.subr.bf16.mxu0 %v3310
    %4209 = vmatpush1.bf16.msra.mxu0 %v3309
    %4210 = vmatprep.subr.bf16.mxu0 %v3302
    %4211 = vmatpush1.bf16.msra.mxu0 %v3301
    %4212 = vmatprep.subr.bf16.mxu0 %v3294
    %4213 = vmatpush1.bf16.msra.mxu0 %v3293
    %4214 = vmatprep.subr.bf16.mxu0 %v3286
    %4215 = vmatpush1.bf16.msra.mxu0 %v3285
    %4216 = vmatprep.subr.bf16.mxu0 %v3278
    %4217 = vmatpush1.bf16.msra.mxu0 %v3277
    %4218 = vmatprep.subr.bf16.mxu0 %v3398
    %4219 = vmatpush2.bf16.msra.mxu0 %v3397
    %4220 = vmatprep.subr.bf16.mxu0 %v3390
    %4221 = vmatpush2.bf16.msra.mxu0 %v3389
    %4222 = vmatprep.subr.bf16.mxu0 %v3382
    %4223 = vmatpush2.bf16.msra.mxu0 %v3381
    %4224 = vmatprep.subr.bf16.mxu0 %v3374
    %4225 = vmatpush2.bf16.msra.mxu0 %v3373
    %4226 = vmatprep.subr.bf16.mxu0 %v3366
    %4227 = vmatpush2.bf16.msra.mxu0 %v3365
    %4228 = vmatprep.subr.bf16.mxu0 %v3358
    %4229 = vmatpush2.bf16.msra.mxu0 %v3357
    %4230 = vmatprep.subr.bf16.mxu0 %v3350
    %4231 = vmatpush2.bf16.msra.mxu0 %v3349
    %4232 = vmatprep.subr.bf16.mxu0 %v3342
    %4233 = vmatpush2.bf16.msra.mxu0 %v3341
    %4234 = vmatprep.mubr.bf16.mxu0 %v800
    %4235 = vmatmul.mubr.bf16.gmra.mxu0 %v799
    %v4236 = vpop.f32.mrf.mxu0
    %v4237 = vadd.f32 %v4196, %v4236
    %v4238 = vpop.f32.mrf.mxu0
    %v4239 = vadd.f32 %v4198, %v4238
    %v4240 = vpop.f32.mrf.mxu0
    %v4241 = vpop.f32.mrf.mxu0
    %4242 = vdwg.mxu0
    %4243 = vmatprep.subr.bf16.mxu0 %v2952
    %4244 = vmatpush1.bf16.msra.mxu0 %v2951
    %4245 = vmatprep.subr.bf16.mxu0 %v2944
    %4246 = vmatpush1.bf16.msra.mxu0 %v2943
    %4247 = vmatprep.subr.bf16.mxu0 %v2936
    %4248 = vmatpush1.bf16.msra.mxu0 %v2935
    %4249 = vmatprep.subr.bf16.mxu0 %v2928
    %4250 = vmatpush1.bf16.msra.mxu0 %v2927
    %4251 = vmatprep.subr.bf16.mxu0 %v2920
    %4252 = vmatpush1.bf16.msra.mxu0 %v2919
    %4253 = vmatprep.subr.bf16.mxu0 %v2912
    %4254 = vmatpush1.bf16.msra.mxu0 %v2911
    %4255 = vmatprep.subr.bf16.mxu0 %v2904
    %4256 = vmatpush1.bf16.msra.mxu0 %v2903
    %4257 = vmatprep.subr.bf16.mxu0 %v2896
    %4258 = vmatpush1.bf16.msra.mxu0 %v2895
    %4259 = vmatprep.subr.bf16.mxu0 %v3016
    %4260 = vmatpush2.bf16.msra.mxu0 %v3015
    %4261 = vmatprep.subr.bf16.mxu0 %v3008
    %4262 = vmatpush2.bf16.msra.mxu0 %v3007
    %4263 = vmatprep.subr.bf16.mxu0 %v3000
    %4264 = vmatpush2.bf16.msra.mxu0 %v2999
    %4265 = vmatprep.subr.bf16.mxu0 %v2992
    %4266 = vmatpush2.bf16.msra.mxu0 %v2991
    %4267 = vmatprep.subr.bf16.mxu0 %v2984
    %4268 = vmatpush2.bf16.msra.mxu0 %v2983
    %4269 = vmatprep.subr.bf16.mxu0 %v2976
    %4270 = vmatpush2.bf16.msra.mxu0 %v2975
    %4271 = vmatprep.subr.bf16.mxu0 %v2968
    %4272 = vmatpush2.bf16.msra.mxu0 %v2967
    %4273 = vmatprep.subr.bf16.mxu0 %v2960
    %4274 = vmatpush2.bf16.msra.mxu0 %v2959
    %4275 = vmatprep.mubr.bf16.mxu0 %v794
    %4276 = vmatmul.mubr.bf16.gmra.mxu0 %v793
    %v4277 = vpop.f32.mrf.mxu0
    %v4278 = vadd.f32 %v1334, %v4277
    %v4279 = vpop.f32.mrf.mxu0
    %v4280 = vadd.f32 %v1338, %v4279
    %v4281 = vpop.f32.mrf.mxu0
    %v4282 = vpop.f32.mrf.mxu0
    %4283 = vdwg.mxu0
    %4284 = vmatprep.subr.bf16.mxu0 %v3080
    %4285 = vmatpush1.bf16.msra.mxu0 %v3079
    %4286 = vmatprep.subr.bf16.mxu0 %v3072
    %4287 = vmatpush1.bf16.msra.mxu0 %v3071
    %4288 = vmatprep.subr.bf16.mxu0 %v3064
    %4289 = vmatpush1.bf16.msra.mxu0 %v3063
    %4290 = vmatprep.subr.bf16.mxu0 %v3056
    %4291 = vmatpush1.bf16.msra.mxu0 %v3055
    %4292 = vmatprep.subr.bf16.mxu0 %v3048
    %4293 = vmatpush1.bf16.msra.mxu0 %v3047
    %4294 = vmatprep.subr.bf16.mxu0 %v3040
    %4295 = vmatpush1.bf16.msra.mxu0 %v3039
    %4296 = vmatprep.subr.bf16.mxu0 %v3032
    %4297 = vmatpush1.bf16.msra.mxu0 %v3031
    %4298 = vmatprep.subr.bf16.mxu0 %v3024
    %4299 = vmatpush1.bf16.msra.mxu0 %v3023
    %4300 = vmatprep.subr.bf16.mxu0 %v3144
    %4301 = vmatpush2.bf16.msra.mxu0 %v3143
    %4302 = vmatprep.subr.bf16.mxu0 %v3136
    %4303 = vmatpush2.bf16.msra.mxu0 %v3135
    %4304 = vmatprep.subr.bf16.mxu0 %v3128
    %4305 = vmatpush2.bf16.msra.mxu0 %v3127
    %4306 = vmatprep.subr.bf16.mxu0 %v3120
    %4307 = vmatpush2.bf16.msra.mxu0 %v3119
    %4308 = vmatprep.subr.bf16.mxu0 %v3112
    %4309 = vmatpush2.bf16.msra.mxu0 %v3111
    %4310 = vmatprep.subr.bf16.mxu0 %v3104
    %4311 = vmatpush2.bf16.msra.mxu0 %v3103
    %4312 = vmatprep.subr.bf16.mxu0 %v3096
    %4313 = vmatpush2.bf16.msra.mxu0 %v3095
    %4314 = vmatprep.subr.bf16.mxu0 %v3088
    %4315 = vmatpush2.bf16.msra.mxu0 %v3087
    %4316 = vmatprep.mubr.bf16.mxu0 %v796
    %4317 = vmatmul.mubr.bf16.gmra.mxu0 %v795
    %v4318 = vpop.f32.mrf.mxu0
    %v4319 = vadd.f32 %v4278, %v4318
    %v4320 = vpop.f32.mrf.mxu0
    %v4321 = vadd.f32 %v4280, %v4320
    %v4322 = vpop.f32.mrf.mxu0
    %v4323 = vpop.f32.mrf.mxu0
    %4324 = vdwg.mxu0
    %4325 = vmatprep.subr.bf16.mxu0 %v3208
    %4326 = vmatpush1.bf16.msra.mxu0 %v3207
    %4327 = vmatprep.subr.bf16.mxu0 %v3200
    %4328 = vmatpush1.bf16.msra.mxu0 %v3199
    %4329 = vmatprep.subr.bf16.mxu0 %v3192
    %4330 = vmatpush1.bf16.msra.mxu0 %v3191
    %4331 = vmatprep.subr.bf16.mxu0 %v3184
    %4332 = vmatpush1.bf16.msra.mxu0 %v3183
    %4333 = vmatprep.subr.bf16.mxu0 %v3176
    %4334 = vmatpush1.bf16.msra.mxu0 %v3175
    %4335 = vmatprep.subr.bf16.mxu0 %v3168
    %4336 = vmatpush1.bf16.msra.mxu0 %v3167
    %4337 = vmatprep.subr.bf16.mxu0 %v3160
    %4338 = vmatpush1.bf16.msra.mxu0 %v3159
    %4339 = vmatprep.subr.bf16.mxu0 %v3152
    %4340 = vmatpush1.bf16.msra.mxu0 %v3151
    %4341 = vmatprep.subr.bf16.mxu0 %v3272
    %4342 = vmatpush2.bf16.msra.mxu0 %v3271
    %4343 = vmatprep.subr.bf16.mxu0 %v3264
    %4344 = vmatpush2.bf16.msra.mxu0 %v3263
    %4345 = vmatprep.subr.bf16.mxu0 %v3256
    %4346 = vmatpush2.bf16.msra.mxu0 %v3255
    %4347 = vmatprep.subr.bf16.mxu0 %v3248
    %4348 = vmatpush2.bf16.msra.mxu0 %v3247
    %4349 = vmatprep.subr.bf16.mxu0 %v3240
    %4350 = vmatpush2.bf16.msra.mxu0 %v3239
    %4351 = vmatprep.subr.bf16.mxu0 %v3232
    %4352 = vmatpush2.bf16.msra.mxu0 %v3231
    %4353 = vmatprep.subr.bf16.mxu0 %v3224
    %4354 = vmatpush2.bf16.msra.mxu0 %v3223
    %4355 = vmatprep.subr.bf16.mxu0 %v3216
    %4356 = vmatpush2.bf16.msra.mxu0 %v3215
    %4357 = vmatprep.mubr.bf16.mxu0 %v798
    %4358 = vmatmul.mubr.bf16.gmra.mxu0 %v797
    %v4359 = vpop.f32.mrf.mxu0
    %v4360 = vadd.f32 %v4319, %v4359
    %v4361 = vpop.f32.mrf.mxu0
    %v4362 = vadd.f32 %v4321, %v4361
    %v4363 = vpop.f32.mrf.mxu0
    %v4364 = vpop.f32.mrf.mxu0
    %4365 = vdwg.mxu0
    %4366 = vmatprep.subr.bf16.mxu0 %v3336
    %4367 = vmatpush1.bf16.msra.mxu0 %v3335
    %4368 = vmatprep.subr.bf16.mxu0 %v3328
    %4369 = vmatpush1.bf16.msra.mxu0 %v3327
    %4370 = vmatprep.subr.bf16.mxu0 %v3320
    %4371 = vmatpush1.bf16.msra.mxu0 %v3319
    %4372 = vmatprep.subr.bf16.mxu0 %v3312
    %4373 = vmatpush1.bf16.msra.mxu0 %v3311
    %4374 = vmatprep.subr.bf16.mxu0 %v3304
    %4375 = vmatpush1.bf16.msra.mxu0 %v3303
    %4376 = vmatprep.subr.bf16.mxu0 %v3296
    %4377 = vmatpush1.bf16.msra.mxu0 %v3295
    %4378 = vmatprep.subr.bf16.mxu0 %v3288
    %4379 = vmatpush1.bf16.msra.mxu0 %v3287
    %4380 = vmatprep.subr.bf16.mxu0 %v3280
    %4381 = vmatpush1.bf16.msra.mxu0 %v3279
    %4382 = vmatprep.subr.bf16.mxu0 %v3400
    %4383 = vmatpush2.bf16.msra.mxu0 %v3399
    %4384 = vmatprep.subr.bf16.mxu0 %v3392
    %4385 = vmatpush2.bf16.msra.mxu0 %v3391
    %4386 = vmatprep.subr.bf16.mxu0 %v3384
    %4387 = vmatpush2.bf16.msra.mxu0 %v3383
    %4388 = vmatprep.subr.bf16.mxu0 %v3376
    %4389 = vmatpush2.bf16.msra.mxu0 %v3375
    %4390 = vmatprep.subr.bf16.mxu0 %v3368
    %4391 = vmatpush2.bf16.msra.mxu0 %v3367
    %4392 = vmatprep.subr.bf16.mxu0 %v3360
    %4393 = vmatpush2.bf16.msra.mxu0 %v3359
    %4394 = vmatprep.subr.bf16.mxu0 %v3352
    %4395 = vmatpush2.bf16.msra.mxu0 %v3351
    %4396 = vmatprep.subr.bf16.mxu0 %v3344
    %4397 = vmatpush2.bf16.msra.mxu0 %v3343
    %4398 = vmatprep.mubr.bf16.mxu0 %v800
    %4399 = vmatmul.mubr.bf16.gmra.mxu0 %v799
    %v4400 = vpop.f32.mrf.mxu0
    %v4401 = vadd.f32 %v4360, %v4400
    %v4402 = vpop.f32.mrf.mxu0
    %v4403 = vadd.f32 %v4362, %v4402
    %v4404 = vpop.f32.mrf.mxu0
    %v4405 = vpop.f32.mrf.mxu0
    %4406 = vdwg.mxu0
    %4407 = vmatprep.subr.bf16.mxu0 %v2954
    %4408 = vmatpush1.bf16.msra.mxu0 %v2953
    %4409 = vmatprep.subr.bf16.mxu0 %v2946
    %4410 = vmatpush1.bf16.msra.mxu0 %v2945
    %4411 = vmatprep.subr.bf16.mxu0 %v2938
    %4412 = vmatpush1.bf16.msra.mxu0 %v2937
    %4413 = vmatprep.subr.bf16.mxu0 %v2930
    %4414 = vmatpush1.bf16.msra.mxu0 %v2929
    %4415 = vmatprep.subr.bf16.mxu0 %v2922
    %4416 = vmatpush1.bf16.msra.mxu0 %v2921
    %4417 = vmatprep.subr.bf16.mxu0 %v2914
    %4418 = vmatpush1.bf16.msra.mxu0 %v2913
    %4419 = vmatprep.subr.bf16.mxu0 %v2906
    %4420 = vmatpush1.bf16.msra.mxu0 %v2905
    %4421 = vmatprep.subr.bf16.mxu0 %v2898
    %4422 = vmatpush1.bf16.msra.mxu0 %v2897
    %4423 = vmatprep.subr.bf16.mxu0 %v3018
    %4424 = vmatpush2.bf16.msra.mxu0 %v3017
    %4425 = vmatprep.subr.bf16.mxu0 %v3010
    %4426 = vmatpush2.bf16.msra.mxu0 %v3009
    %4427 = vmatprep.subr.bf16.mxu0 %v3002
    %4428 = vmatpush2.bf16.msra.mxu0 %v3001
    %4429 = vmatprep.subr.bf16.mxu0 %v2994
    %4430 = vmatpush2.bf16.msra.mxu0 %v2993
    %4431 = vmatprep.subr.bf16.mxu0 %v2986
    %4432 = vmatpush2.bf16.msra.mxu0 %v2985
    %4433 = vmatprep.subr.bf16.mxu0 %v2978
    %4434 = vmatpush2.bf16.msra.mxu0 %v2977
    %4435 = vmatprep.subr.bf16.mxu0 %v2970
    %4436 = vmatpush2.bf16.msra.mxu0 %v2969
    %4437 = vmatprep.subr.bf16.mxu0 %v2962
    %4438 = vmatpush2.bf16.msra.mxu0 %v2961
    %4439 = vmatprep.mubr.bf16.mxu0 %v794
    %4440 = vmatmul.mubr.bf16.gmra.mxu0 %v793
    %v4441 = vpop.f32.mrf.mxu0
    %v4442 = vadd.f32 %v1342, %v4441
    %v4443 = vpop.f32.mrf.mxu0
    %v4444 = vadd.f32 %v1346, %v4443
    %v4445 = vpop.f32.mrf.mxu0
    %v4446 = vpop.f32.mrf.mxu0
    %4447 = vdwg.mxu0
    %4448 = vmatprep.subr.bf16.mxu0 %v3082
    %4449 = vmatpush1.bf16.msra.mxu0 %v3081
    %4450 = vmatprep.subr.bf16.mxu0 %v3074
    %4451 = vmatpush1.bf16.msra.mxu0 %v3073
    %4452 = vmatprep.subr.bf16.mxu0 %v3066
    %4453 = vmatpush1.bf16.msra.mxu0 %v3065
    %4454 = vmatprep.subr.bf16.mxu0 %v3058
    %4455 = vmatpush1.bf16.msra.mxu0 %v3057
    %4456 = vmatprep.subr.bf16.mxu0 %v3050
    %4457 = vmatpush1.bf16.msra.mxu0 %v3049
    %4458 = vmatprep.subr.bf16.mxu0 %v3042
    %4459 = vmatpush1.bf16.msra.mxu0 %v3041
    %4460 = vmatprep.subr.bf16.mxu0 %v3034
    %4461 = vmatpush1.bf16.msra.mxu0 %v3033
    %4462 = vmatprep.subr.bf16.mxu0 %v3026
    %4463 = vmatpush1.bf16.msra.mxu0 %v3025
    %4464 = vmatprep.subr.bf16.mxu0 %v3146
    %4465 = vmatpush2.bf16.msra.mxu0 %v3145
    %4466 = vmatprep.subr.bf16.mxu0 %v3138
    %4467 = vmatpush2.bf16.msra.mxu0 %v3137
    %4468 = vmatprep.subr.bf16.mxu0 %v3130
    %4469 = vmatpush2.bf16.msra.mxu0 %v3129
    %4470 = vmatprep.subr.bf16.mxu0 %v3122
    %4471 = vmatpush2.bf16.msra.mxu0 %v3121
    %4472 = vmatprep.subr.bf16.mxu0 %v3114
    %4473 = vmatpush2.bf16.msra.mxu0 %v3113
    %4474 = vmatprep.subr.bf16.mxu0 %v3106
    %4475 = vmatpush2.bf16.msra.mxu0 %v3105
    %4476 = vmatprep.subr.bf16.mxu0 %v3098
    %4477 = vmatpush2.bf16.msra.mxu0 %v3097
    %4478 = vmatprep.subr.bf16.mxu0 %v3090
    %4479 = vmatpush2.bf16.msra.mxu0 %v3089
    %4480 = vmatprep.mubr.bf16.mxu0 %v796
    %4481 = vmatmul.mubr.bf16.gmra.mxu0 %v795
    %v4482 = vpop.f32.mrf.mxu0
    %v4483 = vadd.f32 %v4442, %v4482
    %v4484 = vpop.f32.mrf.mxu0
    %v4485 = vadd.f32 %v4444, %v4484
    %v4486 = vpop.f32.mrf.mxu0
    %v4487 = vpop.f32.mrf.mxu0
    %4488 = vdwg.mxu0
    %4489 = vmatprep.subr.bf16.mxu0 %v3210
    %4490 = vmatpush1.bf16.msra.mxu0 %v3209
    %4491 = vmatprep.subr.bf16.mxu0 %v3202
    %4492 = vmatpush1.bf16.msra.mxu0 %v3201
    %4493 = vmatprep.subr.bf16.mxu0 %v3194
    %4494 = vmatpush1.bf16.msra.mxu0 %v3193
    %4495 = vmatprep.subr.bf16.mxu0 %v3186
    %4496 = vmatpush1.bf16.msra.mxu0 %v3185
    %4497 = vmatprep.subr.bf16.mxu0 %v3178
    %4498 = vmatpush1.bf16.msra.mxu0 %v3177
    %4499 = vmatprep.subr.bf16.mxu0 %v3170
    %4500 = vmatpush1.bf16.msra.mxu0 %v3169
    %4501 = vmatprep.subr.bf16.mxu0 %v3162
    %4502 = vmatpush1.bf16.msra.mxu0 %v3161
    %4503 = vmatprep.subr.bf16.mxu0 %v3154
    %4504 = vmatpush1.bf16.msra.mxu0 %v3153
    %4505 = vmatprep.subr.bf16.mxu0 %v3274
    %4506 = vmatpush2.bf16.msra.mxu0 %v3273
    %4507 = vmatprep.subr.bf16.mxu0 %v3266
    %4508 = vmatpush2.bf16.msra.mxu0 %v3265
    %4509 = vmatprep.subr.bf16.mxu0 %v3258
    %4510 = vmatpush2.bf16.msra.mxu0 %v3257
    %4511 = vmatprep.subr.bf16.mxu0 %v3250
    %4512 = vmatpush2.bf16.msra.mxu0 %v3249
    %4513 = vmatprep.subr.bf16.mxu0 %v3242
    %4514 = vmatpush2.bf16.msra.mxu0 %v3241
    %4515 = vmatprep.subr.bf16.mxu0 %v3234
    %4516 = vmatpush2.bf16.msra.mxu0 %v3233
    %4517 = vmatprep.subr.bf16.mxu0 %v3226
    %4518 = vmatpush2.bf16.msra.mxu0 %v3225
    %4519 = vmatprep.subr.bf16.mxu0 %v3218
    %4520 = vmatpush2.bf16.msra.mxu0 %v3217
    %4521 = vmatprep.mubr.bf16.mxu0 %v798
    %4522 = vmatmul.mubr.bf16.gmra.mxu0 %v797
    %v4523 = vpop.f32.mrf.mxu0
    %v4524 = vadd.f32 %v4483, %v4523
    %v4525 = vpop.f32.mrf.mxu0
    %v4526 = vadd.f32 %v4485, %v4525
    %v4527 = vpop.f32.mrf.mxu0
    %v4528 = vpop.f32.mrf.mxu0
    %4529 = vdwg.mxu0
    %4530 = vmatprep.subr.bf16.mxu0 %v3338
    %4531 = vmatpush1.bf16.msra.mxu0 %v3337
    %4532 = vmatprep.subr.bf16.mxu0 %v3330
    %4533 = vmatpush1.bf16.msra.mxu0 %v3329
    %4534 = vmatprep.subr.bf16.mxu0 %v3322
    %4535 = vmatpush1.bf16.msra.mxu0 %v3321
    %4536 = vmatprep.subr.bf16.mxu0 %v3314
    %4537 = vmatpush1.bf16.msra.mxu0 %v3313
    %4538 = vmatprep.subr.bf16.mxu0 %v3306
    %4539 = vmatpush1.bf16.msra.mxu0 %v3305
    %4540 = vmatprep.subr.bf16.mxu0 %v3298
    %4541 = vmatpush1.bf16.msra.mxu0 %v3297
    %4542 = vmatprep.subr.bf16.mxu0 %v3290
    %4543 = vmatpush1.bf16.msra.mxu0 %v3289
    %4544 = vmatprep.subr.bf16.mxu0 %v3282
    %4545 = vmatpush1.bf16.msra.mxu0 %v3281
    %4546 = vmatprep.subr.bf16.mxu0 %v3402
    %4547 = vmatpush2.bf16.msra.mxu0 %v3401
    %4548 = vmatprep.subr.bf16.mxu0 %v3394
    %4549 = vmatpush2.bf16.msra.mxu0 %v3393
    %4550 = vmatprep.subr.bf16.mxu0 %v3386
    %4551 = vmatpush2.bf16.msra.mxu0 %v3385
    %4552 = vmatprep.subr.bf16.mxu0 %v3378
    %4553 = vmatpush2.bf16.msra.mxu0 %v3377
    %4554 = vmatprep.subr.bf16.mxu0 %v3370
    %4555 = vmatpush2.bf16.msra.mxu0 %v3369
    %4556 = vmatprep.subr.bf16.mxu0 %v3362
    %4557 = vmatpush2.bf16.msra.mxu0 %v3361
    %4558 = vmatprep.subr.bf16.mxu0 %v3354
    %4559 = vmatpush2.bf16.msra.mxu0 %v3353
    %4560 = vmatprep.subr.bf16.mxu0 %v3346
    %4561 = vmatpush2.bf16.msra.mxu0 %v3345
    %4562 = vmatprep.mubr.bf16.mxu0 %v800
    %4563 = vmatmul.mubr.bf16.gmra.mxu0 %v799
    %v4564 = vpop.f32.mrf.mxu0
    %v4565 = vadd.f32 %v4524, %v4564
    %v4566 = vpop.f32.mrf.mxu0
    %v4567 = vadd.f32 %v4526, %v4566
    %v4568 = vpop.f32.mrf.mxu0
    %v4569 = vpop.f32.mrf.mxu0
    %4570 = vdwg.mxu0
    %vm4571 = vcmp.gt.f32.partialorder %v4073, 0.0
    %vm4572 = vcmp.gt.f32.partialorder %v4075, 0.0
    %vm4573 = vcmp.gt.f32.partialorder %v4237, 0.0
    %vm4574 = vcmp.gt.f32.partialorder %v4239, 0.0
    %vm4575 = vcmp.gt.f32.partialorder %v4401, 0.0
    %vm4576 = vcmp.gt.f32.partialorder %v4403, 0.0
    %vm4577 = vcmp.gt.f32.partialorder %v4565, 0.0
    %vm4578 = vcmp.gt.f32.partialorder %v4567, 0.0
    %v4579 = vmul.f32 %v4073, 0.01
    %v4580 = vmul.f32 %v4075, 0.01
    %v4581 = vmul.f32 %v4237, 0.01
    %v4582 = vmul.f32 %v4239, 0.01
    %v4583 = vmul.f32 %v4401, 0.01
    %v4584 = vmul.f32 %v4403, 0.01
    %v4585 = vmul.f32 %v4565, 0.01
    %v4586 = vmul.f32 %v4567, 0.01
    %v4587 = vsel %vm4571, %v4073, %v4579
    %v4588 = vsel %vm4572, %v4075, %v4580
    %v4589 = vsel %vm4573, %v4237, %v4581
    %v4590 = vsel %vm4574, %v4239, %v4582
    %v4591 = vsel %vm4575, %v4401, %v4583
    %v4592 = vsel %vm4576, %v4403, %v4584
    %v4593 = vsel %vm4577, %v4565, %v4585
    %v4594 = vsel %vm4578, %v4567, %v4586
    %v4595 = vpack.c.bf16 %v4587, %v4587
    %v4596 = vpack.c.bf16 %v4588, %v4588
    %v4597 = vpack.c.bf16 %v4589, %v4589
    %v4598 = vpack.c.bf16 %v4590, %v4590
    %v4599 = vpack.c.bf16 %v4591, %v4591
    %v4600 = vpack.c.bf16 %v4592, %v4592
    %v4601 = vpack.c.bf16 %v4593, %v4593
    %v4602 = vpack.c.bf16 %v4594, %v4594
    %v4603 = vld [vmem:[#allocation11] sm:$0xf]
    %v4604 = vld [vmem:[#allocation11 + $0x4] sm:$0xf]
    %v4605 = vld [vmem:[#allocation11 + $0x8] sm:$0xf]
    %v4606 = vld [vmem:[#allocation11 + $0xc] sm:$0xf]
    %v4607 = vld [vmem:[#allocation11 + $0x10] sm:$0xf]
    %v4608 = vld [vmem:[#allocation11 + $0x14] sm:$0xf]
    %v4609 = vld [vmem:[#allocation11 + $0x18] sm:$0xf]
    %v4610 = vld [vmem:[#allocation11 + $0x1c] sm:$0xf]
    %v4611 = vld [vmem:[#allocation11 + $0x20] sm:$0xf]
    %v4612 = vld [vmem:[#allocation11 + $0x24] sm:$0xf]
    %v4613 = vld [vmem:[#allocation11 + $0x28] sm:$0xf]
    %v4614 = vld [vmem:[#allocation11 + $0x2c] sm:$0xf]
    %v4615 = vld [vmem:[#allocation11 + $0x30] sm:$0xf]
    %v4616 = vld [vmem:[#allocation11 + $0x34] sm:$0xf]
    %v4617 = vld [vmem:[#allocation11 + $0x38] sm:$0xf]
    %v4618 = vld [vmem:[#allocation11 + $0x3c] sm:$0xf]
    %v4619 = vld [vmem:[#allocation11 + $0x40] sm:$0xf]
    %v4620 = vld [vmem:[#allocation11 + $0x44] sm:$0xf]
    %v4621 = vld [vmem:[#allocation11 + $0x48] sm:$0xf]
    %v4622 = vld [vmem:[#allocation11 + $0x4c] sm:$0xf]
    %v4623 = vld [vmem:[#allocation11 + $0x50] sm:$0xf]
    %v4624 = vld [vmem:[#allocation11 + $0x54] sm:$0xf]
    %v4625 = vld [vmem:[#allocation11 + $0x58] sm:$0xf]
    %v4626 = vld [vmem:[#allocation11 + $0x5c] sm:$0xf]
    %v4627 = vld [vmem:[#allocation11 + $0x60] sm:$0xf]
    %v4628 = vld [vmem:[#allocation11 + $0x64] sm:$0xf]
    %v4629 = vld [vmem:[#allocation11 + $0x68] sm:$0xf]
    %v4630 = vld [vmem:[#allocation11 + $0x6c] sm:$0xf]
    %v4631 = vld [vmem:[#allocation11 + $0x70] sm:$0xf]
    %v4632 = vld [vmem:[#allocation11 + $0x74] sm:$0xf]
    %v4633 = vld [vmem:[#allocation11 + $0x78] sm:$0xf]
    %v4634 = vld [vmem:[#allocation11 + $0x7c] sm:$0xf]
    %v4635 = vld [vmem:[#allocation11 + $0x80] sm:$0xf]
    %v4636 = vld [vmem:[#allocation11 + $0x84] sm:$0xf]
    %v4637 = vld [vmem:[#allocation11 + $0x88] sm:$0xf]
    %v4638 = vld [vmem:[#allocation11 + $0x8c] sm:$0xf]
    %v4639 = vld [vmem:[#allocation11 + $0x90] sm:$0xf]
    %v4640 = vld [vmem:[#allocation11 + $0x94] sm:$0xf]
    %v4641 = vld [vmem:[#allocation11 + $0x98] sm:$0xf]
    %v4642 = vld [vmem:[#allocation11 + $0x9c] sm:$0xf]
    %v4643 = vld [vmem:[#allocation11 + $0xa0] sm:$0xf]
    %v4644 = vld [vmem:[#allocation11 + $0xa4] sm:$0xf]
    %v4645 = vld [vmem:[#allocation11 + $0xa8] sm:$0xf]
    %v4646 = vld [vmem:[#allocation11 + $0xac] sm:$0xf]
    %v4647 = vld [vmem:[#allocation11 + $0xb0] sm:$0xf]
    %v4648 = vld [vmem:[#allocation11 + $0xb4] sm:$0xf]
    %v4649 = vld [vmem:[#allocation11 + $0xb8] sm:$0xf]
    %v4650 = vld [vmem:[#allocation11 + $0xbc] sm:$0xf]
    %v4651 = vld [vmem:[#allocation11 + $0xc0] sm:$0xf]
    %v4652 = vld [vmem:[#allocation11 + $0xc4] sm:$0xf]
    %v4653 = vld [vmem:[#allocation11 + $0xc8] sm:$0xf]
    %v4654 = vld [vmem:[#allocation11 + $0xcc] sm:$0xf]
    %v4655 = vld [vmem:[#allocation11 + $0xd0] sm:$0xf]
    %v4656 = vld [vmem:[#allocation11 + $0xd4] sm:$0xf]
    %v4657 = vld [vmem:[#allocation11 + $0xd8] sm:$0xf]
    %v4658 = vld [vmem:[#allocation11 + $0xdc] sm:$0xf]
    %v4659 = vld [vmem:[#allocation11 + $0xe0] sm:$0xf]
    %v4660 = vld [vmem:[#allocation11 + $0xe4] sm:$0xf]
    %v4661 = vld [vmem:[#allocation11 + $0xe8] sm:$0xf]
    %v4662 = vld [vmem:[#allocation11 + $0xec] sm:$0xf]
    %v4663 = vld [vmem:[#allocation11 + $0xf0] sm:$0xf]
    %v4664 = vld [vmem:[#allocation11 + $0xf4] sm:$0xf]
    %v4665 = vld [vmem:[#allocation11 + $0xf8] sm:$0xf]
    %v4666 = vld [vmem:[#allocation11 + $0xfc] sm:$0xf]
    %v4667 = vld [vmem:[#allocation11 + $0x100] sm:$0xf]
    %v4668 = vld [vmem:[#allocation11 + $0x104] sm:$0xf]
    %v4669 = vld [vmem:[#allocation11 + $0x108] sm:$0xf]
    %v4670 = vld [vmem:[#allocation11 + $0x10c] sm:$0xf]
    %v4671 = vld [vmem:[#allocation11 + $0x110] sm:$0xf]
    %v4672 = vld [vmem:[#allocation11 + $0x114] sm:$0xf]
    %v4673 = vld [vmem:[#allocation11 + $0x118] sm:$0xf]
    %v4674 = vld [vmem:[#allocation11 + $0x11c] sm:$0xf]
    %v4675 = vld [vmem:[#allocation11 + $0x120] sm:$0xf]
    %v4676 = vld [vmem:[#allocation11 + $0x124] sm:$0xf]
    %v4677 = vld [vmem:[#allocation11 + $0x128] sm:$0xf]
    %v4678 = vld [vmem:[#allocation11 + $0x12c] sm:$0xf]
    %v4679 = vld [vmem:[#allocation11 + $0x130] sm:$0xf]
    %v4680 = vld [vmem:[#allocation11 + $0x134] sm:$0xf]
    %v4681 = vld [vmem:[#allocation11 + $0x138] sm:$0xf]
    %v4682 = vld [vmem:[#allocation11 + $0x13c] sm:$0xf]
    %v4683 = vld [vmem:[#allocation11 + $0x140] sm:$0xf]
    %v4684 = vld [vmem:[#allocation11 + $0x144] sm:$0xf]
    %v4685 = vld [vmem:[#allocation11 + $0x148] sm:$0xf]
    %v4686 = vld [vmem:[#allocation11 + $0x14c] sm:$0xf]
    %v4687 = vld [vmem:[#allocation11 + $0x150] sm:$0xf]
    %v4688 = vld [vmem:[#allocation11 + $0x154] sm:$0xf]
    %v4689 = vld [vmem:[#allocation11 + $0x158] sm:$0xf]
    %v4690 = vld [vmem:[#allocation11 + $0x15c] sm:$0xf]
    %v4691 = vld [vmem:[#allocation11 + $0x160] sm:$0xf]
    %v4692 = vld [vmem:[#allocation11 + $0x164] sm:$0xf]
    %v4693 = vld [vmem:[#allocation11 + $0x168] sm:$0xf]
    %v4694 = vld [vmem:[#allocation11 + $0x16c] sm:$0xf]
    %v4695 = vld [vmem:[#allocation11 + $0x170] sm:$0xf]
    %v4696 = vld [vmem:[#allocation11 + $0x174] sm:$0xf]
    %v4697 = vld [vmem:[#allocation11 + $0x178] sm:$0xf]
    %v4698 = vld [vmem:[#allocation11 + $0x17c] sm:$0xf]
    %v4699 = vld [vmem:[#allocation11 + $0x180] sm:$0xf]
    %v4700 = vld [vmem:[#allocation11 + $0x184] sm:$0xf]
    %v4701 = vld [vmem:[#allocation11 + $0x188] sm:$0xf]
    %v4702 = vld [vmem:[#allocation11 + $0x18c] sm:$0xf]
    %v4703 = vld [vmem:[#allocation11 + $0x190] sm:$0xf]
    %v4704 = vld [vmem:[#allocation11 + $0x194] sm:$0xf]
    %v4705 = vld [vmem:[#allocation11 + $0x198] sm:$0xf]
    %v4706 = vld [vmem:[#allocation11 + $0x19c] sm:$0xf]
    %v4707 = vld [vmem:[#allocation11 + $0x1a0] sm:$0xf]
    %v4708 = vld [vmem:[#allocation11 + $0x1a4] sm:$0xf]
    %v4709 = vld [vmem:[#allocation11 + $0x1a8] sm:$0xf]
    %v4710 = vld [vmem:[#allocation11 + $0x1ac] sm:$0xf]
    %v4711 = vld [vmem:[#allocation11 + $0x1b0] sm:$0xf]
    %v4712 = vld [vmem:[#allocation11 + $0x1b4] sm:$0xf]
    %v4713 = vld [vmem:[#allocation11 + $0x1b8] sm:$0xf]
    %v4714 = vld [vmem:[#allocation11 + $0x1bc] sm:$0xf]
    %v4715 = vld [vmem:[#allocation11 + $0x1c0] sm:$0xf]
    %v4716 = vld [vmem:[#allocation11 + $0x1c4] sm:$0xf]
    %v4717 = vld [vmem:[#allocation11 + $0x1c8] sm:$0xf]
    %v4718 = vld [vmem:[#allocation11 + $0x1cc] sm:$0xf]
    %v4719 = vld [vmem:[#allocation11 + $0x1d0] sm:$0xf]
    %v4720 = vld [vmem:[#allocation11 + $0x1d4] sm:$0xf]
    %v4721 = vld [vmem:[#allocation11 + $0x1d8] sm:$0xf]
    %v4722 = vld [vmem:[#allocation11 + $0x1dc] sm:$0xf]
    %v4723 = vld [vmem:[#allocation11 + $0x1e0] sm:$0xf]
    %v4724 = vld [vmem:[#allocation11 + $0x1e4] sm:$0xf]
    %v4725 = vld [vmem:[#allocation11 + $0x1e8] sm:$0xf]
    %v4726 = vld [vmem:[#allocation11 + $0x1ec] sm:$0xf]
    %v4727 = vld [vmem:[#allocation11 + $0x1f0] sm:$0xf]
    %v4728 = vld [vmem:[#allocation11 + $0x1f4] sm:$0xf]
    %v4729 = vld [vmem:[#allocation11 + $0x1f8] sm:$0xf]
    %v4730 = vld [vmem:[#allocation11 + $0x1fc] sm:$0xf]
    %v4731 = vld [vmem:[#allocation13] sm:$0x1]
    %v4733 = vlaneseq
    %v4734 = vshrl.u32 %v4733, 7
    %v4735 = vsub.s32 0, %v4734
    %v4736 = vrot.slane %v4731, %v4735
    %v4866 = vunpack.c.l.b16 %v4603
    %v4867 = vunpack.c.l.b16 %v4604
    %v4868 = vunpack.c.l.b16 %v4605
    %v4869 = vunpack.c.l.b16 %v4606
    %v4870 = vunpack.c.l.b16 %v4607
    %v4871 = vunpack.c.l.b16 %v4608
    %v4872 = vunpack.c.l.b16 %v4609
    %v4873 = vunpack.c.l.b16 %v4610
    %v4874 = vunpack.c.l.b16 %v4611
    %v4875 = vunpack.c.l.b16 %v4612
    %v4876 = vunpack.c.l.b16 %v4613
    %v4877 = vunpack.c.l.b16 %v4614
    %v4878 = vunpack.c.l.b16 %v4615
    %v4879 = vunpack.c.l.b16 %v4616
    %v4880 = vunpack.c.l.b16 %v4617
    %v4881 = vunpack.c.l.b16 %v4618
    %v4882 = vunpack.c.l.b16 %v4619
    %v4883 = vunpack.c.l.b16 %v4620
    %v4884 = vunpack.c.l.b16 %v4621
    %v4885 = vunpack.c.l.b16 %v4622
    %v4886 = vunpack.c.l.b16 %v4623
    %v4887 = vunpack.c.l.b16 %v4624
    %v4888 = vunpack.c.l.b16 %v4625
    %v4889 = vunpack.c.l.b16 %v4626
    %v4890 = vunpack.c.l.b16 %v4627
    %v4891 = vunpack.c.l.b16 %v4628
    %v4892 = vunpack.c.l.b16 %v4629
    %v4893 = vunpack.c.l.b16 %v4630
    %v4894 = vunpack.c.l.b16 %v4631
    %v4895 = vunpack.c.l.b16 %v4632
    %v4896 = vunpack.c.l.b16 %v4633
    %v4897 = vunpack.c.l.b16 %v4634
    %v4898 = vunpack.c.l.b16 %v4635
    %v4899 = vunpack.c.l.b16 %v4636
    %v4900 = vunpack.c.l.b16 %v4637
    %v4901 = vunpack.c.l.b16 %v4638
    %v4902 = vunpack.c.l.b16 %v4639
    %v4903 = vunpack.c.l.b16 %v4640
    %v4904 = vunpack.c.l.b16 %v4641
    %v4905 = vunpack.c.l.b16 %v4642
    %v4906 = vunpack.c.l.b16 %v4643
    %v4907 = vunpack.c.l.b16 %v4644
    %v4908 = vunpack.c.l.b16 %v4645
    %v4909 = vunpack.c.l.b16 %v4646
    %v4910 = vunpack.c.l.b16 %v4647
    %v4911 = vunpack.c.l.b16 %v4648
    %v4912 = vunpack.c.l.b16 %v4649
    %v4913 = vunpack.c.l.b16 %v4650
    %v4914 = vunpack.c.l.b16 %v4651
    %v4915 = vunpack.c.l.b16 %v4652
    %v4916 = vunpack.c.l.b16 %v4653
    %v4917 = vunpack.c.l.b16 %v4654
    %v4918 = vunpack.c.l.b16 %v4655
    %v4919 = vunpack.c.l.b16 %v4656
    %v4920 = vunpack.c.l.b16 %v4657
    %v4921 = vunpack.c.l.b16 %v4658
    %v4922 = vunpack.c.l.b16 %v4659
    %v4923 = vunpack.c.l.b16 %v4660
    %v4924 = vunpack.c.l.b16 %v4661
    %v4925 = vunpack.c.l.b16 %v4662
    %v4926 = vunpack.c.l.b16 %v4663
    %v4927 = vunpack.c.l.b16 %v4664
    %v4928 = vunpack.c.l.b16 %v4665
    %v4929 = vunpack.c.l.b16 %v4666
    %v4930 = vunpack.c.l.b16 %v4667
    %v4931 = vunpack.c.l.b16 %v4668
    %v4932 = vunpack.c.l.b16 %v4669
    %v4933 = vunpack.c.l.b16 %v4670
    %v4934 = vunpack.c.l.b16 %v4671
    %v4935 = vunpack.c.l.b16 %v4672
    %v4936 = vunpack.c.l.b16 %v4673
    %v4937 = vunpack.c.l.b16 %v4674
    %v4938 = vunpack.c.l.b16 %v4675
    %v4939 = vunpack.c.l.b16 %v4676
    %v4940 = vunpack.c.l.b16 %v4677
    %v4941 = vunpack.c.l.b16 %v4678
    %v4942 = vunpack.c.l.b16 %v4679
    %v4943 = vunpack.c.l.b16 %v4680
    %v4944 = vunpack.c.l.b16 %v4681
    %v4945 = vunpack.c.l.b16 %v4682
    %v4946 = vunpack.c.l.b16 %v4683
    %v4947 = vunpack.c.l.b16 %v4684
    %v4948 = vunpack.c.l.b16 %v4685
    %v4949 = vunpack.c.l.b16 %v4686
    %v4950 = vunpack.c.l.b16 %v4687
    %v4951 = vunpack.c.l.b16 %v4688
    %v4952 = vunpack.c.l.b16 %v4689
    %v4953 = vunpack.c.l.b16 %v4690
    %v4954 = vunpack.c.l.b16 %v4691
    %v4955 = vunpack.c.l.b16 %v4692
    %v4956 = vunpack.c.l.b16 %v4693
    %v4957 = vunpack.c.l.b16 %v4694
    %v4958 = vunpack.c.l.b16 %v4695
    %v4959 = vunpack.c.l.b16 %v4696
    %v4960 = vunpack.c.l.b16 %v4697
    %v4961 = vunpack.c.l.b16 %v4698
    %v4962 = vunpack.c.l.b16 %v4699
    %v4963 = vunpack.c.l.b16 %v4700
    %v4964 = vunpack.c.l.b16 %v4701
    %v4965 = vunpack.c.l.b16 %v4702
    %v4966 = vunpack.c.l.b16 %v4703
    %v4967 = vunpack.c.l.b16 %v4704
    %v4968 = vunpack.c.l.b16 %v4705
    %v4969 = vunpack.c.l.b16 %v4706
    %v4970 = vunpack.c.l.b16 %v4707
    %v4971 = vunpack.c.l.b16 %v4708
    %v4972 = vunpack.c.l.b16 %v4709
    %v4973 = vunpack.c.l.b16 %v4710
    %v4974 = vunpack.c.l.b16 %v4711
    %v4975 = vunpack.c.l.b16 %v4712
    %v4976 = vunpack.c.l.b16 %v4713
    %v4977 = vunpack.c.l.b16 %v4714
    %v4978 = vunpack.c.l.b16 %v4715
    %v4979 = vunpack.c.l.b16 %v4716
    %v4980 = vunpack.c.l.b16 %v4717
    %v4981 = vunpack.c.l.b16 %v4718
    %v4982 = vunpack.c.l.b16 %v4719
    %v4983 = vunpack.c.l.b16 %v4720
    %v4984 = vunpack.c.l.b16 %v4721
    %v4985 = vunpack.c.l.b16 %v4722
    %v4986 = vunpack.c.l.b16 %v4723
    %v4987 = vunpack.c.l.b16 %v4724
    %v4988 = vunpack.c.l.b16 %v4725
    %v4989 = vunpack.c.l.b16 %v4726
    %v4990 = vunpack.c.l.b16 %v4727
    %v4991 = vunpack.c.l.b16 %v4728
    %v4992 = vunpack.c.l.b16 %v4729
    %v4993 = vunpack.c.l.b16 %v4730
    %v4994 = vpack.c.b16 %v4867, %v4866
    %v4995 = vpack.c.b16 %v4869, %v4868
    %v4996 = vpack.c.b16 %v4871, %v4870
    %v4997 = vpack.c.b16 %v4873, %v4872
    %v4998 = vpack.c.b16 %v4875, %v4874
    %v4999 = vpack.c.b16 %v4877, %v4876
    %v5000 = vpack.c.b16 %v4879, %v4878
    %v5001 = vpack.c.b16 %v4881, %v4880
    %v5002 = vpack.c.b16 %v4883, %v4882
    %v5003 = vpack.c.b16 %v4885, %v4884
    %v5004 = vpack.c.b16 %v4887, %v4886
    %v5005 = vpack.c.b16 %v4889, %v4888
    %v5006 = vpack.c.b16 %v4891, %v4890
    %v5007 = vpack.c.b16 %v4893, %v4892
    %v5008 = vpack.c.b16 %v4895, %v4894
    %v5009 = vpack.c.b16 %v4897, %v4896
    %v5010 = vpack.c.b16 %v4899, %v4898
    %v5011 = vpack.c.b16 %v4901, %v4900
    %v5012 = vpack.c.b16 %v4903, %v4902
    %v5013 = vpack.c.b16 %v4905, %v4904
    %v5014 = vpack.c.b16 %v4907, %v4906
    %v5015 = vpack.c.b16 %v4909, %v4908
    %v5016 = vpack.c.b16 %v4911, %v4910
    %v5017 = vpack.c.b16 %v4913, %v4912
    %v5018 = vpack.c.b16 %v4915, %v4914
    %v5019 = vpack.c.b16 %v4917, %v4916
    %v5020 = vpack.c.b16 %v4919, %v4918
    %v5021 = vpack.c.b16 %v4921, %v4920
    %v5022 = vpack.c.b16 %v4923, %v4922
    %v5023 = vpack.c.b16 %v4925, %v4924
    %v5024 = vpack.c.b16 %v4927, %v4926
    %v5025 = vpack.c.b16 %v4929, %v4928
    %v5026 = vpack.c.b16 %v4931, %v4930
    %v5027 = vpack.c.b16 %v4933, %v4932
    %v5028 = vpack.c.b16 %v4935, %v4934
    %v5029 = vpack.c.b16 %v4937, %v4936
    %v5030 = vpack.c.b16 %v4939, %v4938
    %v5031 = vpack.c.b16 %v4941, %v4940
    %v5032 = vpack.c.b16 %v4943, %v4942
    %v5033 = vpack.c.b16 %v4945, %v4944
    %v5034 = vpack.c.b16 %v4947, %v4946
    %v5035 = vpack.c.b16 %v4949, %v4948
    %v5036 = vpack.c.b16 %v4951, %v4950
    %v5037 = vpack.c.b16 %v4953, %v4952
    %v5038 = vpack.c.b16 %v4955, %v4954
    %v5039 = vpack.c.b16 %v4957, %v4956
    %v5040 = vpack.c.b16 %v4959, %v4958
    %v5041 = vpack.c.b16 %v4961, %v4960
    %v5042 = vpack.c.b16 %v4963, %v4962
    %v5043 = vpack.c.b16 %v4965, %v4964
    %v5044 = vpack.c.b16 %v4967, %v4966
    %v5045 = vpack.c.b16 %v4969, %v4968
    %v5046 = vpack.c.b16 %v4971, %v4970
    %v5047 = vpack.c.b16 %v4973, %v4972
    %v5048 = vpack.c.b16 %v4975, %v4974
    %v5049 = vpack.c.b16 %v4977, %v4976
    %v5050 = vpack.c.b16 %v4979, %v4978
    %v5051 = vpack.c.b16 %v4981, %v4980
    %v5052 = vpack.c.b16 %v4983, %v4982
    %v5053 = vpack.c.b16 %v4985, %v4984
    %v5054 = vpack.c.b16 %v4987, %v4986
    %v5055 = vpack.c.b16 %v4989, %v4988
    %v5056 = vpack.c.b16 %v4991, %v4990
    %v5057 = vpack.c.b16 %v4993, %v4992
    %5122 = vmatprep.subr.bf16.mxu0 0
    %5123 = vmatpush1.bf16.msra.mxu0 %v5001
    %5124 = vmatprep.subr.bf16.mxu0 0
    %5125 = vmatpush1.bf16.msra.mxu0 %v5000
    %5126 = vmatprep.subr.bf16.mxu0 0
    %5127 = vmatpush1.bf16.msra.mxu0 %v4999
    %5128 = vmatprep.subr.bf16.mxu0 0
    %5129 = vmatpush1.bf16.msra.mxu0 %v4998
    %5130 = vmatprep.subr.bf16.mxu0 0
    %5131 = vmatpush1.bf16.msra.mxu0 %v4997
    %5132 = vmatprep.subr.bf16.mxu0 0
    %5133 = vmatpush1.bf16.msra.mxu0 %v4996
    %5134 = vmatprep.subr.bf16.mxu0 0
    %5135 = vmatpush1.bf16.msra.mxu0 %v4995
    %5136 = vmatprep.subr.bf16.mxu0 0
    %5137 = vmatpush1.bf16.msra.mxu0 %v4994
    %5138 = vmatprep.subr.bf16.mxu0 0
    %5139 = vmatpush2.bf16.msra.mxu0 %v5009
    %5140 = vmatprep.subr.bf16.mxu0 0
    %5141 = vmatpush2.bf16.msra.mxu0 %v5008
    %5142 = vmatprep.subr.bf16.mxu0 0
    %5143 = vmatpush2.bf16.msra.mxu0 %v5007
    %5144 = vmatprep.subr.bf16.mxu0 0
    %5145 = vmatpush2.bf16.msra.mxu0 %v5006
    %5146 = vmatprep.subr.bf16.mxu0 0
    %5147 = vmatpush2.bf16.msra.mxu0 %v5005
    %5148 = vmatprep.subr.bf16.mxu0 0
    %5149 = vmatpush2.bf16.msra.mxu0 %v5004
    %5150 = vmatprep.subr.bf16.mxu0 0
    %5151 = vmatpush2.bf16.msra.mxu0 %v5003
    %5152 = vmatprep.subr.bf16.mxu0 0
    %5153 = vmatpush2.bf16.msra.mxu0 %v5002
    %5154 = vmatprep.mubr.bf16.mxu0 %v4596
    %5155 = vmatmul.mubr.bf16.gmra.mxu0 %v4595
    %v5156 = vpop.f32.mrf.mxu0
    %v5157 = vadd.f32 %v4736, %v5156
    %v5158 = vpop.f32.mrf.mxu0
    %v5159 = vpop.f32.mrf.mxu0
    %v5160 = vpop.f32.mrf.mxu0
    %5161 = vdwg.mxu0
    %5162 = vmatprep.subr.bf16.mxu0 0
    %5163 = vmatpush1.bf16.msra.mxu0 %v5017
    %5164 = vmatprep.subr.bf16.mxu0 0
    %5165 = vmatpush1.bf16.msra.mxu0 %v5016
    %5166 = vmatprep.subr.bf16.mxu0 0
    %5167 = vmatpush1.bf16.msra.mxu0 %v5015
    %5168 = vmatprep.subr.bf16.mxu0 0
    %5169 = vmatpush1.bf16.msra.mxu0 %v5014
    %5170 = vmatprep.subr.bf16.mxu0 0
    %5171 = vmatpush1.bf16.msra.mxu0 %v5013
    %5172 = vmatprep.subr.bf16.mxu0 0
    %5173 = vmatpush1.bf16.msra.mxu0 %v5012
    %5174 = vmatprep.subr.bf16.mxu0 0
    %5175 = vmatpush1.bf16.msra.mxu0 %v5011
    %5176 = vmatprep.subr.bf16.mxu0 0
    %5177 = vmatpush1.bf16.msra.mxu0 %v5010
    %5178 = vmatprep.subr.bf16.mxu0 0
    %5179 = vmatpush2.bf16.msra.mxu0 %v5025
    %5180 = vmatprep.subr.bf16.mxu0 0
    %5181 = vmatpush2.bf16.msra.mxu0 %v5024
    %5182 = vmatprep.subr.bf16.mxu0 0
    %5183 = vmatpush2.bf16.msra.mxu0 %v5023
    %5184 = vmatprep.subr.bf16.mxu0 0
    %5185 = vmatpush2.bf16.msra.mxu0 %v5022
    %5186 = vmatprep.subr.bf16.mxu0 0
    %5187 = vmatpush2.bf16.msra.mxu0 %v5021
    %5188 = vmatprep.subr.bf16.mxu0 0
    %5189 = vmatpush2.bf16.msra.mxu0 %v5020
    %5190 = vmatprep.subr.bf16.mxu0 0
    %5191 = vmatpush2.bf16.msra.mxu0 %v5019
    %5192 = vmatprep.subr.bf16.mxu0 0
    %5193 = vmatpush2.bf16.msra.mxu0 %v5018
    %5194 = vmatprep.mubr.bf16.mxu0 %v4598
    %5195 = vmatmul.mubr.bf16.gmra.mxu0 %v4597
    %v5196 = vpop.f32.mrf.mxu0
    %v5197 = vadd.f32 %v5157, %v5196
    %v5198 = vpop.f32.mrf.mxu0
    %v5199 = vpop.f32.mrf.mxu0
    %v5200 = vpop.f32.mrf.mxu0
    %5201 = vdwg.mxu0
    %5202 = vmatprep.subr.bf16.mxu0 0
    %5203 = vmatpush1.bf16.msra.mxu0 %v5033
    %5204 = vmatprep.subr.bf16.mxu0 0
    %5205 = vmatpush1.bf16.msra.mxu0 %v5032
    %5206 = vmatprep.subr.bf16.mxu0 0
    %5207 = vmatpush1.bf16.msra.mxu0 %v5031
    %5208 = vmatprep.subr.bf16.mxu0 0
    %5209 = vmatpush1.bf16.msra.mxu0 %v5030
    %5210 = vmatprep.subr.bf16.mxu0 0
    %5211 = vmatpush1.bf16.msra.mxu0 %v5029
    %5212 = vmatprep.subr.bf16.mxu0 0
    %5213 = vmatpush1.bf16.msra.mxu0 %v5028
    %5214 = vmatprep.subr.bf16.mxu0 0
    %5215 = vmatpush1.bf16.msra.mxu0 %v5027
    %5216 = vmatprep.subr.bf16.mxu0 0
    %5217 = vmatpush1.bf16.msra.mxu0 %v5026
    %5218 = vmatprep.subr.bf16.mxu0 0
    %5219 = vmatpush2.bf16.msra.mxu0 %v5041
    %5220 = vmatprep.subr.bf16.mxu0 0
    %5221 = vmatpush2.bf16.msra.mxu0 %v5040
    %5222 = vmatprep.subr.bf16.mxu0 0
    %5223 = vmatpush2.bf16.msra.mxu0 %v5039
    %5224 = vmatprep.subr.bf16.mxu0 0
    %5225 = vmatpush2.bf16.msra.mxu0 %v5038
    %5226 = vmatprep.subr.bf16.mxu0 0
    %5227 = vmatpush2.bf16.msra.mxu0 %v5037
    %5228 = vmatprep.subr.bf16.mxu0 0
    %5229 = vmatpush2.bf16.msra.mxu0 %v5036
    %5230 = vmatprep.subr.bf16.mxu0 0
    %5231 = vmatpush2.bf16.msra.mxu0 %v5035
    %5232 = vmatprep.subr.bf16.mxu0 0
    %5233 = vmatpush2.bf16.msra.mxu0 %v5034
    %5234 = vmatprep.mubr.bf16.mxu0 %v4600
    %5235 = vmatmul.mubr.bf16.gmra.mxu0 %v4599
    %v5236 = vpop.f32.mrf.mxu0
    %v5237 = vadd.f32 %v5197, %v5236
    %v5238 = vpop.f32.mrf.mxu0
    %v5239 = vpop.f32.mrf.mxu0
    %v5240 = vpop.f32.mrf.mxu0
    %5241 = vdwg.mxu0
    %5242 = vmatprep.subr.bf16.mxu0 0
    %5243 = vmatpush1.bf16.msra.mxu0 %v5049
    %5244 = vmatprep.subr.bf16.mxu0 0
    %5245 = vmatpush1.bf16.msra.mxu0 %v5048
    %5246 = vmatprep.subr.bf16.mxu0 0
    %5247 = vmatpush1.bf16.msra.mxu0 %v5047
    %5248 = vmatprep.subr.bf16.mxu0 0
    %5249 = vmatpush1.bf16.msra.mxu0 %v5046
    %5250 = vmatprep.subr.bf16.mxu0 0
    %5251 = vmatpush1.bf16.msra.mxu0 %v5045
    %5252 = vmatprep.subr.bf16.mxu0 0
    %5253 = vmatpush1.bf16.msra.mxu0 %v5044
    %5254 = vmatprep.subr.bf16.mxu0 0
    %5255 = vmatpush1.bf16.msra.mxu0 %v5043
    %5256 = vmatprep.subr.bf16.mxu0 0
    %5257 = vmatpush1.bf16.msra.mxu0 %v5042
    %5258 = vmatprep.subr.bf16.mxu0 0
    %5259 = vmatpush2.bf16.msra.mxu0 %v5057
    %5260 = vmatprep.subr.bf16.mxu0 0
    %5261 = vmatpush2.bf16.msra.mxu0 %v5056
    %5262 = vmatprep.subr.bf16.mxu0 0
    %5263 = vmatpush2.bf16.msra.mxu0 %v5055
    %5264 = vmatprep.subr.bf16.mxu0 0
    %5265 = vmatpush2.bf16.msra.mxu0 %v5054
    %5266 = vmatprep.subr.bf16.mxu0 0
    %5267 = vmatpush2.bf16.msra.mxu0 %v5053
    %5268 = vmatprep.subr.bf16.mxu0 0
    %5269 = vmatpush2.bf16.msra.mxu0 %v5052
    %5270 = vmatprep.subr.bf16.mxu0 0
    %5271 = vmatpush2.bf16.msra.mxu0 %v5051
    %5272 = vmatprep.subr.bf16.mxu0 0
    %5273 = vmatpush2.bf16.msra.mxu0 %v5050
    %5274 = vmatprep.mubr.bf16.mxu0 %v4602
    %5275 = vmatmul.mubr.bf16.gmra.mxu0 %v4601
    %v5276 = vpop.f32.mrf.mxu0
    %v5277 = vadd.f32 %v5237, %v5276
    %v5278 = vpop.f32.mrf.mxu0
    %v5279 = vpop.f32.mrf.mxu0
    %v5280 = vpop.f32.mrf.mxu0
    %5281 = vdwg.mxu0
    %vm5282 = vcmp.gt.f32.partialorder %v5277, 0.0
    %v5283 = vmul.f32 %v5277, 0.01
    %v5284 = vsel %vm5282, %v5277, %v5283
    %v5285 = vpack.c.bf16 %v5284, %v5284
    %v5286 = vld [vmem:[#allocation14] sm:$0xf]
    %v5287 = vld [vmem:[#allocation14 + $0x4] sm:$0xf]
    %v5288 = vld [vmem:[#allocation14 + $0x8] sm:$0xf]
    %v5289 = vld [vmem:[#allocation14 + $0xc] sm:$0xf]
    %v5290 = vld [vmem:[#allocation14 + $0x10] sm:$0xf]
    %v5291 = vld [vmem:[#allocation14 + $0x14] sm:$0xf]
    %v5292 = vld [vmem:[#allocation14 + $0x18] sm:$0xf]
    %v5293 = vld [vmem:[#allocation14 + $0x1c] sm:$0xf]
    %v5294 = vld [vmem:[#allocation14 + $0x20] sm:$0xf]
    %v5295 = vld [vmem:[#allocation14 + $0x24] sm:$0xf]
    %v5296 = vld [vmem:[#allocation14 + $0x28] sm:$0xf]
    %v5297 = vld [vmem:[#allocation14 + $0x2c] sm:$0xf]
    %v5298 = vld [vmem:[#allocation14 + $0x30] sm:$0xf]
    %v5299 = vld [vmem:[#allocation14 + $0x34] sm:$0xf]
    %v5300 = vld [vmem:[#allocation14 + $0x38] sm:$0xf]
    %v5301 = vld [vmem:[#allocation14 + $0x3c] sm:$0xf]
    %v5302 = vld [vmem:[#allocation16] sm:$0x1]
    %v5304 = vlaneseq
    %v5305 = vshrl.u32 %v5304, 7
    %v5306 = vsub.s32 0, %v5305
    %v5307 = vrot.slane %v5302, %v5306
    %v5325 = vunpack.c.l.b16 %v5286
    %v5326 = vunpack.c.l.b16 %v5287
    %v5327 = vunpack.c.l.b16 %v5288
    %v5328 = vunpack.c.l.b16 %v5289
    %v5329 = vunpack.c.l.b16 %v5290
    %v5330 = vunpack.c.l.b16 %v5291
    %v5331 = vunpack.c.l.b16 %v5292
    %v5332 = vunpack.c.l.b16 %v5293
    %v5333 = vunpack.c.l.b16 %v5294
    %v5334 = vunpack.c.l.b16 %v5295
    %v5335 = vunpack.c.l.b16 %v5296
    %v5336 = vunpack.c.l.b16 %v5297
    %v5337 = vunpack.c.l.b16 %v5298
    %v5338 = vunpack.c.l.b16 %v5299
    %v5339 = vunpack.c.l.b16 %v5300
    %v5340 = vunpack.c.l.b16 %v5301
    %v5341 = vpack.c.b16 %v5326, %v5325
    %v5342 = vpack.c.b16 %v5328, %v5327
    %v5343 = vpack.c.b16 %v5330, %v5329
    %v5344 = vpack.c.b16 %v5332, %v5331
    %v5345 = vpack.c.b16 %v5334, %v5333
    %v5346 = vpack.c.b16 %v5336, %v5335
    %v5347 = vpack.c.b16 %v5338, %v5337
    %v5348 = vpack.c.b16 %v5340, %v5339
    %5357 = vmatprep.subr.bf16.mxu0 0
    %5358 = vmatpush1.bf16.msra.mxu0 %v5348
    %5359 = vmatprep.subr.bf16.mxu0 0
    %5360 = vmatpush1.bf16.msra.mxu0 %v5347
    %5361 = vmatprep.subr.bf16.mxu0 0
    %5362 = vmatpush1.bf16.msra.mxu0 %v5346
    %5363 = vmatprep.subr.bf16.mxu0 0
    %5364 = vmatpush1.bf16.msra.mxu0 %v5345
    %5365 = vmatprep.subr.bf16.mxu0 0
    %5366 = vmatpush1.bf16.msra.mxu0 %v5344
    %5367 = vmatprep.subr.bf16.mxu0 0
    %5368 = vmatpush1.bf16.msra.mxu0 %v5343
    %5369 = vmatprep.subr.bf16.mxu0 0
    %5370 = vmatpush1.bf16.msra.mxu0 %v5342
    %5371 = vmatprep.subr.bf16.mxu0 0
    %5372 = vmatpush1.bf16.msra.mxu0 %v5341
    %5373 = vmatprep.subr.bf16.mxu0 0
    %5374 = vmatpush2.bf16.msra.mxu0 0
    %5375 = vmatprep.subr.bf16.mxu0 0
    %5376 = vmatpush2.bf16.msra.mxu0 0
    %5377 = vmatprep.subr.bf16.mxu0 0
    %5378 = vmatpush2.bf16.msra.mxu0 0
    %5379 = vmatprep.subr.bf16.mxu0 0
    %5380 = vmatpush2.bf16.msra.mxu0 0
    %5381 = vmatprep.subr.bf16.mxu0 0
    %5382 = vmatpush2.bf16.msra.mxu0 0
    %5383 = vmatprep.subr.bf16.mxu0 0
    %5384 = vmatpush2.bf16.msra.mxu0 0
    %5385 = vmatprep.subr.bf16.mxu0 0
    %5386 = vmatpush2.bf16.msra.mxu0 0
    %5387 = vmatprep.subr.bf16.mxu0 0
    %5388 = vmatpush2.bf16.msra.mxu0 0
    %5389 = vmatprep.mubr.bf16.mxu0 0
    %5390 = vmatmul.mubr.bf16.gmra.mxu0 %v5285
    %v5391 = vpop.f32.mrf.mxu0
    %v5392 = vadd.f32 %v5307, %v5391
    %v5393 = vpop.f32.mrf.mxu0
    %v5394 = vpop.f32.mrf.mxu0
    %v5395 = vpop.f32.mrf.mxu0
    %5396 = vdwg.mxu0
    %vm5397 = vcmp.gt.f32.partialorder %v5392, 0.0
    %v5398 = vmul.f32 %v5392, 0.01
    %v5399 = vsel %vm5397, %v5392, %v5398
    %v5400 = vpack.c.bf16 %v5399, %v5399
    %v5401 = vld [vmem:[#allocation17] sm:$0xf]
    %v5402 = vld [vmem:[#allocation17 + $0x4] sm:$0xf]
    %v5403 = vld [vmem:[#allocation17 + $0x8] sm:$0xf]
    %v5404 = vld [vmem:[#allocation17 + $0xc] sm:$0xf]
    %v5405 = vld [vmem:[#allocation17 + $0x10] sm:$0xf]
    %v5406 = vld [vmem:[#allocation17 + $0x14] sm:$0xf]
    %v5407 = vld [vmem:[#allocation17 + $0x18] sm:$0xf]
    %v5408 = vld [vmem:[#allocation17 + $0x1c] sm:$0xf]
    %v5409 = vld [vmem:[#allocation17 + $0x20] sm:$0xf]
    %v5410 = vld [vmem:[#allocation17 + $0x24] sm:$0xf]
    %v5411 = vld [vmem:[#allocation17 + $0x28] sm:$0xf]
    %v5412 = vld [vmem:[#allocation17 + $0x2c] sm:$0xf]
    %v5413 = vld [vmem:[#allocation17 + $0x30] sm:$0xf]
    %v5414 = vld [vmem:[#allocation17 + $0x34] sm:$0xf]
    %v5415 = vld [vmem:[#allocation17 + $0x38] sm:$0xf]
    %v5416 = vld [vmem:[#allocation17 + $0x3c] sm:$0xf]
    %v5417 = vld [vmem:[#allocation19] sm:$0x1]
    %v5419 = vlaneseq
    %v5420 = vshrl.u32 %v5419, 7
    %v5421 = vsub.s32 0, %v5420
    %v5422 = vrot.slane %v5417, %v5421
    %v5440 = vunpack.c.l.b16 %v5401
    %v5441 = vunpack.c.l.b16 %v5402
    %v5442 = vunpack.c.l.b16 %v5403
    %v5443 = vunpack.c.l.b16 %v5404
    %v5444 = vunpack.c.l.b16 %v5405
    %v5445 = vunpack.c.l.b16 %v5406
    %v5446 = vunpack.c.l.b16 %v5407
    %v5447 = vunpack.c.l.b16 %v5408
    %v5448 = vunpack.c.l.b16 %v5409
    %v5449 = vunpack.c.l.b16 %v5410
    %v5450 = vunpack.c.l.b16 %v5411
    %v5451 = vunpack.c.l.b16 %v5412
    %v5452 = vunpack.c.l.b16 %v5413
    %v5453 = vunpack.c.l.b16 %v5414
    %v5454 = vunpack.c.l.b16 %v5415
    %v5455 = vunpack.c.l.b16 %v5416
    %v5456 = vpack.c.b16 %v5441, %v5440
    %v5457 = vpack.c.b16 %v5443, %v5442
    %v5458 = vpack.c.b16 %v5445, %v5444
    %v5459 = vpack.c.b16 %v5447, %v5446
    %v5460 = vpack.c.b16 %v5449, %v5448
    %v5461 = vpack.c.b16 %v5451, %v5450
    %v5462 = vpack.c.b16 %v5453, %v5452
    %v5463 = vpack.c.b16 %v5455, %v5454
    %5472 = vmatprep.subr.bf16.mxu0 0
    %5473 = vmatpush1.bf16.msra.mxu0 %v5463
    %5474 = vmatprep.subr.bf16.mxu0 0
    %5475 = vmatpush1.bf16.msra.mxu0 %v5462
    %5476 = vmatprep.subr.bf16.mxu0 0
    %5477 = vmatpush1.bf16.msra.mxu0 %v5461
    %5478 = vmatprep.subr.bf16.mxu0 0
    %5479 = vmatpush1.bf16.msra.mxu0 %v5460
    %5480 = vmatprep.subr.bf16.mxu0 0
    %5481 = vmatpush1.bf16.msra.mxu0 %v5459
    %5482 = vmatprep.subr.bf16.mxu0 0
    %5483 = vmatpush1.bf16.msra.mxu0 %v5458
    %5484 = vmatprep.subr.bf16.mxu0 0
    %5485 = vmatpush1.bf16.msra.mxu0 %v5457
    %5486 = vmatprep.subr.bf16.mxu0 0
    %5487 = vmatpush1.bf16.msra.mxu0 %v5456
    %5488 = vmatprep.subr.bf16.mxu0 0
    %5489 = vmatpush2.bf16.msra.mxu0 0
    %5490 = vmatprep.subr.bf16.mxu0 0
    %5491 = vmatpush2.bf16.msra.mxu0 0
    %5492 = vmatprep.subr.bf16.mxu0 0
    %5493 = vmatpush2.bf16.msra.mxu0 0
    %5494 = vmatprep.subr.bf16.mxu0 0
    %5495 = vmatpush2.bf16.msra.mxu0 0
    %5496 = vmatprep.subr.bf16.mxu0 0
    %5497 = vmatpush2.bf16.msra.mxu0 0
    %5498 = vmatprep.subr.bf16.mxu0 0
    %5499 = vmatpush2.bf16.msra.mxu0 0
    %5500 = vmatprep.subr.bf16.mxu0 0
    %5501 = vmatpush2.bf16.msra.mxu0 0
    %5502 = vmatprep.subr.bf16.mxu0 0
    %5503 = vmatpush2.bf16.msra.mxu0 0
    %5504 = vmatprep.mubr.bf16.mxu0 0
    %5505 = vmatmul.mubr.bf16.gmra.mxu0 %v5400
    %v5506 = vpop.f32.mrf.mxu0
    %v5507 = vadd.f32 %v5422, %v5506
    %v5508 = vpop.f32.mrf.mxu0
    %v5509 = vpop.f32.mrf.mxu0
    %v5510 = vpop.f32.mrf.mxu0
    %5511 = vdwg.mxu0
    %vm5512 = vcmp.gt.f32.partialorder %v5507, 0.0
    %v5513 = vmul.f32 %v5507, 0.01
    %v5514 = vsel %vm5512, %v5507, %v5513
    %v5515 = vlaneseq
    %v5516 = vand.u32 %v5515, 127
    %vm5517 = vcmp.lt.s32.totalorder %v5516, 2
    %v5518 = vsel %vm5517, %v5514, -1e+30
    %5519 = vmax.xlane.f32.xlu0 %v5518
    %v5520 = vpop.xlane.xlu0 %5519
    %v5521 = vsub.f32 %v5518, %v5520
    %v5522 = vmul.f32 %v5521, 1.442695
    %v5523 = vpow.pop %v5522
    %5524 = vadd.xlane.f32.xlu0 %v5523
    %v5525 = vpop.xlane.xlu0 %5524
    %v5526 = vrcp.pop %v5525
    %v5527 = vmul.f32 %v5523, %v5526
    %5528 = vst [vmem:[#allocation20] sm:$0xff] %v5527
    // Predicated region
    $region90: #{tpu_custom_call.1} parent=1 // pred_check
      _
    $region91: #{tpu_custom_call.1} parent=1 // pred_check_branch
      %5530 = sbr.rel (0) target = $region93
    $region92: #{tpu_custom_call.1} parent=1 // pred_region
      %s5532 = ssub.s32 128, 128
      %5533 = vsyncadd [#allocation4], %s5532
      %s5535 = sshll.u32 [#allocation20], 4
      %s5536 = int_to_ptr.vmem [resolvable:$true] %s5535
      %5538 = dma.vmem_to_hbm [thread:$0]  %s5536, 128, %s11, [#allocation4]
    $region93: #{tpu_custom_call.1} parent=1 // pred_fallthru
      _
    // Predicated region
    $region94: #{tpu_custom_call.1} parent=1 // pred_check
      _
    $region95: #{tpu_custom_call.1} parent=1 // pred_check_branch
      %5540 = sbr.rel (0) target = $region97
    $region96: #{tpu_custom_call.1} parent=1 // pred_region
      %5541 = dma.done [#allocation4], 128
    $region97: #{tpu_custom_call.1} parent=1 // pred_fallthru
      _
    %5542 = vsyncpa [#allocation3], 1
    %5543 = vsyncpa [#allocation6], 1
    %5544 = vsyncpa [#allocation9], 1
    %5545 = vsyncpa [#allocation12], 1
    %5546 = vsyncpa [#allocation15], 1
    %5547 = vsyncpa [#allocation18], 1
    %5548 = vsyncpa [#allocation4], 1

</llo_original>
